<compile_context>
chip_gen: v5e
topology: v5e:2x2
jax: 0.10.0
libtpu: 0.0.40
codegen_flags: <defaults>
</compile_context>

<pallas_src>
import math

import jax
import jax.numpy as jnp
from jax.experimental import pallas as pl
from jax.experimental.pallas import tpu as pltpu

# ----------------------------------------------------------------------------
# constants (from the module)
# ----------------------------------------------------------------------------
SCALES_LEVELS = 64
SCALES_MAX = 256
SCALES_MIN = 0.11
IMAGENET_DEFAULT_MEAN = (0.485, 0.456, 0.406)
IMAGENET_DEFAULT_STD = (0.229, 0.224, 0.225)


def get_scale_table(min=SCALES_MIN, max=SCALES_MAX, levels=SCALES_LEVELS):
    """Returns table of logarithmically spaced scales (pure JAX glue)."""
    return jnp.exp(jnp.linspace(math.log(min), math.log(max), levels))


# ----------------------------------------------------------------------------
# tiling helpers
# ----------------------------------------------------------------------------
def _pick_tile(n, candidates):
    """Largest candidate that evenly divides n, else n itself (full dim)."""
    for c in candidates:
        if c <= n and n % c == 0:
            return c
    return n


# ----------------------------------------------------------------------------
# Pallas kernels
# ----------------------------------------------------------------------------
def _scale_shift_kernel(x_ref, shift_ref, scale_ref, o_ref):
    # out = (x + shift) * scale  (shift/scale are (tile_r, 1), lane-broadcast)
    o_ref[...] = (x_ref[...] + shift_ref[...]) * scale_ref[...]


def scale_shift(x2d, shift_col, scale_col):
    """x2d: (R, C); shift_col/scale_col: (R, 1). Returns (x + shift) * scale.

    Small arrays (<= 8 MiB) run as a single block — one grid step, no per-step
    overhead; larger arrays tile over rows/columns with lane-dense blocks.
    """
    R, C = x2d.shape
    if R * C * x2d.dtype.itemsize <= (8 << 20):
        tile_r, tile_c = R, C
    else:
        tile_r = _pick_tile(R, (512, 256, 128, 64, 32, 16, 8))
        tile_c = _pick_tile(C, (16384, 8192, 4096, 2048, 1024, 512, 256, 128))
    return pl.pallas_call(
        _scale_shift_kernel,
        out_shape=jax.ShapeDtypeStruct((R, C), x2d.dtype),
        grid=(R // tile_r, C // tile_c),
        in_specs=[
            pl.BlockSpec((tile_r, tile_c), lambda i, j: (i, j)),
            pl.BlockSpec((tile_r, 1), lambda i, j: (i, 0)),
            pl.BlockSpec((tile_r, 1), lambda i, j: (i, 0)),
        ],
        out_specs=pl.BlockSpec((tile_r, tile_c), lambda i, j: (i, j)),
        compiler_params=pltpu.CompilerParams(
            dimension_semantics=("parallel", "parallel"),
            vmem_limit_bytes=32 << 20),
    )(x2d, shift_col, scale_col)


def _adapter_conv_kernel(x_ref, w_ref, b_ref, g_ref, t_ref,
                         o_ref, yg_ref, sse_ref):
    """Fused adapter 1x1 conv + distillation partial + InverseGain scaling.

    x_ref: (Cin, tile_n) f32     latent columns (channels x batch*space)
    w_ref: (Cout, Cin)   f32     conv weight
    b_ref: (Cout, 1)     f32     conv bias
    g_ref: (Cin, 1)      f32     |InverseGain[quality-1]| column
    t_ref: (Cout, tile_n) bf16   inverse-pixel-shuffled teacher feature
    o_ref: (Cout, tile_n) bf16   conv output
    yg_ref:(Cin, tile_n)  f32    y_hat * |gain|
    sse_ref:(1, tile_n)   f32    per-column sum of squared diff (partials)
    """
    # MXU matmul: bf16 operands, f32 accumulation (compiler tiles internally).
    y = jnp.dot(w_ref[...].astype(jnp.bfloat16),
                x_ref[...].astype(jnp.bfloat16),
                preferred_element_type=jnp.float32)
    y = y + b_ref[...]                              # bias, lane-broadcast
    y_bf = y.astype(jnp.bfloat16)
    o_ref[...] = y_bf
    # fused distillation partial (f32 accumulation of the squared error)
    d = y_bf.astype(jnp.float32) - t_ref[...].astype(jnp.float32)
    sse_ref[...] = jnp.sum(d * d, axis=0, keepdims=True)
    # fused InverseGain scaling of the already-resident latent tile (exact f32)
    yg_ref[...] = x_ref[...] * g_ref[...]


def adapter_conv_fused(y_hat, w, bias, teacher_inv, inverse_gain_row):
    """1x1 conv (lane-dense layout) + fused MSE partial + fused inverse gain.

    y_hat:            (B, Cin, H, W)  f32 latent
    w:                (Cout, Cin)     conv weight (kernel_size=1)
    bias:             (Cout,)         conv bias
    teacher_inv:      (B, Cout, H, W) inverse-pixel-shuffled teacher feature
    inverse_gain_row: (Cin,)          InverseGain[quality-1]
    Returns (conv_out (B,Cout,H,W) bf16, y_gained (B,Cin,H,W) f32, sse scalar).
    """
    B, Cin, H, W = y_hat.shape
    Cout = w.shape[0]
    N = B * H * W

    # lane-dense layout: channels on sublanes, batch*space on lanes
    x2 = y_hat.transpose(1, 0, 2, 3).reshape(Cin, N)                      # f32
    t2 = teacher_inv.transpose(1, 0, 2, 3).reshape(Cout, N).astype(jnp.bfloat16)
    b_col = bias.reshape(Cout, 1).astype(jnp.float32)
    g_col = jnp.abs(inverse_gain_row).reshape(Cin, 1).astype(jnp.float32)

    # tile only the lane axis; cap at 512 so double-buffered tiles stay far
    # under v7x's 64 MiB VMEM even for large images.
    tile_n = _pick_tile(N, (512, 256, 128))
    n_s = N // tile_n

    conv2, yg2, sse_part = pl.pallas_call(
        _adapter_conv_kernel,
        out_shape=(
            jax.ShapeDtypeStruct((Cout, N), jnp.bfloat16),
            jax.ShapeDtypeStruct((Cin, N), jnp.float32),
            jax.ShapeDtypeStruct((1, N), jnp.float32),
        ),
        grid=(n_s,),
        in_specs=[
            pl.BlockSpec((Cin, tile_n), lambda s: (0, s)),
            pl.BlockSpec((Cout, Cin), lambda s: (0, 0)),
            pl.BlockSpec((Cout, 1), lambda s: (0, 0)),
            pl.BlockSpec((Cin, 1), lambda s: (0, 0)),
            pl.BlockSpec((Cout, tile_n), lambda s: (0, s)),
        ],
        out_specs=(
            pl.BlockSpec((Cout, tile_n), lambda s: (0, s)),
            pl.BlockSpec((Cin, tile_n), lambda s: (0, s)),
            pl.BlockSpec((1, tile_n), lambda s: (0, s)),
        ),
        compiler_params=pltpu.CompilerParams(
            dimension_semantics=("parallel",),
            vmem_limit_bytes=32 << 20),
    )(x2, w, b_col, g_col, t2)

    sse = sse_part.sum()
    conv_out = conv2.reshape(Cout, B, H, W).transpose(1, 0, 2, 3)
    y_gained = yg2.reshape(Cin, B, H, W).transpose(1, 0, 2, 3)
    return conv_out, y_gained, sse


# ----------------------------------------------------------------------------
# Glue (plain JAX): pixel_shuffle permutations / parameter views
# ----------------------------------------------------------------------------
def pixel_shuffle_nchw(x, r):
    """torch.nn.functional.pixel_shuffle semantics, NCHW."""
    B, Cr2, H, W = x.shape
    C = Cr2 // (r * r)
    x = x.reshape(B, C, r, r, H, W)
    x = x.transpose(0, 1, 4, 2, 5, 3)     # B, C, H, r, W, r
    return x.reshape(B, C, H * r, W * r)


def inverse_pixel_shuffle_nchw(x, r):
    """Exact inverse permutation of pixel_shuffle (channel order c*r*r+i*r+j)."""
    B, C, Hr, Wr = x.shape
    H, W = Hr // r, Wr // r
    x = x.reshape(B, C, H, r, W, r)
    x = x.transpose(0, 1, 3, 5, 2, 4)     # B, C, r, r, H, W
    return x.reshape(B, C * r * r, H, W)


def norm_img(x_nchw, mean3, std3):
    """(x - mean) / std with per-channel imagenet stats (Pallas elementwise)."""
    B, C, H, W = x_nchw.shape
    x2d = x_nchw.reshape(B * C, H * W)
    shift = jnp.tile(-mean3, B).reshape(B * C, 1).astype(x_nchw.dtype)
    scale = jnp.tile(1.0 / std3, B).reshape(B * C, 1).astype(x_nchw.dtype)
    return scale_shift(x2d, shift, scale).reshape(B, C, H, W)


def adapter_forward_and_distill(y_hat, w, bias, teacher_feat, inverse_gain_row,
                                *, upscale_factor=4):
    """TransformModule.upsample_layer + pixel_shuffle, with the features[0]
    distillation MSE and the InverseGain scaling both fused into the conv
    kernel.

    Since pixel_shuffle is a pure permutation,
      MSE(pixel_shuffle(conv(y)), teacher) == MSE(conv(y), inv_pixel_shuffle(teacher)),
    so the teacher is permuted once (cheap XLA glue) and the 1536-wide adapter
    activation never takes an extra HBM round-trip through a standalone MSE op.
    """
    B, Cin, H, W = y_hat.shape
    Cout = w.shape[0]
    t_inv = inverse_pixel_shuffle_nchw(teacher_feat, upscale_factor)  # (B,Cout,H,W)
    conv_out, y_gained, sse = adapter_conv_fused(
        y_hat, w, bias, t_inv, inverse_gain_row)
    adapter_feat = pixel_shuffle_nchw(conv_out, upscale_factor)       # (B,out_ch,4H,4W)
    # TODO(synk): ViTBlock transform_layer (window-attention block) definition
    # was not provided; it is left as identity here.
    dist_mse = sse / (B * Cout * H * W)
    return adapter_feat, y_gained, dist_mse


def cls_wrapper_forward(x, y_hat, params, quality=1):
    """Forward pass of ClsWrapper restricted to the defined sub-computations."""
    outs = {"latent": {"y_hat": y_hat}, "decisions": {}}

    # TODO(synk): TinyLICVR backbone (analysis/synthesis transforms g_a/g_s,
    # entropy models) is not defined in the given source; y_hat is taken as an
    # input and x_hat is not produced.

    adapter_feat, y_gained, dist_loss = adapter_forward_and_distill(
        y_hat, params["adapter_w"], params["adapter_b"],
        params["teacher_feat0"], params["inverse_gain"][quality - 1])
    outs["adapter_feat"] = adapter_feat
    # TODO(synk): timm ConvNeXt-tiny task_model / teacher stages, norm_pre and
    # head are external pretrained modules; only the features[0] vs. teacher
    # stem term of the distillation loss is computed.
    outs["pred"] = None

    # ---- x_hat path: y_hat * |InverseGain[quality-1]| (g_s input), fused ----
    outs["y_gained"] = y_gained
    outs["decisions"]["dec"] = None
    outs["x_hat"] = None

    # ---- teacher path: norm_img is fully defined ----
    outs["x_norm"] = norm_img(x, params["imnet_mean"], params["imnet_std"])
    outs["dist_loss"] = dist_loss
    return outs


# ----------------------------------------------------------------------------
# main
# ----------------------------------------------------------------------------
if __name__ == "__main__":
    key = jax.random.PRNGKey(0)
    k_x, k_y, k_w, k_b, k_g, k_t = jax.random.split(key, 6)

    B = 2
    IN_CH = 320                 # latent channels (ClsWrapper adapter in_ch)
    OUT_CH = 96                 # adapter out_ch
    UP = 4                      # upscale_factor
    h, w = 8, 8                 # latent spatial size (image / 16)
    H_IMG, W_IMG = 16 * h, 16 * w
    COUT = OUT_CH * UP * UP     # 1536

    x = jax.random.uniform(k_x, (B, 3, H_IMG, W_IMG), jnp.float32)
    y_hat = jax.random.normal(k_y, (B, IN_CH, h, w), jnp.float32)

    params = {
        # conv(320, 96*16, kernel_size=1) weight in torch layout (Cout, Cin)
        "adapter_w": jax.random.normal(k_w, (COUT, IN_CH), jnp.float32) * 0.02,
        "adapter_b": jax.random.normal(k_b, (COUT,), jnp.float32) * 0.01,
        # InverseGain: (num_quality_levels, latent_channels)
        "inverse_gain": jax.random.normal(k_g, (6, IN_CH), jnp.float32),
        "imnet_mean": jnp.array(IMAGENET_DEFAULT_MEAN, jnp.float32),
        "imnet_std": jnp.array(IMAGENET_DEFAULT_STD, jnp.float32),
        # stand-in teacher stem feature, same shape as the adapter output
        "teacher_feat0": jax.random.normal(
            k_t, (B, OUT_CH, h * UP, w * UP), jnp.float32),
    }

    scale_table = get_scale_table()  # defined helper, plain JAX

    outs = cls_wrapper_forward(x, y_hat, params, quality=1)
    jax.block_until_ready(outs["dist_loss"])
    jax.block_until_ready(outs["x_norm"])
    jax.block_until_ready(outs["y_gained"])
    jax.block_until_ready(outs["adapter_feat"])

    # ---- shape checks ----
    assert outs["x_norm"].shape == (B, 3, H_IMG, W_IMG)
    assert outs["y_gained"].shape == (B, IN_CH, h, w)
    assert outs["adapter_feat"].shape == (B, OUT_CH, h * UP, w * UP)
    assert outs["latent"]["y_hat"].shape == (B, IN_CH, h, w)
    assert scale_table.shape == (SCALES_LEVELS,)
    assert outs["dist_loss"].shape == ()

    # ---- numerical checks against plain-JAX references ----
    mean = params["imnet_mean"].reshape(1, 3, 1, 1)
    std = params["imnet_std"].reshape(1, 3, 1, 1)
    assert jnp.allclose(outs["x_norm"], (x - mean) / std, atol=1e-5, rtol=1e-5)

    gain = jnp.abs(params["inverse_gain"][0]).reshape(1, IN_CH, 1, 1)
    assert jnp.allclose(outs["y_gained"], y_hat * gain, atol=1e-6, rtol=1e-6)

    # adapter conv (bf16 MXU, f32 accumulation) vs f32 reference
    ref_y = (jnp.einsum("oc,bchw->bohw", params["adapter_w"], y_hat)
             + params["adapter_b"].reshape(1, -1, 1, 1))
    ref_feat = pixel_shuffle_nchw(ref_y, UP)
    assert jnp.allclose(outs["adapter_feat"].astype(jnp.float32), ref_feat,
                        atol=2e-2, rtol=2e-2)

    # fused MSE must match the unfused reduction over the pixel-shuffled feature
    ref_mse = jnp.mean(
        (outs["adapter_feat"].astype(jnp.float32) - params["teacher_feat0"]) ** 2)
    assert jnp.allclose(outs["dist_loss"], ref_mse, atol=1e-5, rtol=2e-3)

    print("KERNEL_OK")
</pallas_src>

<mosaic_0001>
module attributes {stable_mosaic.version = 11 : i64} {
  func.func @_adapter_conv_kernel(%arg0: i32, %arg1: memref<320x128xf32, #tpu.memory_space<vmem>>, %arg2: memref<1536x320xf32, #tpu.memory_space<vmem>>, %arg3: memref<1536x1xf32, #tpu.memory_space<vmem>>, %arg4: memref<320x1xf32, #tpu.memory_space<vmem>>, %arg5: memref<1536x128xbf16, #tpu.memory_space<vmem>>, %arg6: memref<1536x128xbf16, #tpu.memory_space<vmem>>, %arg7: memref<320x128xf32, #tpu.memory_space<vmem>>, %arg8: memref<1x128xf32, #tpu.memory_space<vmem>>) attributes {dimension_semantics = [#tpu.dimension_semantics<parallel>], iteration_bounds = array<i64: 1>, scalar_prefetch = 0 : i64, scratch_operands = 0 : i64, tpu.core_type = #tpu.core_type<tc>, window_params = [{transform_indices = @transform_0, window_bounds = array<i64: 320, 128>}, {pipeline_mode = #tpu.pipeline_mode<synchronous>, transform_indices = @transform_1, window_bounds = array<i64: 1536, 320>}, {pipeline_mode = #tpu.pipeline_mode<synchronous>, transform_indices = @transform_2, window_bounds = array<i64: 1536, 1>}, {pipeline_mode = #tpu.pipeline_mode<synchronous>, transform_indices = @transform_3, window_bounds = array<i64: 320, 1>}, {transform_indices = @transform_4, window_bounds = array<i64: 1536, 128>}, {transform_indices = @transform_5, window_bounds = array<i64: 1536, 128>}, {transform_indices = @transform_6, window_bounds = array<i64: 320, 128>}, {transform_indices = @transform_7, window_bounds = array<i64: 1, 128>}]} {
    %c0 = arith.constant 0 : index
    %c0_0 = arith.constant 0 : index
    %0 = vector.load %arg2[%c0, %c0_0] : memref<1536x320xf32, #tpu.memory_space<vmem>>, vector<1536x320xf32>
    %1 = arith.truncf %0 : vector<1536x320xf32> to vector<1536x320xbf16>
    %c0_1 = arith.constant 0 : index
    %c0_2 = arith.constant 0 : index
    %2 = vector.load %arg1[%c0_1, %c0_2] : memref<320x128xf32, #tpu.memory_space<vmem>>, vector<320x128xf32>
    %3 = arith.truncf %2 : vector<320x128xf32> to vector<320x128xbf16>
    %cst = arith.constant dense<0.000000e+00> : vector<1536x128xf32>
    %4 = tpu.matmul %1, %3, %cst {dimension_numbers = #tpu.dot_dimension_numbers<[1], [0], [0], [1], [0, 0, 1, 1], [], []>} : vector<1536x320xbf16>, vector<320x128xbf16>, vector<1536x128xf32> -> vector<1536x128xf32>
    %c0_3 = arith.constant 0 : index
    %c0_4 = arith.constant 0 : index
    %5 = vector.load %arg3[%c0_3, %c0_4] : memref<1536x1xf32, #tpu.memory_space<vmem>>, vector<1536x1xf32>
    %6 = vector.broadcast %5 : vector<1536x1xf32> to vector<1536x128xf32>
    %7 = arith.addf %4, %6 : vector<1536x128xf32>
    %8 = arith.truncf %7 : vector<1536x128xf32> to vector<1536x128xbf16>
    %c0_5 = arith.constant 0 : index
    %c0_6 = arith.constant 0 : index
    %9 = vector.load %arg6[%c0_5, %c0_6] : memref<1536x128xbf16, #tpu.memory_space<vmem>>, vector<1536x128xbf16>
    tpu.vector_store %arg6[%c0_5, %c0_6], %8 {strides = array<i32>} : memref<1536x128xbf16, #tpu.memory_space<vmem>>, vector<1536x128xbf16>,
    %10 = arith.extf %8 : vector<1536x128xbf16> to vector<1536x128xf32>
    %c0_7 = arith.constant 0 : index
    %c0_8 = arith.constant 0 : index
    %11 = vector.load %arg5[%c0_7, %c0_8] : memref<1536x128xbf16, #tpu.memory_space<vmem>>, vector<1536x128xbf16>
    %12 = arith.extf %11 : vector<1536x128xbf16> to vector<1536x128xf32>
    %13 = arith.subf %10, %12 : vector<1536x128xf32>
    %14 = arith.mulf %13, %13 : vector<1536x128xf32>
    %cst_9 = arith.constant dense<0.000000e+00> : vector<128xf32>
    %15 = vector.multi_reduction <add>, %14, %cst_9 [0] : vector<1536x128xf32> to vector<128xf32>
    %16 = vector.shape_cast %15 : vector<128xf32> to vector<1x128xf32>
    %c0_10 = arith.constant 0 : index
    %c0_11 = arith.constant 0 : index
    %17 = vector.load %arg8[%c0_10, %c0_11] : memref<1x128xf32, #tpu.memory_space<vmem>>, vector<1x128xf32>
    tpu.vector_store %arg8[%c0_10, %c0_11], %16 {strides = array<i32>} : memref<1x128xf32, #tpu.memory_space<vmem>>, vector<1x128xf32>,
    %c0_12 = arith.constant 0 : index
    %c0_13 = arith.constant 0 : index
    %18 = vector.load %arg1[%c0_12, %c0_13] : memref<320x128xf32, #tpu.memory_space<vmem>>, vector<320x128xf32>
    %c0_14 = arith.constant 0 : index
    %c0_15 = arith.constant 0 : index
    %19 = vector.load %arg4[%c0_14, %c0_15] : memref<320x1xf32, #tpu.memory_space<vmem>>, vector<320x1xf32>
    %20 = vector.broadcast %19 : vector<320x1xf32> to vector<320x128xf32>
    %21 = arith.mulf %18, %20 : vector<320x128xf32>
    %c0_16 = arith.constant 0 : index
    %c0_17 = arith.constant 0 : index
    %22 = vector.load %arg7[%c0_16, %c0_17] : memref<320x128xf32, #tpu.memory_space<vmem>>, vector<320x128xf32>
    tpu.vector_store %arg7[%c0_16, %c0_17], %21 {strides = array<i32>} : memref<320x128xf32, #tpu.memory_space<vmem>>, vector<320x128xf32>,
    return
  }
  func.func @transform_0(%arg0: i32) -> (i32, i32) {
    %c0_i32 = arith.constant 0 : i32
    %c0_i32_0 = arith.constant 0 : i32
    return %c0_i32, %arg0 : i32, i32
  }
  func.func @transform_1(%arg0: i32) -> (i32, i32) {
    %c0_i32 = arith.constant 0 : i32
    %c0_i32_0 = arith.constant 0 : i32
    %c0_i32_1 = arith.constant 0 : i32
    return %c0_i32, %c0_i32_0 : i32, i32
  }
  func.func @transform_2(%arg0: i32) -> (i32, i32) {
    %c0_i32 = arith.constant 0 : i32
    %c0_i32_0 = arith.constant 0 : i32
    %c0_i32_1 = arith.constant 0 : i32
    return %c0_i32, %c0_i32_0 : i32, i32
  }
  func.func @transform_3(%arg0: i32) -> (i32, i32) {
    %c0_i32 = arith.constant 0 : i32
    %c0_i32_0 = arith.constant 0 : i32
    %c0_i32_1 = arith.constant 0 : i32
    return %c0_i32, %c0_i32_0 : i32, i32
  }
  func.func @transform_4(%arg0: i32) -> (i32, i32) {
    %c0_i32 = arith.constant 0 : i32
    %c0_i32_0 = arith.constant 0 : i32
    return %c0_i32, %arg0 : i32, i32
  }
  func.func @transform_5(%arg0: i32) -> (i32, i32) {
    %c0_i32 = arith.constant 0 : i32
    %c0_i32_0 = arith.constant 0 : i32
    return %c0_i32, %arg0 : i32, i32
  }
  func.func @transform_6(%arg0: i32) -> (i32, i32) {
    %c0_i32 = arith.constant 0 : i32
    %c0_i32_0 = arith.constant 0 : i32
    return %c0_i32, %arg0 : i32, i32
  }
  func.func @transform_7(%arg0: i32) -> (i32, i32) {
    %c0_i32 = arith.constant 0 : i32
    %c0_i32_0 = arith.constant 0 : i32
    return %c0_i32, %arg0 : i32, i32
  }
}

</mosaic_0001>

<llo_original>
// kernel: tpu_custom_call.1
$region0: #{tpu_custom_call.1}
  #allocation0 [shape = 'u32[]', space=smem, size = 0x4, offset = 0x4, fixed_abs, tag = 'smem constant byte address 0x4 - core index']
  #allocation1 [shape = 'u32[72,128]{1,0:T(1,128)}', space=vmem, size = 0x9000, scoped, tag = 'internal scratch']
  %s0 = inlined_call_operand.vmem [shape: f32[320,128], index: 0, kind: input, shape index: {}]
  %s1 = inlined_call_operand.vmem [shape: f32[1536,320], index: 1, kind: input, shape index: {}]
  %s2 = inlined_call_operand.vmem [shape: f32[1536,1], index: 2, kind: input, shape index: {}]
  %s3 = inlined_call_operand.vmem [shape: f32[320,1], index: 3, kind: input, shape index: {}]
  %s4 = inlined_call_operand.vmem [shape: bf16[1536,128], index: 4, kind: input, shape index: {}]
  %s5 = inlined_call_operand.hbm [shape: bf16[1536,128], index: 5, kind: output, shape index: {0}]
  %s6 = inlined_call_operand.hbm [shape: f32[320,128], index: 6, kind: output, shape index: {1}]
  %s7 = inlined_call_operand.hbm [shape: f32[1,128], index: 7, kind: output, shape index: {2}]
  %8 = xla_tuple %s5, %s6, %s7
  %s9 = sld [smem:[#allocation0]]
  $region46: #{tpu_custom_call.1} parent=0
    _
  %s11 = ssub.s32 1, %s9
  %s12 = scalar_select 0, %s11, %s9
  $region1: #{tpu_custom_call.1} parent=0
    #allocation2 [shape = 'u8[393216]{0}', space=vmem, size = 0x60000, scoped, tag = 'output window, operand 0, single buffered']
    #allocation3 [shape = 's32[1]{0}', space=sflag, size = 0x4, scoped, tag = 'scoped memory for tpu_custom_call.1']
    #allocation4 [shape = 'u8[163840]{0}', space=vmem, size = 0x28000, scoped, tag = 'output window, operand 1, single buffered']
    #allocation5 [shape = 's32[1]{0}', space=sflag, size = 0x4, scoped, tag = 'scoped memory for tpu_custom_call.1']
    #allocation6 [shape = 'u8[512]{0}', space=vmem, size = 0x400, scoped, tag = 'output window, operand 2, single buffered']
    %13 = vsyncpa [#allocation3], 0
    %14 = vsyncpa [#allocation5], 0
    // Predicated region
    $region2: #{tpu_custom_call.1} parent=1 // pred_check
      _
    $region3: #{tpu_custom_call.1} parent=1 // pred_check_branch
      %16 = sbr.rel (0) target = $region5
    $region4: #{tpu_custom_call.1} parent=1 // pred_region
      _
    $region5: #{tpu_custom_call.1} parent=1 // pred_fallthru
      _
    // Predicated region
    $region6: #{tpu_custom_call.1} parent=1 // pred_check
      _
    $region7: #{tpu_custom_call.1} parent=1 // pred_check_branch
      %18 = sbr.rel (0) target = $region9
    $region8: #{tpu_custom_call.1} parent=1 // pred_region
      _
    $region9: #{tpu_custom_call.1} parent=1 // pred_fallthru
      _
    // Predicated region
    $region10: #{tpu_custom_call.1} parent=1 // pred_check
      _
    $region11: #{tpu_custom_call.1} parent=1 // pred_check_branch
      %20 = sbr.rel (0) target = $region13
    $region12: #{tpu_custom_call.1} parent=1 // pred_region
      _
    $region13: #{tpu_custom_call.1} parent=1 // pred_fallthru
      _
    // Predicated region
    $region14: #{tpu_custom_call.1} parent=1 // pred_check
      _
    $region15: #{tpu_custom_call.1} parent=1 // pred_check_branch
      %22 = sbr.rel (0) target = $region17
    $region16: #{tpu_custom_call.1} parent=1 // pred_region
      _
    $region17: #{tpu_custom_call.1} parent=1 // pred_fallthru
      _
    // Predicated region
    $region18: #{tpu_custom_call.1} parent=1 // pred_check
      _
    $region19: #{tpu_custom_call.1} parent=1 // pred_check_branch
      %24 = sbr.rel (0) target = $region21
    $region20: #{tpu_custom_call.1} parent=1 // pred_region
      _
    $region21: #{tpu_custom_call.1} parent=1 // pred_fallthru
      _
    %v26 = vld [vmem:[%s1] sm:$0xff]
    %v27 = vld [vmem:[%s1 + $0x8] sm:$0xff]
    %v28 = vld [vmem:[%s1 + $0x10] sm:$0xff]
    %v29 = vld [vmem:[%s1 + $0x18] sm:$0xff]
    %v30 = vld [vmem:[%s1 + $0x20] sm:$0xff]
    %v31 = vld [vmem:[%s1 + $0x28] sm:$0xff]
    %v32 = vld [vmem:[%s1 + $0x30] sm:$0xff]
    %v33 = vld [vmem:[%s1 + $0x38] sm:$0xff]
    %v34 = vld [vmem:[%s1 + $0x40] sm:$0xff]
    %v35 = vld [vmem:[%s1 + $0x48] sm:$0xff]
    %v36 = vld [vmem:[%s1 + $0x50] sm:$0xff]
    %v37 = vld [vmem:[%s1 + $0x58] sm:$0xff]
    %v38 = vld [vmem:[%s1 + $0x60] sm:$0xff]
    %v39 = vld [vmem:[%s1 + $0x68] sm:$0xff]
    %v40 = vld [vmem:[%s1 + $0x70] sm:$0xff]
    %v41 = vld [vmem:[%s1 + $0x78] sm:$0xff]
    %v42 = vld [vmem:[%s1 + $0x80] sm:$0xff]
    %v43 = vld [vmem:[%s1 + $0x88] sm:$0xff]
    %v44 = vld [vmem:[%s1 + $0x90] sm:$0xff]
    %v45 = vld [vmem:[%s1 + $0x98] sm:$0xff]
    %v46 = vld [vmem:[%s1 + $0xa0] sm:$0xff]
    %v47 = vld [vmem:[%s1 + $0xa8] sm:$0xff]
    %v48 = vld [vmem:[%s1 + $0xb0] sm:$0xff]
    %v49 = vld [vmem:[%s1 + $0xb8] sm:$0xff]
    %v50 = vld [vmem:[%s1 + $0xc0] sm:$0xff]
    %v51 = vld [vmem:[%s1 + $0xc8] sm:$0xff]
    %v52 = vld [vmem:[%s1 + $0xd0] sm:$0xff]
    %v53 = vld [vmem:[%s1 + $0xd8] sm:$0xff]
    %v54 = vld [vmem:[%s1 + $0xe0] sm:$0xff]
    %v55 = vld [vmem:[%s1 + $0xe8] sm:$0xff]
    %v56 = vld [vmem:[%s1 + $0xf0] sm:$0xff]
    %v57 = vld [vmem:[%s1 + $0xf8] sm:$0xff]
    %v58 = vld [vmem:[%s1 + $0x100] sm:$0xff]
    %v59 = vld [vmem:[%s1 + $0x108] sm:$0xff]
    %v60 = vld [vmem:[%s1 + $0x110] sm:$0xff]
    %v61 = vld [vmem:[%s1 + $0x118] sm:$0xff]
    %v62 = vld [vmem:[%s1 + $0x120] sm:$0xff]
    %v63 = vld [vmem:[%s1 + $0x128] sm:$0xff]
    %v64 = vld [vmem:[%s1 + $0x130] sm:$0xff]
    %v65 = vld [vmem:[%s1 + $0x138] sm:$0xff]
    %v66 = vld [vmem:[%s1 + $0x140] sm:$0xff]
    %v67 = vld [vmem:[%s1 + $0x148] sm:$0xff]
    %v68 = vld [vmem:[%s1 + $0x150] sm:$0xff]
    %v69 = vld [vmem:[%s1 + $0x158] sm:$0xff]
    %v70 = vld [vmem:[%s1 + $0x160] sm:$0xff]
    %v71 = vld [vmem:[%s1 + $0x168] sm:$0xff]
    %v72 = vld [vmem:[%s1 + $0x170] sm:$0xff]
    %v73 = vld [vmem:[%s1 + $0x178] sm:$0xff]
    %v74 = vld [vmem:[%s1 + $0x180] sm:$0xff]
    %v75 = vld [vmem:[%s1 + $0x188] sm:$0xff]
    %v76 = vld [vmem:[%s1 + $0x190] sm:$0xff]
    %v77 = vld [vmem:[%s1 + $0x198] sm:$0xff]
    %v78 = vld [vmem:[%s1 + $0x1a0] sm:$0xff]
    %v79 = vld [vmem:[%s1 + $0x1a8] sm:$0xff]
    %v80 = vld [vmem:[%s1 + $0x1b0] sm:$0xff]
    %v81 = vld [vmem:[%s1 + $0x1b8] sm:$0xff]
    %v82 = vld [vmem:[%s1 + $0x1c0] sm:$0xff]
    %v83 = vld [vmem:[%s1 + $0x1c8] sm:$0xff]
    %v84 = vld [vmem:[%s1 + $0x1d0] sm:$0xff]
    %v85 = vld [vmem:[%s1 + $0x1d8] sm:$0xff]
    %v86 = vld [vmem:[%s1 + $0x1e0] sm:$0xff]
    %v87 = vld [vmem:[%s1 + $0x1e8] sm:$0xff]
    %v88 = vld [vmem:[%s1 + $0x1f0] sm:$0xff]
    %v89 = vld [vmem:[%s1 + $0x1f8] sm:$0xff]
    %v90 = vld [vmem:[%s1 + $0x200] sm:$0xff]
    %v91 = vld [vmem:[%s1 + $0x208] sm:$0xff]
    %v92 = vld [vmem:[%s1 + $0x210] sm:$0xff]
    %v93 = vld [vmem:[%s1 + $0x218] sm:$0xff]
    %v94 = vld [vmem:[%s1 + $0x220] sm:$0xff]
    %v95 = vld [vmem:[%s1 + $0x228] sm:$0xff]
    %v96 = vld [vmem:[%s1 + $0x230] sm:$0xff]
    %v97 = vld [vmem:[%s1 + $0x238] sm:$0xff]
    %v98 = vld [vmem:[%s1 + $0x240] sm:$0xff]
    %v99 = vld [vmem:[%s1 + $0x248] sm:$0xff]
    %v100 = vld [vmem:[%s1 + $0x250] sm:$0xff]
    %v101 = vld [vmem:[%s1 + $0x258] sm:$0xff]
    %v102 = vld [vmem:[%s1 + $0x260] sm:$0xff]
    %v103 = vld [vmem:[%s1 + $0x268] sm:$0xff]
    %v104 = vld [vmem:[%s1 + $0x270] sm:$0xff]
    %v105 = vld [vmem:[%s1 + $0x278] sm:$0xff]
    %v106 = vld [vmem:[%s1 + $0x280] sm:$0xff]
    %v107 = vld [vmem:[%s1 + $0x288] sm:$0xff]
    %v108 = vld [vmem:[%s1 + $0x290] sm:$0xff]
    %v109 = vld [vmem:[%s1 + $0x298] sm:$0xff]
    %v110 = vld [vmem:[%s1 + $0x2a0] sm:$0xff]
    %v111 = vld [vmem:[%s1 + $0x2a8] sm:$0xff]
    %v112 = vld [vmem:[%s1 + $0x2b0] sm:$0xff]
    %v113 = vld [vmem:[%s1 + $0x2b8] sm:$0xff]
    %v114 = vld [vmem:[%s1 + $0x2c0] sm:$0xff]
    %v115 = vld [vmem:[%s1 + $0x2c8] sm:$0xff]
    %v116 = vld [vmem:[%s1 + $0x2d0] sm:$0xff]
    %v117 = vld [vmem:[%s1 + $0x2d8] sm:$0xff]
    %v118 = vld [vmem:[%s1 + $0x2e0] sm:$0xff]
    %v119 = vld [vmem:[%s1 + $0x2e8] sm:$0xff]
    %v120 = vld [vmem:[%s1 + $0x2f0] sm:$0xff]
    %v121 = vld [vmem:[%s1 + $0x2f8] sm:$0xff]
    %v122 = vld [vmem:[%s1 + $0x300] sm:$0xff]
    %v123 = vld [vmem:[%s1 + $0x308] sm:$0xff]
    %v124 = vld [vmem:[%s1 + $0x310] sm:$0xff]
    %v125 = vld [vmem:[%s1 + $0x318] sm:$0xff]
    %v126 = vld [vmem:[%s1 + $0x320] sm:$0xff]
    %v127 = vld [vmem:[%s1 + $0x328] sm:$0xff]
    %v128 = vld [vmem:[%s1 + $0x330] sm:$0xff]
    %v129 = vld [vmem:[%s1 + $0x338] sm:$0xff]
    %v130 = vld [vmem:[%s1 + $0x340] sm:$0xff]
    %v131 = vld [vmem:[%s1 + $0x348] sm:$0xff]
    %v132 = vld [vmem:[%s1 + $0x350] sm:$0xff]
    %v133 = vld [vmem:[%s1 + $0x358] sm:$0xff]
    %v134 = vld [vmem:[%s1 + $0x360] sm:$0xff]
    %v135 = vld [vmem:[%s1 + $0x368] sm:$0xff]
    %v136 = vld [vmem:[%s1 + $0x370] sm:$0xff]
    %v137 = vld [vmem:[%s1 + $0x378] sm:$0xff]
    %v138 = vld [vmem:[%s1 + $0x380] sm:$0xff]
    %v139 = vld [vmem:[%s1 + $0x388] sm:$0xff]
    %v140 = vld [vmem:[%s1 + $0x390] sm:$0xff]
    %v141 = vld [vmem:[%s1 + $0x398] sm:$0xff]
    %v142 = vld [vmem:[%s1 + $0x3a0] sm:$0xff]
    %v143 = vld [vmem:[%s1 + $0x3a8] sm:$0xff]
    %v144 = vld [vmem:[%s1 + $0x3b0] sm:$0xff]
    %v145 = vld [vmem:[%s1 + $0x3b8] sm:$0xff]
    %v146 = vld [vmem:[%s1 + $0x3c0] sm:$0xff]
    %v147 = vld [vmem:[%s1 + $0x3c8] sm:$0xff]
    %v148 = vld [vmem:[%s1 + $0x3d0] sm:$0xff]
    %v149 = vld [vmem:[%s1 + $0x3d8] sm:$0xff]
    %v150 = vld [vmem:[%s1 + $0x3e0] sm:$0xff]
    %v151 = vld [vmem:[%s1 + $0x3e8] sm:$0xff]
    %v152 = vld [vmem:[%s1 + $0x3f0] sm:$0xff]
    %v153 = vld [vmem:[%s1 + $0x3f8] sm:$0xff]
    %v154 = vld [vmem:[%s1 + $0x400] sm:$0xff]
    %v155 = vld [vmem:[%s1 + $0x408] sm:$0xff]
    %v156 = vld [vmem:[%s1 + $0x410] sm:$0xff]
    %v157 = vld [vmem:[%s1 + $0x418] sm:$0xff]
    %v158 = vld [vmem:[%s1 + $0x420] sm:$0xff]
    %v159 = vld [vmem:[%s1 + $0x428] sm:$0xff]
    %v160 = vld [vmem:[%s1 + $0x430] sm:$0xff]
    %v161 = vld [vmem:[%s1 + $0x438] sm:$0xff]
    %v162 = vld [vmem:[%s1 + $0x440] sm:$0xff]
    %v163 = vld [vmem:[%s1 + $0x448] sm:$0xff]
    %v164 = vld [vmem:[%s1 + $0x450] sm:$0xff]
    %v165 = vld [vmem:[%s1 + $0x458] sm:$0xff]
    %v166 = vld [vmem:[%s1 + $0x460] sm:$0xff]
    %v167 = vld [vmem:[%s1 + $0x468] sm:$0xff]
    %v168 = vld [vmem:[%s1 + $0x470] sm:$0xff]
    %v169 = vld [vmem:[%s1 + $0x478] sm:$0xff]
    %v170 = vld [vmem:[%s1 + $0x480] sm:$0xff]
    %v171 = vld [vmem:[%s1 + $0x488] sm:$0xff]
    %v172 = vld [vmem:[%s1 + $0x490] sm:$0xff]
    %v173 = vld [vmem:[%s1 + $0x498] sm:$0xff]
    %v174 = vld [vmem:[%s1 + $0x4a0] sm:$0xff]
    %v175 = vld [vmem:[%s1 + $0x4a8] sm:$0xff]
    %v176 = vld [vmem:[%s1 + $0x4b0] sm:$0xff]
    %v177 = vld [vmem:[%s1 + $0x4b8] sm:$0xff]
    %v178 = vld [vmem:[%s1 + $0x4c0] sm:$0xff]
    %v179 = vld [vmem:[%s1 + $0x4c8] sm:$0xff]
    %v180 = vld [vmem:[%s1 + $0x4d0] sm:$0xff]
    %v181 = vld [vmem:[%s1 + $0x4d8] sm:$0xff]
    %v182 = vld [vmem:[%s1 + $0x4e0] sm:$0xff]
    %v183 = vld [vmem:[%s1 + $0x4e8] sm:$0xff]
    %v184 = vld [vmem:[%s1 + $0x4f0] sm:$0xff]
    %v185 = vld [vmem:[%s1 + $0x4f8] sm:$0xff]
    %v186 = vld [vmem:[%s1 + $0x500] sm:$0xff]
    %v187 = vld [vmem:[%s1 + $0x508] sm:$0xff]
    %v188 = vld [vmem:[%s1 + $0x510] sm:$0xff]
    %v189 = vld [vmem:[%s1 + $0x518] sm:$0xff]
    %v190 = vld [vmem:[%s1 + $0x520] sm:$0xff]
    %v191 = vld [vmem:[%s1 + $0x528] sm:$0xff]
    %v192 = vld [vmem:[%s1 + $0x530] sm:$0xff]
    %v193 = vld [vmem:[%s1 + $0x538] sm:$0xff]
    %v194 = vld [vmem:[%s1 + $0x540] sm:$0xff]
    %v195 = vld [vmem:[%s1 + $0x548] sm:$0xff]
    %v196 = vld [vmem:[%s1 + $0x550] sm:$0xff]
    %v197 = vld [vmem:[%s1 + $0x558] sm:$0xff]
    %v198 = vld [vmem:[%s1 + $0x560] sm:$0xff]
    %v199 = vld [vmem:[%s1 + $0x568] sm:$0xff]
    %v200 = vld [vmem:[%s1 + $0x570] sm:$0xff]
    %v201 = vld [vmem:[%s1 + $0x578] sm:$0xff]
    %v202 = vld [vmem:[%s1 + $0x580] sm:$0xff]
    %v203 = vld [vmem:[%s1 + $0x588] sm:$0xff]
    %v204 = vld [vmem:[%s1 + $0x590] sm:$0xff]
    %v205 = vld [vmem:[%s1 + $0x598] sm:$0xff]
    %v206 = vld [vmem:[%s1 + $0x5a0] sm:$0xff]
    %v207 = vld [vmem:[%s1 + $0x5a8] sm:$0xff]
    %v208 = vld [vmem:[%s1 + $0x5b0] sm:$0xff]
    %v209 = vld [vmem:[%s1 + $0x5b8] sm:$0xff]
    %v210 = vld [vmem:[%s1 + $0x5c0] sm:$0xff]
    %v211 = vld [vmem:[%s1 + $0x5c8] sm:$0xff]
    %v212 = vld [vmem:[%s1 + $0x5d0] sm:$0xff]
    %v213 = vld [vmem:[%s1 + $0x5d8] sm:$0xff]
    %v214 = vld [vmem:[%s1 + $0x5e0] sm:$0xff]
    %v215 = vld [vmem:[%s1 + $0x5e8] sm:$0xff]
    %v216 = vld [vmem:[%s1 + $0x5f0] sm:$0xff]
    %v217 = vld [vmem:[%s1 + $0x5f8] sm:$0xff]
    %v218 = vld [vmem:[%s1 + $0x600] sm:$0xff]
    %v219 = vld [vmem:[%s1 + $0x608] sm:$0xff]
    %v220 = vld [vmem:[%s1 + $0x610] sm:$0xff]
    %v221 = vld [vmem:[%s1 + $0x618] sm:$0xff]
    %v222 = vld [vmem:[%s1 + $0x620] sm:$0xff]
    %v223 = vld [vmem:[%s1 + $0x628] sm:$0xff]
    %v224 = vld [vmem:[%s1 + $0x630] sm:$0xff]
    %v225 = vld [vmem:[%s1 + $0x638] sm:$0xff]
    %v226 = vld [vmem:[%s1 + $0x640] sm:$0xff]
    %v227 = vld [vmem:[%s1 + $0x648] sm:$0xff]
    %v228 = vld [vmem:[%s1 + $0x650] sm:$0xff]
    %v229 = vld [vmem:[%s1 + $0x658] sm:$0xff]
    %v230 = vld [vmem:[%s1 + $0x660] sm:$0xff]
    %v231 = vld [vmem:[%s1 + $0x668] sm:$0xff]
    %v232 = vld [vmem:[%s1 + $0x670] sm:$0xff]
    %v233 = vld [vmem:[%s1 + $0x678] sm:$0xff]
    %v234 = vld [vmem:[%s1 + $0x680] sm:$0xff]
    %v235 = vld [vmem:[%s1 + $0x688] sm:$0xff]
    %v236 = vld [vmem:[%s1 + $0x690] sm:$0xff]
    %v237 = vld [vmem:[%s1 + $0x698] sm:$0xff]
    %v238 = vld [vmem:[%s1 + $0x6a0] sm:$0xff]
    %v239 = vld [vmem:[%s1 + $0x6a8] sm:$0xff]
    %v240 = vld [vmem:[%s1 + $0x6b0] sm:$0xff]
    %v241 = vld [vmem:[%s1 + $0x6b8] sm:$0xff]
    %v242 = vld [vmem:[%s1 + $0x6c0] sm:$0xff]
    %v243 = vld [vmem:[%s1 + $0x6c8] sm:$0xff]
    %v244 = vld [vmem:[%s1 + $0x6d0] sm:$0xff]
    %v245 = vld [vmem:[%s1 + $0x6d8] sm:$0xff]
    %v246 = vld [vmem:[%s1 + $0x6e0] sm:$0xff]
    %v247 = vld [vmem:[%s1 + $0x6e8] sm:$0xff]
    %v248 = vld [vmem:[%s1 + $0x6f0] sm:$0xff]
    %v249 = vld [vmem:[%s1 + $0x6f8] sm:$0xff]
    %v250 = vld [vmem:[%s1 + $0x700] sm:$0xff]
    %v251 = vld [vmem:[%s1 + $0x708] sm:$0xff]
    %v252 = vld [vmem:[%s1 + $0x710] sm:$0xff]
    %v253 = vld [vmem:[%s1 + $0x718] sm:$0xff]
    %v254 = vld [vmem:[%s1 + $0x720] sm:$0xff]
    %v255 = vld [vmem:[%s1 + $0x728] sm:$0xff]
    %v256 = vld [vmem:[%s1 + $0x730] sm:$0xff]
    %v257 = vld [vmem:[%s1 + $0x738] sm:$0xff]
    %v258 = vld [vmem:[%s1 + $0x740] sm:$0xff]
    %v259 = vld [vmem:[%s1 + $0x748] sm:$0xff]
    %v260 = vld [vmem:[%s1 + $0x750] sm:$0xff]
    %v261 = vld [vmem:[%s1 + $0x758] sm:$0xff]
    %v262 = vld [vmem:[%s1 + $0x760] sm:$0xff]
    %v263 = vld [vmem:[%s1 + $0x768] sm:$0xff]
    %v264 = vld [vmem:[%s1 + $0x770] sm:$0xff]
    %v265 = vld [vmem:[%s1 + $0x778] sm:$0xff]
    %v266 = vld [vmem:[%s1 + $0x780] sm:$0xff]
    %v267 = vld [vmem:[%s1 + $0x788] sm:$0xff]
    %v268 = vld [vmem:[%s1 + $0x790] sm:$0xff]
    %v269 = vld [vmem:[%s1 + $0x798] sm:$0xff]
    %v270 = vld [vmem:[%s1 + $0x7a0] sm:$0xff]
    %v271 = vld [vmem:[%s1 + $0x7a8] sm:$0xff]
    %v272 = vld [vmem:[%s1 + $0x7b0] sm:$0xff]
    %v273 = vld [vmem:[%s1 + $0x7b8] sm:$0xff]
    %v274 = vld [vmem:[%s1 + $0x7c0] sm:$0xff]
    %v275 = vld [vmem:[%s1 + $0x7c8] sm:$0xff]
    %v276 = vld [vmem:[%s1 + $0x7d0] sm:$0xff]
    %v277 = vld [vmem:[%s1 + $0x7d8] sm:$0xff]
    %v278 = vld [vmem:[%s1 + $0x7e0] sm:$0xff]
    %v279 = vld [vmem:[%s1 + $0x7e8] sm:$0xff]
    %v280 = vld [vmem:[%s1 + $0x7f0] sm:$0xff]
    %v281 = vld [vmem:[%s1 + $0x7f8] sm:$0xff]
    %v282 = vld [vmem:[%s1 + $0x800] sm:$0xff]
    %v283 = vld [vmem:[%s1 + $0x808] sm:$0xff]
    %v284 = vld [vmem:[%s1 + $0x810] sm:$0xff]
    %v285 = vld [vmem:[%s1 + $0x818] sm:$0xff]
    %v286 = vld [vmem:[%s1 + $0x820] sm:$0xff]
    %v287 = vld [vmem:[%s1 + $0x828] sm:$0xff]
    %v288 = vld [vmem:[%s1 + $0x830] sm:$0xff]
    %v289 = vld [vmem:[%s1 + $0x838] sm:$0xff]
    %v290 = vld [vmem:[%s1 + $0x840] sm:$0xff]
    %v291 = vld [vmem:[%s1 + $0x848] sm:$0xff]
    %v292 = vld [vmem:[%s1 + $0x850] sm:$0xff]
    %v293 = vld [vmem:[%s1 + $0x858] sm:$0xff]
    %v294 = vld [vmem:[%s1 + $0x860] sm:$0xff]
    %v295 = vld [vmem:[%s1 + $0x868] sm:$0xff]
    %v296 = vld [vmem:[%s1 + $0x870] sm:$0xff]
    %v297 = vld [vmem:[%s1 + $0x878] sm:$0xff]
    %v298 = vld [vmem:[%s1 + $0x880] sm:$0xff]
    %v299 = vld [vmem:[%s1 + $0x888] sm:$0xff]
    %v300 = vld [vmem:[%s1 + $0x890] sm:$0xff]
    %v301 = vld [vmem:[%s1 + $0x898] sm:$0xff]
    %v302 = vld [vmem:[%s1 + $0x8a0] sm:$0xff]
    %v303 = vld [vmem:[%s1 + $0x8a8] sm:$0xff]
    %v304 = vld [vmem:[%s1 + $0x8b0] sm:$0xff]
    %v305 = vld [vmem:[%s1 + $0x8b8] sm:$0xff]
    %v306 = vld [vmem:[%s1 + $0x8c0] sm:$0xff]
    %v307 = vld [vmem:[%s1 + $0x8c8] sm:$0xff]
    %v308 = vld [vmem:[%s1 + $0x8d0] sm:$0xff]
    %v309 = vld [vmem:[%s1 + $0x8d8] sm:$0xff]
    %v310 = vld [vmem:[%s1 + $0x8e0] sm:$0xff]
    %v311 = vld [vmem:[%s1 + $0x8e8] sm:$0xff]
    %v312 = vld [vmem:[%s1 + $0x8f0] sm:$0xff]
    %v313 = vld [vmem:[%s1 + $0x8f8] sm:$0xff]
    %v314 = vld [vmem:[%s1 + $0x900] sm:$0xff]
    %v315 = vld [vmem:[%s1 + $0x908] sm:$0xff]
    %v316 = vld [vmem:[%s1 + $0x910] sm:$0xff]
    %v317 = vld [vmem:[%s1 + $0x918] sm:$0xff]
    %v318 = vld [vmem:[%s1 + $0x920] sm:$0xff]
    %v319 = vld [vmem:[%s1 + $0x928] sm:$0xff]
    %v320 = vld [vmem:[%s1 + $0x930] sm:$0xff]
    %v321 = vld [vmem:[%s1 + $0x938] sm:$0xff]
    %v322 = vld [vmem:[%s1 + $0x940] sm:$0xff]
    %v323 = vld [vmem:[%s1 + $0x948] sm:$0xff]
    %v324 = vld [vmem:[%s1 + $0x950] sm:$0xff]
    %v325 = vld [vmem:[%s1 + $0x958] sm:$0xff]
    %v326 = vld [vmem:[%s1 + $0x960] sm:$0xff]
    %v327 = vld [vmem:[%s1 + $0x968] sm:$0xff]
    %v328 = vld [vmem:[%s1 + $0x970] sm:$0xff]
    %v329 = vld [vmem:[%s1 + $0x978] sm:$0xff]
    %v330 = vld [vmem:[%s1 + $0x980] sm:$0xff]
    %v331 = vld [vmem:[%s1 + $0x988] sm:$0xff]
    %v332 = vld [vmem:[%s1 + $0x990] sm:$0xff]
    %v333 = vld [vmem:[%s1 + $0x998] sm:$0xff]
    %v334 = vld [vmem:[%s1 + $0x9a0] sm:$0xff]
    %v335 = vld [vmem:[%s1 + $0x9a8] sm:$0xff]
    %v336 = vld [vmem:[%s1 + $0x9b0] sm:$0xff]
    %v337 = vld [vmem:[%s1 + $0x9b8] sm:$0xff]
    %v338 = vld [vmem:[%s1 + $0x9c0] sm:$0xff]
    %v339 = vld [vmem:[%s1 + $0x9c8] sm:$0xff]
    %v340 = vld [vmem:[%s1 + $0x9d0] sm:$0xff]
    %v341 = vld [vmem:[%s1 + $0x9d8] sm:$0xff]
    %v342 = vld [vmem:[%s1 + $0x9e0] sm:$0xff]
    %v343 = vld [vmem:[%s1 + $0x9e8] sm:$0xff]
    %v344 = vld [vmem:[%s1 + $0x9f0] sm:$0xff]
    %v345 = vld [vmem:[%s1 + $0x9f8] sm:$0xff]
    %v346 = vld [vmem:[%s1 + $0xa00] sm:$0xff]
    %v347 = vld [vmem:[%s1 + $0xa08] sm:$0xff]
    %v348 = vld [vmem:[%s1 + $0xa10] sm:$0xff]
    %v349 = vld [vmem:[%s1 + $0xa18] sm:$0xff]
    %v350 = vld [vmem:[%s1 + $0xa20] sm:$0xff]
    %v351 = vld [vmem:[%s1 + $0xa28] sm:$0xff]
    %v352 = vld [vmem:[%s1 + $0xa30] sm:$0xff]
    %v353 = vld [vmem:[%s1 + $0xa38] sm:$0xff]
    %v354 = vld [vmem:[%s1 + $0xa40] sm:$0xff]
    %v355 = vld [vmem:[%s1 + $0xa48] sm:$0xff]
    %v356 = vld [vmem:[%s1 + $0xa50] sm:$0xff]
    %v357 = vld [vmem:[%s1 + $0xa58] sm:$0xff]
    %v358 = vld [vmem:[%s1 + $0xa60] sm:$0xff]
    %v359 = vld [vmem:[%s1 + $0xa68] sm:$0xff]
    %v360 = vld [vmem:[%s1 + $0xa70] sm:$0xff]
    %v361 = vld [vmem:[%s1 + $0xa78] sm:$0xff]
    %v362 = vld [vmem:[%s1 + $0xa80] sm:$0xff]
    %v363 = vld [vmem:[%s1 + $0xa88] sm:$0xff]
    %v364 = vld [vmem:[%s1 + $0xa90] sm:$0xff]
    %v365 = vld [vmem:[%s1 + $0xa98] sm:$0xff]
    %v366 = vld [vmem:[%s1 + $0xaa0] sm:$0xff]
    %v367 = vld [vmem:[%s1 + $0xaa8] sm:$0xff]
    %v368 = vld [vmem:[%s1 + $0xab0] sm:$0xff]
    %v369 = vld [vmem:[%s1 + $0xab8] sm:$0xff]
    %v370 = vld [vmem:[%s1 + $0xac0] sm:$0xff]
    %v371 = vld [vmem:[%s1 + $0xac8] sm:$0xff]
    %v372 = vld [vmem:[%s1 + $0xad0] sm:$0xff]
    %v373 = vld [vmem:[%s1 + $0xad8] sm:$0xff]
    %v374 = vld [vmem:[%s1 + $0xae0] sm:$0xff]
    %v375 = vld [vmem:[%s1 + $0xae8] sm:$0xff]
    %v376 = vld [vmem:[%s1 + $0xaf0] sm:$0xff]
    %v377 = vld [vmem:[%s1 + $0xaf8] sm:$0xff]
    %v378 = vld [vmem:[%s1 + $0xb00] sm:$0xff]
    %v379 = vld [vmem:[%s1 + $0xb08] sm:$0xff]
    %v380 = vld [vmem:[%s1 + $0xb10] sm:$0xff]
    %v381 = vld [vmem:[%s1 + $0xb18] sm:$0xff]
    %v382 = vld [vmem:[%s1 + $0xb20] sm:$0xff]
    %v383 = vld [vmem:[%s1 + $0xb28] sm:$0xff]
    %v384 = vld [vmem:[%s1 + $0xb30] sm:$0xff]
    %v385 = vld [vmem:[%s1 + $0xb38] sm:$0xff]
    %v386 = vld [vmem:[%s1 + $0xb40] sm:$0xff]
    %v387 = vld [vmem:[%s1 + $0xb48] sm:$0xff]
    %v388 = vld [vmem:[%s1 + $0xb50] sm:$0xff]
    %v389 = vld [vmem:[%s1 + $0xb58] sm:$0xff]
    %v390 = vld [vmem:[%s1 + $0xb60] sm:$0xff]
    %v391 = vld [vmem:[%s1 + $0xb68] sm:$0xff]
    %v392 = vld [vmem:[%s1 + $0xb70] sm:$0xff]
    %v393 = vld [vmem:[%s1 + $0xb78] sm:$0xff]
    %v394 = vld [vmem:[%s1 + $0xb80] sm:$0xff]
    %v395 = vld [vmem:[%s1 + $0xb88] sm:$0xff]
    %v396 = vld [vmem:[%s1 + $0xb90] sm:$0xff]
    %v397 = vld [vmem:[%s1 + $0xb98] sm:$0xff]
    %v398 = vld [vmem:[%s1 + $0xba0] sm:$0xff]
    %v399 = vld [vmem:[%s1 + $0xba8] sm:$0xff]
    %v400 = vld [vmem:[%s1 + $0xbb0] sm:$0xff]
    %v401 = vld [vmem:[%s1 + $0xbb8] sm:$0xff]
    %v402 = vld [vmem:[%s1 + $0xbc0] sm:$0xff]
    %v403 = vld [vmem:[%s1 + $0xbc8] sm:$0xff]
    %v404 = vld [vmem:[%s1 + $0xbd0] sm:$0xff]
    %v405 = vld [vmem:[%s1 + $0xbd8] sm:$0xff]
    %v406 = vld [vmem:[%s1 + $0xbe0] sm:$0xff]
    %v407 = vld [vmem:[%s1 + $0xbe8] sm:$0xff]
    %v408 = vld [vmem:[%s1 + $0xbf0] sm:$0xff]
    %v409 = vld [vmem:[%s1 + $0xbf8] sm:$0xff]
    %v410 = vld [vmem:[%s1 + $0xc00] sm:$0xff]
    %v411 = vld [vmem:[%s1 + $0xc08] sm:$0xff]
    %v412 = vld [vmem:[%s1 + $0xc10] sm:$0xff]
    %v413 = vld [vmem:[%s1 + $0xc18] sm:$0xff]
    %v414 = vld [vmem:[%s1 + $0xc20] sm:$0xff]
    %v415 = vld [vmem:[%s1 + $0xc28] sm:$0xff]
    %v416 = vld [vmem:[%s1 + $0xc30] sm:$0xff]
    %v417 = vld [vmem:[%s1 + $0xc38] sm:$0xff]
    %v418 = vld [vmem:[%s1 + $0xc40] sm:$0xff]
    %v419 = vld [vmem:[%s1 + $0xc48] sm:$0xff]
    %v420 = vld [vmem:[%s1 + $0xc50] sm:$0xff]
    %v421 = vld [vmem:[%s1 + $0xc58] sm:$0xff]
    %v422 = vld [vmem:[%s1 + $0xc60] sm:$0xff]
    %v423 = vld [vmem:[%s1 + $0xc68] sm:$0xff]
    %v424 = vld [vmem:[%s1 + $0xc70] sm:$0xff]
    %v425 = vld [vmem:[%s1 + $0xc78] sm:$0xff]
    %v426 = vld [vmem:[%s1 + $0xc80] sm:$0xff]
    %v427 = vld [vmem:[%s1 + $0xc88] sm:$0xff]
    %v428 = vld [vmem:[%s1 + $0xc90] sm:$0xff]
    %v429 = vld [vmem:[%s1 + $0xc98] sm:$0xff]
    %v430 = vld [vmem:[%s1 + $0xca0] sm:$0xff]
    %v431 = vld [vmem:[%s1 + $0xca8] sm:$0xff]
    %v432 = vld [vmem:[%s1 + $0xcb0] sm:$0xff]
    %v433 = vld [vmem:[%s1 + $0xcb8] sm:$0xff]
    %v434 = vld [vmem:[%s1 + $0xcc0] sm:$0xff]
    %v435 = vld [vmem:[%s1 + $0xcc8] sm:$0xff]
    %v436 = vld [vmem:[%s1 + $0xcd0] sm:$0xff]
    %v437 = vld [vmem:[%s1 + $0xcd8] sm:$0xff]
    %v438 = vld [vmem:[%s1 + $0xce0] sm:$0xff]
    %v439 = vld [vmem:[%s1 + $0xce8] sm:$0xff]
    %v440 = vld [vmem:[%s1 + $0xcf0] sm:$0xff]
    %v441 = vld [vmem:[%s1 + $0xcf8] sm:$0xff]
    %v442 = vld [vmem:[%s1 + $0xd00] sm:$0xff]
    %v443 = vld [vmem:[%s1 + $0xd08] sm:$0xff]
    %v444 = vld [vmem:[%s1 + $0xd10] sm:$0xff]
    %v445 = vld [vmem:[%s1 + $0xd18] sm:$0xff]
    %v446 = vld [vmem:[%s1 + $0xd20] sm:$0xff]
    %v447 = vld [vmem:[%s1 + $0xd28] sm:$0xff]
    %v448 = vld [vmem:[%s1 + $0xd30] sm:$0xff]
    %v449 = vld [vmem:[%s1 + $0xd38] sm:$0xff]
    %v450 = vld [vmem:[%s1 + $0xd40] sm:$0xff]
    %v451 = vld [vmem:[%s1 + $0xd48] sm:$0xff]
    %v452 = vld [vmem:[%s1 + $0xd50] sm:$0xff]
    %v453 = vld [vmem:[%s1 + $0xd58] sm:$0xff]
    %v454 = vld [vmem:[%s1 + $0xd60] sm:$0xff]
    %v455 = vld [vmem:[%s1 + $0xd68] sm:$0xff]
    %v456 = vld [vmem:[%s1 + $0xd70] sm:$0xff]
    %v457 = vld [vmem:[%s1 + $0xd78] sm:$0xff]
    %v458 = vld [vmem:[%s1 + $0xd80] sm:$0xff]
    %v459 = vld [vmem:[%s1 + $0xd88] sm:$0xff]
    %v460 = vld [vmem:[%s1 + $0xd90] sm:$0xff]
    %v461 = vld [vmem:[%s1 + $0xd98] sm:$0xff]
    %v462 = vld [vmem:[%s1 + $0xda0] sm:$0xff]
    %v463 = vld [vmem:[%s1 + $0xda8] sm:$0xff]
    %v464 = vld [vmem:[%s1 + $0xdb0] sm:$0xff]
    %v465 = vld [vmem:[%s1 + $0xdb8] sm:$0xff]
    %v466 = vld [vmem:[%s1 + $0xdc0] sm:$0xff]
    %v467 = vld [vmem:[%s1 + $0xdc8] sm:$0xff]
    %v468 = vld [vmem:[%s1 + $0xdd0] sm:$0xff]
    %v469 = vld [vmem:[%s1 + $0xdd8] sm:$0xff]
    %v470 = vld [vmem:[%s1 + $0xde0] sm:$0xff]
    %v471 = vld [vmem:[%s1 + $0xde8] sm:$0xff]
    %v472 = vld [vmem:[%s1 + $0xdf0] sm:$0xff]
    %v473 = vld [vmem:[%s1 + $0xdf8] sm:$0xff]
    %v474 = vld [vmem:[%s1 + $0xe00] sm:$0xff]
    %v475 = vld [vmem:[%s1 + $0xe08] sm:$0xff]
    %v476 = vld [vmem:[%s1 + $0xe10] sm:$0xff]
    %v477 = vld [vmem:[%s1 + $0xe18] sm:$0xff]
    %v478 = vld [vmem:[%s1 + $0xe20] sm:$0xff]
    %v479 = vld [vmem:[%s1 + $0xe28] sm:$0xff]
    %v480 = vld [vmem:[%s1 + $0xe30] sm:$0xff]
    %v481 = vld [vmem:[%s1 + $0xe38] sm:$0xff]
    %v482 = vld [vmem:[%s1 + $0xe40] sm:$0xff]
    %v483 = vld [vmem:[%s1 + $0xe48] sm:$0xff]
    %v484 = vld [vmem:[%s1 + $0xe50] sm:$0xff]
    %v485 = vld [vmem:[%s1 + $0xe58] sm:$0xff]
    %v486 = vld [vmem:[%s1 + $0xe60] sm:$0xff]
    %v487 = vld [vmem:[%s1 + $0xe68] sm:$0xff]
    %v488 = vld [vmem:[%s1 + $0xe70] sm:$0xff]
    %v489 = vld [vmem:[%s1 + $0xe78] sm:$0xff]
    %v490 = vld [vmem:[%s1 + $0xe80] sm:$0xff]
    %v491 = vld [vmem:[%s1 + $0xe88] sm:$0xff]
    %v492 = vld [vmem:[%s1 + $0xe90] sm:$0xff]
    %v493 = vld [vmem:[%s1 + $0xe98] sm:$0xff]
    %v494 = vld [vmem:[%s1 + $0xea0] sm:$0xff]
    %v495 = vld [vmem:[%s1 + $0xea8] sm:$0xff]
    %v496 = vld [vmem:[%s1 + $0xeb0] sm:$0xff]
    %v497 = vld [vmem:[%s1 + $0xeb8] sm:$0xff]
    %v498 = vld [vmem:[%s1 + $0xec0] sm:$0xff]
    %v499 = vld [vmem:[%s1 + $0xec8] sm:$0xff]
    %v500 = vld [vmem:[%s1 + $0xed0] sm:$0xff]
    %v501 = vld [vmem:[%s1 + $0xed8] sm:$0xff]
    %v502 = vld [vmem:[%s1 + $0xee0] sm:$0xff]
    %v503 = vld [vmem:[%s1 + $0xee8] sm:$0xff]
    %v504 = vld [vmem:[%s1 + $0xef0] sm:$0xff]
    %v505 = vld [vmem:[%s1 + $0xef8] sm:$0xff]
    %v506 = vld [vmem:[%s1 + $0xf00] sm:$0xff]
    %v507 = vld [vmem:[%s1 + $0xf08] sm:$0xff]
    %v508 = vld [vmem:[%s1 + $0xf10] sm:$0xff]
    %v509 = vld [vmem:[%s1 + $0xf18] sm:$0xff]
    %v510 = vld [vmem:[%s1 + $0xf20] sm:$0xff]
    %v511 = vld [vmem:[%s1 + $0xf28] sm:$0xff]
    %v512 = vld [vmem:[%s1 + $0xf30] sm:$0xff]
    %v513 = vld [vmem:[%s1 + $0xf38] sm:$0xff]
    %v514 = vld [vmem:[%s1 + $0xf40] sm:$0xff]
    %v515 = vld [vmem:[%s1 + $0xf48] sm:$0xff]
    %v516 = vld [vmem:[%s1 + $0xf50] sm:$0xff]
    %v517 = vld [vmem:[%s1 + $0xf58] sm:$0xff]
    %v518 = vld [vmem:[%s1 + $0xf60] sm:$0xff]
    %v519 = vld [vmem:[%s1 + $0xf68] sm:$0xff]
    %v520 = vld [vmem:[%s1 + $0xf70] sm:$0xff]
    %v521 = vld [vmem:[%s1 + $0xf78] sm:$0xff]
    %v522 = vld [vmem:[%s1 + $0xf80] sm:$0xff]
    %v523 = vld [vmem:[%s1 + $0xf88] sm:$0xff]
    %v524 = vld [vmem:[%s1 + $0xf90] sm:$0xff]
    %v525 = vld [vmem:[%s1 + $0xf98] sm:$0xff]
    %v526 = vld [vmem:[%s1 + $0xfa0] sm:$0xff]
    %v527 = vld [vmem:[%s1 + $0xfa8] sm:$0xff]
    %v528 = vld [vmem:[%s1 + $0xfb0] sm:$0xff]
    %v529 = vld [vmem:[%s1 + $0xfb8] sm:$0xff]
    %v530 = vld [vmem:[%s1 + $0xfc0] sm:$0xff]
    %v531 = vld [vmem:[%s1 + $0xfc8] sm:$0xff]
    %v532 = vld [vmem:[%s1 + $0xfd0] sm:$0xff]
    %v533 = vld [vmem:[%s1 + $0xfd8] sm:$0xff]
    %v534 = vld [vmem:[%s1 + $0xfe0] sm:$0xff]
    %v535 = vld [vmem:[%s1 + $0xfe8] sm:$0xff]
    %v536 = vld [vmem:[%s1 + $0xff0] sm:$0xff]
    %v537 = vld [vmem:[%s1 + $0xff8] sm:$0xff]
    %v538 = vld [vmem:[%s1 + $0x1000] sm:$0xff]
    %v539 = vld [vmem:[%s1 + $0x1008] sm:$0xff]
    %v540 = vld [vmem:[%s1 + $0x1010] sm:$0xff]
    %v541 = vld [vmem:[%s1 + $0x1018] sm:$0xff]
    %v542 = vld [vmem:[%s1 + $0x1020] sm:$0xff]
    %v543 = vld [vmem:[%s1 + $0x1028] sm:$0xff]
    %v544 = vld [vmem:[%s1 + $0x1030] sm:$0xff]
    %v545 = vld [vmem:[%s1 + $0x1038] sm:$0xff]
    %v546 = vld [vmem:[%s1 + $0x1040] sm:$0xff]
    %v547 = vld [vmem:[%s1 + $0x1048] sm:$0xff]
    %v548 = vld [vmem:[%s1 + $0x1050] sm:$0xff]
    %v549 = vld [vmem:[%s1 + $0x1058] sm:$0xff]
    %v550 = vld [vmem:[%s1 + $0x1060] sm:$0xff]
    %v551 = vld [vmem:[%s1 + $0x1068] sm:$0xff]
    %v552 = vld [vmem:[%s1 + $0x1070] sm:$0xff]
    %v553 = vld [vmem:[%s1 + $0x1078] sm:$0xff]
    %v554 = vld [vmem:[%s1 + $0x1080] sm:$0xff]
    %v555 = vld [vmem:[%s1 + $0x1088] sm:$0xff]
    %v556 = vld [vmem:[%s1 + $0x1090] sm:$0xff]
    %v557 = vld [vmem:[%s1 + $0x1098] sm:$0xff]
    %v558 = vld [vmem:[%s1 + $0x10a0] sm:$0xff]
    %v559 = vld [vmem:[%s1 + $0x10a8] sm:$0xff]
    %v560 = vld [vmem:[%s1 + $0x10b0] sm:$0xff]
    %v561 = vld [vmem:[%s1 + $0x10b8] sm:$0xff]
    %v562 = vld [vmem:[%s1 + $0x10c0] sm:$0xff]
    %v563 = vld [vmem:[%s1 + $0x10c8] sm:$0xff]
    %v564 = vld [vmem:[%s1 + $0x10d0] sm:$0xff]
    %v565 = vld [vmem:[%s1 + $0x10d8] sm:$0xff]
    %v566 = vld [vmem:[%s1 + $0x10e0] sm:$0xff]
    %v567 = vld [vmem:[%s1 + $0x10e8] sm:$0xff]
    %v568 = vld [vmem:[%s1 + $0x10f0] sm:$0xff]
    %v569 = vld [vmem:[%s1 + $0x10f8] sm:$0xff]
    %v570 = vld [vmem:[%s1 + $0x1100] sm:$0xff]
    %v571 = vld [vmem:[%s1 + $0x1108] sm:$0xff]
    %v572 = vld [vmem:[%s1 + $0x1110] sm:$0xff]
    %v573 = vld [vmem:[%s1 + $0x1118] sm:$0xff]
    %v574 = vld [vmem:[%s1 + $0x1120] sm:$0xff]
    %v575 = vld [vmem:[%s1 + $0x1128] sm:$0xff]
    %v576 = vld [vmem:[%s1 + $0x1130] sm:$0xff]
    %v577 = vld [vmem:[%s1 + $0x1138] sm:$0xff]
    %v578 = vld [vmem:[%s1 + $0x1140] sm:$0xff]
    %v579 = vld [vmem:[%s1 + $0x1148] sm:$0xff]
    %v580 = vld [vmem:[%s1 + $0x1150] sm:$0xff]
    %v581 = vld [vmem:[%s1 + $0x1158] sm:$0xff]
    %v582 = vld [vmem:[%s1 + $0x1160] sm:$0xff]
    %v583 = vld [vmem:[%s1 + $0x1168] sm:$0xff]
    %v584 = vld [vmem:[%s1 + $0x1170] sm:$0xff]
    %v585 = vld [vmem:[%s1 + $0x1178] sm:$0xff]
    %v586 = vld [vmem:[%s1 + $0x1180] sm:$0xff]
    %v587 = vld [vmem:[%s1 + $0x1188] sm:$0xff]
    %v588 = vld [vmem:[%s1 + $0x1190] sm:$0xff]
    %v589 = vld [vmem:[%s1 + $0x1198] sm:$0xff]
    %v590 = vld [vmem:[%s1 + $0x11a0] sm:$0xff]
    %v591 = vld [vmem:[%s1 + $0x11a8] sm:$0xff]
    %v592 = vld [vmem:[%s1 + $0x11b0] sm:$0xff]
    %v593 = vld [vmem:[%s1 + $0x11b8] sm:$0xff]
    %v594 = vld [vmem:[%s1 + $0x11c0] sm:$0xff]
    %v595 = vld [vmem:[%s1 + $0x11c8] sm:$0xff]
    %v596 = vld [vmem:[%s1 + $0x11d0] sm:$0xff]
    %v597 = vld [vmem:[%s1 + $0x11d8] sm:$0xff]
    %v598 = vld [vmem:[%s1 + $0x11e0] sm:$0xff]
    %v599 = vld [vmem:[%s1 + $0x11e8] sm:$0xff]
    %v600 = vld [vmem:[%s1 + $0x11f0] sm:$0xff]
    %v601 = vld [vmem:[%s1 + $0x11f8] sm:$0xff]
    %v602 = vpack.c.bf16 %v29, %v26
    %v603 = vpack.c.bf16 %v30, %v27
    %v604 = vpack.c.bf16 %v31, %v28
    %v605 = vpack.c.bf16 %v35, %v32
    %v606 = vpack.c.bf16 %v36, %v33
    %v607 = vpack.c.bf16 %v37, %v34
    %v608 = vpack.c.bf16 %v41, %v38
    %v609 = vpack.c.bf16 %v42, %v39
    %v610 = vpack.c.bf16 %v43, %v40
    %v611 = vpack.c.bf16 %v47, %v44
    %v612 = vpack.c.bf16 %v48, %v45
    %v613 = vpack.c.bf16 %v49, %v46
    %v614 = vpack.c.bf16 %v53, %v50
    %v615 = vpack.c.bf16 %v54, %v51
    %v616 = vpack.c.bf16 %v55, %v52
    %v617 = vpack.c.bf16 %v59, %v56
    %v618 = vpack.c.bf16 %v60, %v57
    %v619 = vpack.c.bf16 %v61, %v58
    %v620 = vpack.c.bf16 %v65, %v62
    %v621 = vpack.c.bf16 %v66, %v63
    %v622 = vpack.c.bf16 %v67, %v64
    %v623 = vpack.c.bf16 %v71, %v68
    %v624 = vpack.c.bf16 %v72, %v69
    %v625 = vpack.c.bf16 %v73, %v70
    %v626 = vpack.c.bf16 %v77, %v74
    %v627 = vpack.c.bf16 %v78, %v75
    %v628 = vpack.c.bf16 %v79, %v76
    %v629 = vpack.c.bf16 %v83, %v80
    %v630 = vpack.c.bf16 %v84, %v81
    %v631 = vpack.c.bf16 %v85, %v82
    %v632 = vpack.c.bf16 %v89, %v86
    %v633 = vpack.c.bf16 %v90, %v87
    %v634 = vpack.c.bf16 %v91, %v88
    %v635 = vpack.c.bf16 %v95, %v92
    %v636 = vpack.c.bf16 %v96, %v93
    %v637 = vpack.c.bf16 %v97, %v94
    %v638 = vpack.c.bf16 %v101, %v98
    %v639 = vpack.c.bf16 %v102, %v99
    %v640 = vpack.c.bf16 %v103, %v100
    %v641 = vpack.c.bf16 %v107, %v104
    %v642 = vpack.c.bf16 %v108, %v105
    %v643 = vpack.c.bf16 %v109, %v106
    %v644 = vpack.c.bf16 %v113, %v110
    %v645 = vpack.c.bf16 %v114, %v111
    %v646 = vpack.c.bf16 %v115, %v112
    %v647 = vpack.c.bf16 %v119, %v116
    %v648 = vpack.c.bf16 %v120, %v117
    %v649 = vpack.c.bf16 %v121, %v118
    %v650 = vpack.c.bf16 %v125, %v122
    %v651 = vpack.c.bf16 %v126, %v123
    %v652 = vpack.c.bf16 %v127, %v124
    %v653 = vpack.c.bf16 %v131, %v128
    %v654 = vpack.c.bf16 %v132, %v129
    %v655 = vpack.c.bf16 %v133, %v130
    %v656 = vpack.c.bf16 %v137, %v134
    %v657 = vpack.c.bf16 %v138, %v135
    %v658 = vpack.c.bf16 %v139, %v136
    %v659 = vpack.c.bf16 %v143, %v140
    %v660 = vpack.c.bf16 %v144, %v141
    %v661 = vpack.c.bf16 %v145, %v142
    %v662 = vpack.c.bf16 %v149, %v146
    %v663 = vpack.c.bf16 %v150, %v147
    %v664 = vpack.c.bf16 %v151, %v148
    %v665 = vpack.c.bf16 %v155, %v152
    %v666 = vpack.c.bf16 %v156, %v153
    %v667 = vpack.c.bf16 %v157, %v154
    %v668 = vpack.c.bf16 %v161, %v158
    %v669 = vpack.c.bf16 %v162, %v159
    %v670 = vpack.c.bf16 %v163, %v160
    %v671 = vpack.c.bf16 %v167, %v164
    %v672 = vpack.c.bf16 %v168, %v165
    %v673 = vpack.c.bf16 %v169, %v166
    %v674 = vpack.c.bf16 %v173, %v170
    %v675 = vpack.c.bf16 %v174, %v171
    %v676 = vpack.c.bf16 %v175, %v172
    %v677 = vpack.c.bf16 %v179, %v176
    %v678 = vpack.c.bf16 %v180, %v177
    %v679 = vpack.c.bf16 %v181, %v178
    %v680 = vpack.c.bf16 %v185, %v182
    %v681 = vpack.c.bf16 %v186, %v183
    %v682 = vpack.c.bf16 %v187, %v184
    %v683 = vpack.c.bf16 %v191, %v188
    %v684 = vpack.c.bf16 %v192, %v189
    %v685 = vpack.c.bf16 %v193, %v190
    %v686 = vpack.c.bf16 %v197, %v194
    %v687 = vpack.c.bf16 %v198, %v195
    %v688 = vpack.c.bf16 %v199, %v196
    %v689 = vpack.c.bf16 %v203, %v200
    %v690 = vpack.c.bf16 %v204, %v201
    %v691 = vpack.c.bf16 %v205, %v202
    %v692 = vpack.c.bf16 %v209, %v206
    %v693 = vpack.c.bf16 %v210, %v207
    %v694 = vpack.c.bf16 %v211, %v208
    %v695 = vpack.c.bf16 %v215, %v212
    %v696 = vpack.c.bf16 %v216, %v213
    %v697 = vpack.c.bf16 %v217, %v214
    %v698 = vpack.c.bf16 %v221, %v218
    %v699 = vpack.c.bf16 %v222, %v219
    %v700 = vpack.c.bf16 %v223, %v220
    %v701 = vpack.c.bf16 %v227, %v224
    %v702 = vpack.c.bf16 %v228, %v225
    %v703 = vpack.c.bf16 %v229, %v226
    %v704 = vpack.c.bf16 %v233, %v230
    %v705 = vpack.c.bf16 %v234, %v231
    %v706 = vpack.c.bf16 %v235, %v232
    %v707 = vpack.c.bf16 %v239, %v236
    %v708 = vpack.c.bf16 %v240, %v237
    %v709 = vpack.c.bf16 %v241, %v238
    %v710 = vpack.c.bf16 %v245, %v242
    %v711 = vpack.c.bf16 %v246, %v243
    %v712 = vpack.c.bf16 %v247, %v244
    %v713 = vpack.c.bf16 %v251, %v248
    %v714 = vpack.c.bf16 %v252, %v249
    %v715 = vpack.c.bf16 %v253, %v250
    %v716 = vpack.c.bf16 %v257, %v254
    %v717 = vpack.c.bf16 %v258, %v255
    %v718 = vpack.c.bf16 %v259, %v256
    %v719 = vpack.c.bf16 %v263, %v260
    %v720 = vpack.c.bf16 %v264, %v261
    %v721 = vpack.c.bf16 %v265, %v262
    %v722 = vpack.c.bf16 %v269, %v266
    %v723 = vpack.c.bf16 %v270, %v267
    %v724 = vpack.c.bf16 %v271, %v268
    %v725 = vpack.c.bf16 %v275, %v272
    %v726 = vpack.c.bf16 %v276, %v273
    %v727 = vpack.c.bf16 %v277, %v274
    %v728 = vpack.c.bf16 %v281, %v278
    %v729 = vpack.c.bf16 %v282, %v279
    %v730 = vpack.c.bf16 %v283, %v280
    %v731 = vpack.c.bf16 %v287, %v284
    %v732 = vpack.c.bf16 %v288, %v285
    %v733 = vpack.c.bf16 %v289, %v286
    %v734 = vpack.c.bf16 %v293, %v290
    %v735 = vpack.c.bf16 %v294, %v291
    %v736 = vpack.c.bf16 %v295, %v292
    %v737 = vpack.c.bf16 %v299, %v296
    %v738 = vpack.c.bf16 %v300, %v297
    %v739 = vpack.c.bf16 %v301, %v298
    %v740 = vpack.c.bf16 %v305, %v302
    %v741 = vpack.c.bf16 %v306, %v303
    %v742 = vpack.c.bf16 %v307, %v304
    %v743 = vpack.c.bf16 %v311, %v308
    %v744 = vpack.c.bf16 %v312, %v309
    %v745 = vpack.c.bf16 %v313, %v310
    %v746 = vpack.c.bf16 %v317, %v314
    %v747 = vpack.c.bf16 %v318, %v315
    %v748 = vpack.c.bf16 %v319, %v316
    %v749 = vpack.c.bf16 %v323, %v320
    %v750 = vpack.c.bf16 %v324, %v321
    %v751 = vpack.c.bf16 %v325, %v322
    %v752 = vpack.c.bf16 %v329, %v326
    %v753 = vpack.c.bf16 %v330, %v327
    %v754 = vpack.c.bf16 %v331, %v328
    %v755 = vpack.c.bf16 %v335, %v332
    %v756 = vpack.c.bf16 %v336, %v333
    %v757 = vpack.c.bf16 %v337, %v334
    %v758 = vpack.c.bf16 %v341, %v338
    %v759 = vpack.c.bf16 %v342, %v339
    %v760 = vpack.c.bf16 %v343, %v340
    %v761 = vpack.c.bf16 %v347, %v344
    %v762 = vpack.c.bf16 %v348, %v345
    %v763 = vpack.c.bf16 %v349, %v346
    %v764 = vpack.c.bf16 %v353, %v350
    %v765 = vpack.c.bf16 %v354, %v351
    %v766 = vpack.c.bf16 %v355, %v352
    %v767 = vpack.c.bf16 %v359, %v356
    %v768 = vpack.c.bf16 %v360, %v357
    %v769 = vpack.c.bf16 %v361, %v358
    %v770 = vpack.c.bf16 %v365, %v362
    %v771 = vpack.c.bf16 %v366, %v363
    %v772 = vpack.c.bf16 %v367, %v364
    %v773 = vpack.c.bf16 %v371, %v368
    %v774 = vpack.c.bf16 %v372, %v369
    %v775 = vpack.c.bf16 %v373, %v370
    %v776 = vpack.c.bf16 %v377, %v374
    %v777 = vpack.c.bf16 %v378, %v375
    %v778 = vpack.c.bf16 %v379, %v376
    %v779 = vpack.c.bf16 %v383, %v380
    %v780 = vpack.c.bf16 %v384, %v381
    %v781 = vpack.c.bf16 %v385, %v382
    %v782 = vpack.c.bf16 %v389, %v386
    %v783 = vpack.c.bf16 %v390, %v387
    %v784 = vpack.c.bf16 %v391, %v388
    %v785 = vpack.c.bf16 %v395, %v392
    %v786 = vpack.c.bf16 %v396, %v393
    %v787 = vpack.c.bf16 %v397, %v394
    %v788 = vpack.c.bf16 %v401, %v398
    %v789 = vpack.c.bf16 %v402, %v399
    %v790 = vpack.c.bf16 %v403, %v400
    %v791 = vpack.c.bf16 %v407, %v404
    %v792 = vpack.c.bf16 %v408, %v405
    %v793 = vpack.c.bf16 %v409, %v406
    %v794 = vpack.c.bf16 %v413, %v410
    %v795 = vpack.c.bf16 %v414, %v411
    %v796 = vpack.c.bf16 %v415, %v412
    %v797 = vpack.c.bf16 %v419, %v416
    %v798 = vpack.c.bf16 %v420, %v417
    %v799 = vpack.c.bf16 %v421, %v418
    %v800 = vpack.c.bf16 %v425, %v422
    %v801 = vpack.c.bf16 %v426, %v423
    %v802 = vpack.c.bf16 %v427, %v424
    %v803 = vpack.c.bf16 %v431, %v428
    %v804 = vpack.c.bf16 %v432, %v429
    %v805 = vpack.c.bf16 %v433, %v430
    %v806 = vpack.c.bf16 %v437, %v434
    %v807 = vpack.c.bf16 %v438, %v435
    %v808 = vpack.c.bf16 %v439, %v436
    %v809 = vpack.c.bf16 %v443, %v440
    %v810 = vpack.c.bf16 %v444, %v441
    %v811 = vpack.c.bf16 %v445, %v442
    %v812 = vpack.c.bf16 %v449, %v446
    %v813 = vpack.c.bf16 %v450, %v447
    %v814 = vpack.c.bf16 %v451, %v448
    %v815 = vpack.c.bf16 %v455, %v452
    %v816 = vpack.c.bf16 %v456, %v453
    %v817 = vpack.c.bf16 %v457, %v454
    %v818 = vpack.c.bf16 %v461, %v458
    %v819 = vpack.c.bf16 %v462, %v459
    %v820 = vpack.c.bf16 %v463, %v460
    %v821 = vpack.c.bf16 %v467, %v464
    %v822 = vpack.c.bf16 %v468, %v465
    %v823 = vpack.c.bf16 %v469, %v466
    %v824 = vpack.c.bf16 %v473, %v470
    %v825 = vpack.c.bf16 %v474, %v471
    %v826 = vpack.c.bf16 %v475, %v472
    %v827 = vpack.c.bf16 %v479, %v476
    %v828 = vpack.c.bf16 %v480, %v477
    %v829 = vpack.c.bf16 %v481, %v478
    %v830 = vpack.c.bf16 %v485, %v482
    %v831 = vpack.c.bf16 %v486, %v483
    %v832 = vpack.c.bf16 %v487, %v484
    %v833 = vpack.c.bf16 %v491, %v488
    %v834 = vpack.c.bf16 %v492, %v489
    %v835 = vpack.c.bf16 %v493, %v490
    %v836 = vpack.c.bf16 %v497, %v494
    %v837 = vpack.c.bf16 %v498, %v495
    %v838 = vpack.c.bf16 %v499, %v496
    %v839 = vpack.c.bf16 %v503, %v500
    %v840 = vpack.c.bf16 %v504, %v501
    %v841 = vpack.c.bf16 %v505, %v502
    %v842 = vpack.c.bf16 %v509, %v506
    %v843 = vpack.c.bf16 %v510, %v507
    %v844 = vpack.c.bf16 %v511, %v508
    %v845 = vpack.c.bf16 %v515, %v512
    %v846 = vpack.c.bf16 %v516, %v513
    %v847 = vpack.c.bf16 %v517, %v514
    %v848 = vpack.c.bf16 %v521, %v518
    %v849 = vpack.c.bf16 %v522, %v519
    %v850 = vpack.c.bf16 %v523, %v520
    %v851 = vpack.c.bf16 %v527, %v524
    %v852 = vpack.c.bf16 %v528, %v525
    %v853 = vpack.c.bf16 %v529, %v526
    %v854 = vpack.c.bf16 %v533, %v530
    %v855 = vpack.c.bf16 %v534, %v531
    %v856 = vpack.c.bf16 %v535, %v532
    %v857 = vpack.c.bf16 %v539, %v536
    %v858 = vpack.c.bf16 %v540, %v537
    %v859 = vpack.c.bf16 %v541, %v538
    %v860 = vpack.c.bf16 %v545, %v542
    %v861 = vpack.c.bf16 %v546, %v543
    %v862 = vpack.c.bf16 %v547, %v544
    %v863 = vpack.c.bf16 %v551, %v548
    %v864 = vpack.c.bf16 %v552, %v549
    %v865 = vpack.c.bf16 %v553, %v550
    %v866 = vpack.c.bf16 %v557, %v554
    %v867 = vpack.c.bf16 %v558, %v555
    %v868 = vpack.c.bf16 %v559, %v556
    %v869 = vpack.c.bf16 %v563, %v560
    %v870 = vpack.c.bf16 %v564, %v561
    %v871 = vpack.c.bf16 %v565, %v562
    %v872 = vpack.c.bf16 %v569, %v566
    %v873 = vpack.c.bf16 %v570, %v567
    %v874 = vpack.c.bf16 %v571, %v568
    %v875 = vpack.c.bf16 %v575, %v572
    %v876 = vpack.c.bf16 %v576, %v573
    %v877 = vpack.c.bf16 %v577, %v574
    %v878 = vpack.c.bf16 %v581, %v578
    %v879 = vpack.c.bf16 %v582, %v579
    %v880 = vpack.c.bf16 %v583, %v580
    %v881 = vpack.c.bf16 %v587, %v584
    %v882 = vpack.c.bf16 %v588, %v585
    %v883 = vpack.c.bf16 %v589, %v586
    %v884 = vpack.c.bf16 %v593, %v590
    %v885 = vpack.c.bf16 %v594, %v591
    %v886 = vpack.c.bf16 %v595, %v592
    %v887 = vpack.c.bf16 %v599, %v596
    %v888 = vpack.c.bf16 %v600, %v597
    %v889 = vpack.c.bf16 %v601, %v598
    %v890 = vld [vmem:[%s0] sm:$0xff]
    %v891 = vld [vmem:[%s0 + $0x8] sm:$0xff]
    %v892 = vld [vmem:[%s0 + $0x10] sm:$0xff]
    %v893 = vld [vmem:[%s0 + $0x18] sm:$0xff]
    %v894 = vld [vmem:[%s0 + $0x20] sm:$0xff]
    %v895 = vld [vmem:[%s0 + $0x28] sm:$0xff]
    %v896 = vld [vmem:[%s0 + $0x30] sm:$0xff]
    %v897 = vld [vmem:[%s0 + $0x38] sm:$0xff]
    %v898 = vld [vmem:[%s0 + $0x40] sm:$0xff]
    %v899 = vld [vmem:[%s0 + $0x48] sm:$0xff]
    %v900 = vld [vmem:[%s0 + $0x50] sm:$0xff]
    %v901 = vld [vmem:[%s0 + $0x58] sm:$0xff]
    %v902 = vld [vmem:[%s0 + $0x60] sm:$0xff]
    %v903 = vld [vmem:[%s0 + $0x68] sm:$0xff]
    %v904 = vld [vmem:[%s0 + $0x70] sm:$0xff]
    %v905 = vld [vmem:[%s0 + $0x78] sm:$0xff]
    %v906 = vld [vmem:[%s0 + $0x80] sm:$0xff]
    %v907 = vld [vmem:[%s0 + $0x88] sm:$0xff]
    %v908 = vld [vmem:[%s0 + $0x90] sm:$0xff]
    %v909 = vld [vmem:[%s0 + $0x98] sm:$0xff]
    %v910 = vld [vmem:[%s0 + $0xa0] sm:$0xff]
    %v911 = vld [vmem:[%s0 + $0xa8] sm:$0xff]
    %v912 = vld [vmem:[%s0 + $0xb0] sm:$0xff]
    %v913 = vld [vmem:[%s0 + $0xb8] sm:$0xff]
    %v914 = vld [vmem:[%s0 + $0xc0] sm:$0xff]
    %v915 = vld [vmem:[%s0 + $0xc8] sm:$0xff]
    %v916 = vld [vmem:[%s0 + $0xd0] sm:$0xff]
    %v917 = vld [vmem:[%s0 + $0xd8] sm:$0xff]
    %v918 = vld [vmem:[%s0 + $0xe0] sm:$0xff]
    %v919 = vld [vmem:[%s0 + $0xe8] sm:$0xff]
    %v920 = vld [vmem:[%s0 + $0xf0] sm:$0xff]
    %v921 = vld [vmem:[%s0 + $0xf8] sm:$0xff]
    %v922 = vld [vmem:[%s0 + $0x100] sm:$0xff]
    %v923 = vld [vmem:[%s0 + $0x108] sm:$0xff]
    %v924 = vld [vmem:[%s0 + $0x110] sm:$0xff]
    %v925 = vld [vmem:[%s0 + $0x118] sm:$0xff]
    %v926 = vld [vmem:[%s0 + $0x120] sm:$0xff]
    %v927 = vld [vmem:[%s0 + $0x128] sm:$0xff]
    %v928 = vld [vmem:[%s0 + $0x130] sm:$0xff]
    %v929 = vld [vmem:[%s0 + $0x138] sm:$0xff]
    %v930 = vpack.c.bf16 %v891, %v890
    %v931 = vpack.c.bf16 %v893, %v892
    %v932 = vpack.c.bf16 %v895, %v894
    %v933 = vpack.c.bf16 %v897, %v896
    %v934 = vpack.c.bf16 %v899, %v898
    %v935 = vpack.c.bf16 %v901, %v900
    %v936 = vpack.c.bf16 %v903, %v902
    %v937 = vpack.c.bf16 %v905, %v904
    %v938 = vpack.c.bf16 %v907, %v906
    %v939 = vpack.c.bf16 %v909, %v908
    %v940 = vpack.c.bf16 %v911, %v910
    %v941 = vpack.c.bf16 %v913, %v912
    %v942 = vpack.c.bf16 %v915, %v914
    %v943 = vpack.c.bf16 %v917, %v916
    %v944 = vpack.c.bf16 %v919, %v918
    %v945 = vpack.c.bf16 %v921, %v920
    %v946 = vpack.c.bf16 %v923, %v922
    %v947 = vpack.c.bf16 %v925, %v924
    %v948 = vpack.c.bf16 %v927, %v926
    %v949 = vpack.c.bf16 %v929, %v928
    %v950 = vld [vmem:[%s2] sm:$0xff]
    %v951 = vld [vmem:[%s2 + $0x8] sm:$0xff]
    %v952 = vld [vmem:[%s2 + $0x10] sm:$0xff]
    %v953 = vld [vmem:[%s2 + $0x18] sm:$0xff]
    %v954 = vld [vmem:[%s2 + $0x20] sm:$0xff]
    %v955 = vld [vmem:[%s2 + $0x28] sm:$0xff]
    %v956 = vld [vmem:[%s2 + $0x30] sm:$0xff]
    %v957 = vld [vmem:[%s2 + $0x38] sm:$0xff]
    %v958 = vld [vmem:[%s2 + $0x40] sm:$0xff]
    %v959 = vld [vmem:[%s2 + $0x48] sm:$0xff]
    %v960 = vld [vmem:[%s2 + $0x50] sm:$0xff]
    %v961 = vld [vmem:[%s2 + $0x58] sm:$0xff]
    %v962 = vld [vmem:[%s2 + $0x60] sm:$0xff]
    %v963 = vld [vmem:[%s2 + $0x68] sm:$0xff]
    %v964 = vld [vmem:[%s2 + $0x70] sm:$0xff]
    %v965 = vld [vmem:[%s2 + $0x78] sm:$0xff]
    %v966 = vld [vmem:[%s2 + $0x80] sm:$0xff]
    %v967 = vld [vmem:[%s2 + $0x88] sm:$0xff]
    %v968 = vld [vmem:[%s2 + $0x90] sm:$0xff]
    %v969 = vld [vmem:[%s2 + $0x98] sm:$0xff]
    %v970 = vld [vmem:[%s2 + $0xa0] sm:$0xff]
    %v971 = vld [vmem:[%s2 + $0xa8] sm:$0xff]
    %v972 = vld [vmem:[%s2 + $0xb0] sm:$0xff]
    %v973 = vld [vmem:[%s2 + $0xb8] sm:$0xff]
    %v974 = vld [vmem:[%s2 + $0xc0] sm:$0xff]
    %v975 = vld [vmem:[%s2 + $0xc8] sm:$0xff]
    %v976 = vld [vmem:[%s2 + $0xd0] sm:$0xff]
    %v977 = vld [vmem:[%s2 + $0xd8] sm:$0xff]
    %v978 = vld [vmem:[%s2 + $0xe0] sm:$0xff]
    %v979 = vld [vmem:[%s2 + $0xe8] sm:$0xff]
    %v980 = vld [vmem:[%s2 + $0xf0] sm:$0xff]
    %v981 = vld [vmem:[%s2 + $0xf8] sm:$0xff]
    %v982 = vld [vmem:[%s2 + $0x100] sm:$0xff]
    %v983 = vld [vmem:[%s2 + $0x108] sm:$0xff]
    %v984 = vld [vmem:[%s2 + $0x110] sm:$0xff]
    %v985 = vld [vmem:[%s2 + $0x118] sm:$0xff]
    %v986 = vld [vmem:[%s2 + $0x120] sm:$0xff]
    %v987 = vld [vmem:[%s2 + $0x128] sm:$0xff]
    %v988 = vld [vmem:[%s2 + $0x130] sm:$0xff]
    %v989 = vld [vmem:[%s2 + $0x138] sm:$0xff]
    %v990 = vld [vmem:[%s2 + $0x140] sm:$0xff]
    %v991 = vld [vmem:[%s2 + $0x148] sm:$0xff]
    %v992 = vld [vmem:[%s2 + $0x150] sm:$0xff]
    %v993 = vld [vmem:[%s2 + $0x158] sm:$0xff]
    %v994 = vld [vmem:[%s2 + $0x160] sm:$0xff]
    %v995 = vld [vmem:[%s2 + $0x168] sm:$0xff]
    %v996 = vld [vmem:[%s2 + $0x170] sm:$0xff]
    %v997 = vld [vmem:[%s2 + $0x178] sm:$0xff]
    %v998 = vld [vmem:[%s2 + $0x180] sm:$0xff]
    %v999 = vld [vmem:[%s2 + $0x188] sm:$0xff]
    %v1000 = vld [vmem:[%s2 + $0x190] sm:$0xff]
    %v1001 = vld [vmem:[%s2 + $0x198] sm:$0xff]
    %v1002 = vld [vmem:[%s2 + $0x1a0] sm:$0xff]
    %v1003 = vld [vmem:[%s2 + $0x1a8] sm:$0xff]
    %v1004 = vld [vmem:[%s2 + $0x1b0] sm:$0xff]
    %v1005 = vld [vmem:[%s2 + $0x1b8] sm:$0xff]
    %v1006 = vld [vmem:[%s2 + $0x1c0] sm:$0xff]
    %v1007 = vld [vmem:[%s2 + $0x1c8] sm:$0xff]
    %v1008 = vld [vmem:[%s2 + $0x1d0] sm:$0xff]
    %v1009 = vld [vmem:[%s2 + $0x1d8] sm:$0xff]
    %v1010 = vld [vmem:[%s2 + $0x1e0] sm:$0xff]
    %v1011 = vld [vmem:[%s2 + $0x1e8] sm:$0xff]
    %v1012 = vld [vmem:[%s2 + $0x1f0] sm:$0xff]
    %v1013 = vld [vmem:[%s2 + $0x1f8] sm:$0xff]
    %v1014 = vld [vmem:[%s2 + $0x200] sm:$0xff]
    %v1015 = vld [vmem:[%s2 + $0x208] sm:$0xff]
    %v1016 = vld [vmem:[%s2 + $0x210] sm:$0xff]
    %v1017 = vld [vmem:[%s2 + $0x218] sm:$0xff]
    %v1018 = vld [vmem:[%s2 + $0x220] sm:$0xff]
    %v1019 = vld [vmem:[%s2 + $0x228] sm:$0xff]
    %v1020 = vld [vmem:[%s2 + $0x230] sm:$0xff]
    %v1021 = vld [vmem:[%s2 + $0x238] sm:$0xff]
    %v1022 = vld [vmem:[%s2 + $0x240] sm:$0xff]
    %v1023 = vld [vmem:[%s2 + $0x248] sm:$0xff]
    %v1024 = vld [vmem:[%s2 + $0x250] sm:$0xff]
    %v1025 = vld [vmem:[%s2 + $0x258] sm:$0xff]
    %v1026 = vld [vmem:[%s2 + $0x260] sm:$0xff]
    %v1027 = vld [vmem:[%s2 + $0x268] sm:$0xff]
    %v1028 = vld [vmem:[%s2 + $0x270] sm:$0xff]
    %v1029 = vld [vmem:[%s2 + $0x278] sm:$0xff]
    %v1030 = vld [vmem:[%s2 + $0x280] sm:$0xff]
    %v1031 = vld [vmem:[%s2 + $0x288] sm:$0xff]
    %v1032 = vld [vmem:[%s2 + $0x290] sm:$0xff]
    %v1033 = vld [vmem:[%s2 + $0x298] sm:$0xff]
    %v1034 = vld [vmem:[%s2 + $0x2a0] sm:$0xff]
    %v1035 = vld [vmem:[%s2 + $0x2a8] sm:$0xff]
    %v1036 = vld [vmem:[%s2 + $0x2b0] sm:$0xff]
    %v1037 = vld [vmem:[%s2 + $0x2b8] sm:$0xff]
    %v1038 = vld [vmem:[%s2 + $0x2c0] sm:$0xff]
    %v1039 = vld [vmem:[%s2 + $0x2c8] sm:$0xff]
    %v1040 = vld [vmem:[%s2 + $0x2d0] sm:$0xff]
    %v1041 = vld [vmem:[%s2 + $0x2d8] sm:$0xff]
    %v1042 = vld [vmem:[%s2 + $0x2e0] sm:$0xff]
    %v1043 = vld [vmem:[%s2 + $0x2e8] sm:$0xff]
    %v1044 = vld [vmem:[%s2 + $0x2f0] sm:$0xff]
    %v1045 = vld [vmem:[%s2 + $0x2f8] sm:$0xff]
    %v1046 = vld [vmem:[%s2 + $0x300] sm:$0xff]
    %v1047 = vld [vmem:[%s2 + $0x308] sm:$0xff]
    %v1048 = vld [vmem:[%s2 + $0x310] sm:$0xff]
    %v1049 = vld [vmem:[%s2 + $0x318] sm:$0xff]
    %v1050 = vld [vmem:[%s2 + $0x320] sm:$0xff]
    %v1051 = vld [vmem:[%s2 + $0x328] sm:$0xff]
    %v1052 = vld [vmem:[%s2 + $0x330] sm:$0xff]
    %v1053 = vld [vmem:[%s2 + $0x338] sm:$0xff]
    %v1054 = vld [vmem:[%s2 + $0x340] sm:$0xff]
    %v1055 = vld [vmem:[%s2 + $0x348] sm:$0xff]
    %v1056 = vld [vmem:[%s2 + $0x350] sm:$0xff]
    %v1057 = vld [vmem:[%s2 + $0x358] sm:$0xff]
    %v1058 = vld [vmem:[%s2 + $0x360] sm:$0xff]
    %v1059 = vld [vmem:[%s2 + $0x368] sm:$0xff]
    %v1060 = vld [vmem:[%s2 + $0x370] sm:$0xff]
    %v1061 = vld [vmem:[%s2 + $0x378] sm:$0xff]
    %v1062 = vld [vmem:[%s2 + $0x380] sm:$0xff]
    %v1063 = vld [vmem:[%s2 + $0x388] sm:$0xff]
    %v1064 = vld [vmem:[%s2 + $0x390] sm:$0xff]
    %v1065 = vld [vmem:[%s2 + $0x398] sm:$0xff]
    %v1066 = vld [vmem:[%s2 + $0x3a0] sm:$0xff]
    %v1067 = vld [vmem:[%s2 + $0x3a8] sm:$0xff]
    %v1068 = vld [vmem:[%s2 + $0x3b0] sm:$0xff]
    %v1069 = vld [vmem:[%s2 + $0x3b8] sm:$0xff]
    %v1070 = vld [vmem:[%s2 + $0x3c0] sm:$0xff]
    %v1071 = vld [vmem:[%s2 + $0x3c8] sm:$0xff]
    %v1072 = vld [vmem:[%s2 + $0x3d0] sm:$0xff]
    %v1073 = vld [vmem:[%s2 + $0x3d8] sm:$0xff]
    %v1074 = vld [vmem:[%s2 + $0x3e0] sm:$0xff]
    %v1075 = vld [vmem:[%s2 + $0x3e8] sm:$0xff]
    %v1076 = vld [vmem:[%s2 + $0x3f0] sm:$0xff]
    %v1077 = vld [vmem:[%s2 + $0x3f8] sm:$0xff]
    %v1078 = vld [vmem:[%s2 + $0x400] sm:$0xff]
    %v1079 = vld [vmem:[%s2 + $0x408] sm:$0xff]
    %v1080 = vld [vmem:[%s2 + $0x410] sm:$0xff]
    %v1081 = vld [vmem:[%s2 + $0x418] sm:$0xff]
    %v1082 = vld [vmem:[%s2 + $0x420] sm:$0xff]
    %v1083 = vld [vmem:[%s2 + $0x428] sm:$0xff]
    %v1084 = vld [vmem:[%s2 + $0x430] sm:$0xff]
    %v1085 = vld [vmem:[%s2 + $0x438] sm:$0xff]
    %v1086 = vld [vmem:[%s2 + $0x440] sm:$0xff]
    %v1087 = vld [vmem:[%s2 + $0x448] sm:$0xff]
    %v1088 = vld [vmem:[%s2 + $0x450] sm:$0xff]
    %v1089 = vld [vmem:[%s2 + $0x458] sm:$0xff]
    %v1090 = vld [vmem:[%s2 + $0x460] sm:$0xff]
    %v1091 = vld [vmem:[%s2 + $0x468] sm:$0xff]
    %v1092 = vld [vmem:[%s2 + $0x470] sm:$0xff]
    %v1093 = vld [vmem:[%s2 + $0x478] sm:$0xff]
    %v1094 = vld [vmem:[%s2 + $0x480] sm:$0xff]
    %v1095 = vld [vmem:[%s2 + $0x488] sm:$0xff]
    %v1096 = vld [vmem:[%s2 + $0x490] sm:$0xff]
    %v1097 = vld [vmem:[%s2 + $0x498] sm:$0xff]
    %v1098 = vld [vmem:[%s2 + $0x4a0] sm:$0xff]
    %v1099 = vld [vmem:[%s2 + $0x4a8] sm:$0xff]
    %v1100 = vld [vmem:[%s2 + $0x4b0] sm:$0xff]
    %v1101 = vld [vmem:[%s2 + $0x4b8] sm:$0xff]
    %v1102 = vld [vmem:[%s2 + $0x4c0] sm:$0xff]
    %v1103 = vld [vmem:[%s2 + $0x4c8] sm:$0xff]
    %v1104 = vld [vmem:[%s2 + $0x4d0] sm:$0xff]
    %v1105 = vld [vmem:[%s2 + $0x4d8] sm:$0xff]
    %v1106 = vld [vmem:[%s2 + $0x4e0] sm:$0xff]
    %v1107 = vld [vmem:[%s2 + $0x4e8] sm:$0xff]
    %v1108 = vld [vmem:[%s2 + $0x4f0] sm:$0xff]
    %v1109 = vld [vmem:[%s2 + $0x4f8] sm:$0xff]
    %v1110 = vld [vmem:[%s2 + $0x500] sm:$0xff]
    %v1111 = vld [vmem:[%s2 + $0x508] sm:$0xff]
    %v1112 = vld [vmem:[%s2 + $0x510] sm:$0xff]
    %v1113 = vld [vmem:[%s2 + $0x518] sm:$0xff]
    %v1114 = vld [vmem:[%s2 + $0x520] sm:$0xff]
    %v1115 = vld [vmem:[%s2 + $0x528] sm:$0xff]
    %v1116 = vld [vmem:[%s2 + $0x530] sm:$0xff]
    %v1117 = vld [vmem:[%s2 + $0x538] sm:$0xff]
    %v1118 = vld [vmem:[%s2 + $0x540] sm:$0xff]
    %v1119 = vld [vmem:[%s2 + $0x548] sm:$0xff]
    %v1120 = vld [vmem:[%s2 + $0x550] sm:$0xff]
    %v1121 = vld [vmem:[%s2 + $0x558] sm:$0xff]
    %v1122 = vld [vmem:[%s2 + $0x560] sm:$0xff]
    %v1123 = vld [vmem:[%s2 + $0x568] sm:$0xff]
    %v1124 = vld [vmem:[%s2 + $0x570] sm:$0xff]
    %v1125 = vld [vmem:[%s2 + $0x578] sm:$0xff]
    %v1126 = vld [vmem:[%s2 + $0x580] sm:$0xff]
    %v1127 = vld [vmem:[%s2 + $0x588] sm:$0xff]
    %v1128 = vld [vmem:[%s2 + $0x590] sm:$0xff]
    %v1129 = vld [vmem:[%s2 + $0x598] sm:$0xff]
    %v1130 = vld [vmem:[%s2 + $0x5a0] sm:$0xff]
    %v1131 = vld [vmem:[%s2 + $0x5a8] sm:$0xff]
    %v1132 = vld [vmem:[%s2 + $0x5b0] sm:$0xff]
    %v1133 = vld [vmem:[%s2 + $0x5b8] sm:$0xff]
    %v1134 = vld [vmem:[%s2 + $0x5c0] sm:$0xff]
    %v1135 = vld [vmem:[%s2 + $0x5c8] sm:$0xff]
    %v1136 = vld [vmem:[%s2 + $0x5d0] sm:$0xff]
    %v1137 = vld [vmem:[%s2 + $0x5d8] sm:$0xff]
    %v1138 = vld [vmem:[%s2 + $0x5e0] sm:$0xff]
    %v1139 = vld [vmem:[%s2 + $0x5e8] sm:$0xff]
    %v1140 = vld [vmem:[%s2 + $0x5f0] sm:$0xff]
    %v1141 = vld [vmem:[%s2 + $0x5f8] sm:$0xff]
    %1143 = vset.pattern.permute.xlu0 0
    %1144 = vperm.xlu0 %1143, %v950
    %v1145 = vpop.permute.xlu0 %1144
    %1148 = vset.pattern.permute.xlu0 0
    %1149 = vperm.xlu0 %1148, %v951
    %v1150 = vpop.permute.xlu0 %1149
    %1153 = vset.pattern.permute.xlu0 0
    %1154 = vperm.xlu0 %1153, %v952
    %v1155 = vpop.permute.xlu0 %1154
    %1158 = vset.pattern.permute.xlu0 0
    %1159 = vperm.xlu0 %1158, %v953
    %v1160 = vpop.permute.xlu0 %1159
    %1163 = vset.pattern.permute.xlu0 0
    %1164 = vperm.xlu0 %1163, %v954
    %v1165 = vpop.permute.xlu0 %1164
    %1168 = vset.pattern.permute.xlu0 0
    %1169 = vperm.xlu0 %1168, %v955
    %v1170 = vpop.permute.xlu0 %1169
    %1173 = vset.pattern.permute.xlu0 0
    %1174 = vperm.xlu0 %1173, %v956
    %v1175 = vpop.permute.xlu0 %1174
    %1178 = vset.pattern.permute.xlu0 0
    %1179 = vperm.xlu0 %1178, %v957
    %v1180 = vpop.permute.xlu0 %1179
    %1183 = vset.pattern.permute.xlu0 0
    %1184 = vperm.xlu0 %1183, %v958
    %v1185 = vpop.permute.xlu0 %1184
    %1188 = vset.pattern.permute.xlu0 0
    %1189 = vperm.xlu0 %1188, %v959
    %v1190 = vpop.permute.xlu0 %1189
    %1193 = vset.pattern.permute.xlu0 0
    %1194 = vperm.xlu0 %1193, %v960
    %v1195 = vpop.permute.xlu0 %1194
    %1198 = vset.pattern.permute.xlu0 0
    %1199 = vperm.xlu0 %1198, %v961
    %v1200 = vpop.permute.xlu0 %1199
    %1203 = vset.pattern.permute.xlu0 0
    %1204 = vperm.xlu0 %1203, %v962
    %v1205 = vpop.permute.xlu0 %1204
    %1208 = vset.pattern.permute.xlu0 0
    %1209 = vperm.xlu0 %1208, %v963
    %v1210 = vpop.permute.xlu0 %1209
    %1213 = vset.pattern.permute.xlu0 0
    %1214 = vperm.xlu0 %1213, %v964
    %v1215 = vpop.permute.xlu0 %1214
    %1218 = vset.pattern.permute.xlu0 0
    %1219 = vperm.xlu0 %1218, %v965
    %v1220 = vpop.permute.xlu0 %1219
    %1223 = vset.pattern.permute.xlu0 0
    %1224 = vperm.xlu0 %1223, %v966
    %v1225 = vpop.permute.xlu0 %1224
    %1228 = vset.pattern.permute.xlu0 0
    %1229 = vperm.xlu0 %1228, %v967
    %v1230 = vpop.permute.xlu0 %1229
    %1233 = vset.pattern.permute.xlu0 0
    %1234 = vperm.xlu0 %1233, %v968
    %v1235 = vpop.permute.xlu0 %1234
    %1238 = vset.pattern.permute.xlu0 0
    %1239 = vperm.xlu0 %1238, %v969
    %v1240 = vpop.permute.xlu0 %1239
    %1243 = vset.pattern.permute.xlu0 0
    %1244 = vperm.xlu0 %1243, %v970
    %v1245 = vpop.permute.xlu0 %1244
    %1248 = vset.pattern.permute.xlu0 0
    %1249 = vperm.xlu0 %1248, %v971
    %v1250 = vpop.permute.xlu0 %1249
    %1253 = vset.pattern.permute.xlu0 0
    %1254 = vperm.xlu0 %1253, %v972
    %v1255 = vpop.permute.xlu0 %1254
    %1258 = vset.pattern.permute.xlu0 0
    %1259 = vperm.xlu0 %1258, %v973
    %v1260 = vpop.permute.xlu0 %1259
    %1263 = vset.pattern.permute.xlu0 0
    %1264 = vperm.xlu0 %1263, %v974
    %v1265 = vpop.permute.xlu0 %1264
    %1268 = vset.pattern.permute.xlu0 0
    %1269 = vperm.xlu0 %1268, %v975
    %v1270 = vpop.permute.xlu0 %1269
    %1273 = vset.pattern.permute.xlu0 0
    %1274 = vperm.xlu0 %1273, %v976
    %v1275 = vpop.permute.xlu0 %1274
    %1278 = vset.pattern.permute.xlu0 0
    %1279 = vperm.xlu0 %1278, %v977
    %v1280 = vpop.permute.xlu0 %1279
    %1283 = vset.pattern.permute.xlu0 0
    %1284 = vperm.xlu0 %1283, %v978
    %v1285 = vpop.permute.xlu0 %1284
    %1288 = vset.pattern.permute.xlu0 0
    %1289 = vperm.xlu0 %1288, %v979
    %v1290 = vpop.permute.xlu0 %1289
    %1293 = vset.pattern.permute.xlu0 0
    %1294 = vperm.xlu0 %1293, %v980
    %v1295 = vpop.permute.xlu0 %1294
    %1298 = vset.pattern.permute.xlu0 0
    %1299 = vperm.xlu0 %1298, %v981
    %v1300 = vpop.permute.xlu0 %1299
    %1303 = vset.pattern.permute.xlu0 0
    %1304 = vperm.xlu0 %1303, %v982
    %v1305 = vpop.permute.xlu0 %1304
    %1308 = vset.pattern.permute.xlu0 0
    %1309 = vperm.xlu0 %1308, %v983
    %v1310 = vpop.permute.xlu0 %1309
    %1313 = vset.pattern.permute.xlu0 0
    %1314 = vperm.xlu0 %1313, %v984
    %v1315 = vpop.permute.xlu0 %1314
    %1318 = vset.pattern.permute.xlu0 0
    %1319 = vperm.xlu0 %1318, %v985
    %v1320 = vpop.permute.xlu0 %1319
    %1323 = vset.pattern.permute.xlu0 0
    %1324 = vperm.xlu0 %1323, %v986
    %v1325 = vpop.permute.xlu0 %1324
    %1328 = vset.pattern.permute.xlu0 0
    %1329 = vperm.xlu0 %1328, %v987
    %v1330 = vpop.permute.xlu0 %1329
    %1333 = vset.pattern.permute.xlu0 0
    %1334 = vperm.xlu0 %1333, %v988
    %v1335 = vpop.permute.xlu0 %1334
    %1338 = vset.pattern.permute.xlu0 0
    %1339 = vperm.xlu0 %1338, %v989
    %v1340 = vpop.permute.xlu0 %1339
    %1343 = vset.pattern.permute.xlu0 0
    %1344 = vperm.xlu0 %1343, %v990
    %v1345 = vpop.permute.xlu0 %1344
    %1348 = vset.pattern.permute.xlu0 0
    %1349 = vperm.xlu0 %1348, %v991
    %v1350 = vpop.permute.xlu0 %1349
    %1353 = vset.pattern.permute.xlu0 0
    %1354 = vperm.xlu0 %1353, %v992
    %v1355 = vpop.permute.xlu0 %1354
    %1358 = vset.pattern.permute.xlu0 0
    %1359 = vperm.xlu0 %1358, %v993
    %v1360 = vpop.permute.xlu0 %1359
    %1363 = vset.pattern.permute.xlu0 0
    %1364 = vperm.xlu0 %1363, %v994
    %v1365 = vpop.permute.xlu0 %1364
    %1368 = vset.pattern.permute.xlu0 0
    %1369 = vperm.xlu0 %1368, %v995
    %v1370 = vpop.permute.xlu0 %1369
    %1373 = vset.pattern.permute.xlu0 0
    %1374 = vperm.xlu0 %1373, %v996
    %v1375 = vpop.permute.xlu0 %1374
    %1378 = vset.pattern.permute.xlu0 0
    %1379 = vperm.xlu0 %1378, %v997
    %v1380 = vpop.permute.xlu0 %1379
    %1383 = vset.pattern.permute.xlu0 0
    %1384 = vperm.xlu0 %1383, %v998
    %v1385 = vpop.permute.xlu0 %1384
    %1388 = vset.pattern.permute.xlu0 0
    %1389 = vperm.xlu0 %1388, %v999
    %v1390 = vpop.permute.xlu0 %1389
    %1393 = vset.pattern.permute.xlu0 0
    %1394 = vperm.xlu0 %1393, %v1000
    %v1395 = vpop.permute.xlu0 %1394
    %1398 = vset.pattern.permute.xlu0 0
    %1399 = vperm.xlu0 %1398, %v1001
    %v1400 = vpop.permute.xlu0 %1399
    %1403 = vset.pattern.permute.xlu0 0
    %1404 = vperm.xlu0 %1403, %v1002
    %v1405 = vpop.permute.xlu0 %1404
    %1408 = vset.pattern.permute.xlu0 0
    %1409 = vperm.xlu0 %1408, %v1003
    %v1410 = vpop.permute.xlu0 %1409
    %1413 = vset.pattern.permute.xlu0 0
    %1414 = vperm.xlu0 %1413, %v1004
    %v1415 = vpop.permute.xlu0 %1414
    %1418 = vset.pattern.permute.xlu0 0
    %1419 = vperm.xlu0 %1418, %v1005
    %v1420 = vpop.permute.xlu0 %1419
    %1423 = vset.pattern.permute.xlu0 0
    %1424 = vperm.xlu0 %1423, %v1006
    %v1425 = vpop.permute.xlu0 %1424
    %1428 = vset.pattern.permute.xlu0 0
    %1429 = vperm.xlu0 %1428, %v1007
    %v1430 = vpop.permute.xlu0 %1429
    %1433 = vset.pattern.permute.xlu0 0
    %1434 = vperm.xlu0 %1433, %v1008
    %v1435 = vpop.permute.xlu0 %1434
    %1438 = vset.pattern.permute.xlu0 0
    %1439 = vperm.xlu0 %1438, %v1009
    %v1440 = vpop.permute.xlu0 %1439
    %1443 = vset.pattern.permute.xlu0 0
    %1444 = vperm.xlu0 %1443, %v1010
    %v1445 = vpop.permute.xlu0 %1444
    %1448 = vset.pattern.permute.xlu0 0
    %1449 = vperm.xlu0 %1448, %v1011
    %v1450 = vpop.permute.xlu0 %1449
    %1453 = vset.pattern.permute.xlu0 0
    %1454 = vperm.xlu0 %1453, %v1012
    %v1455 = vpop.permute.xlu0 %1454
    %1458 = vset.pattern.permute.xlu0 0
    %1459 = vperm.xlu0 %1458, %v1013
    %v1460 = vpop.permute.xlu0 %1459
    %1463 = vset.pattern.permute.xlu0 0
    %1464 = vperm.xlu0 %1463, %v1014
    %v1465 = vpop.permute.xlu0 %1464
    %1468 = vset.pattern.permute.xlu0 0
    %1469 = vperm.xlu0 %1468, %v1015
    %v1470 = vpop.permute.xlu0 %1469
    %1473 = vset.pattern.permute.xlu0 0
    %1474 = vperm.xlu0 %1473, %v1016
    %v1475 = vpop.permute.xlu0 %1474
    %1478 = vset.pattern.permute.xlu0 0
    %1479 = vperm.xlu0 %1478, %v1017
    %v1480 = vpop.permute.xlu0 %1479
    %1483 = vset.pattern.permute.xlu0 0
    %1484 = vperm.xlu0 %1483, %v1018
    %v1485 = vpop.permute.xlu0 %1484
    %1488 = vset.pattern.permute.xlu0 0
    %1489 = vperm.xlu0 %1488, %v1019
    %v1490 = vpop.permute.xlu0 %1489
    %1493 = vset.pattern.permute.xlu0 0
    %1494 = vperm.xlu0 %1493, %v1020
    %v1495 = vpop.permute.xlu0 %1494
    %1498 = vset.pattern.permute.xlu0 0
    %1499 = vperm.xlu0 %1498, %v1021
    %v1500 = vpop.permute.xlu0 %1499
    %1503 = vset.pattern.permute.xlu0 0
    %1504 = vperm.xlu0 %1503, %v1022
    %v1505 = vpop.permute.xlu0 %1504
    %1508 = vset.pattern.permute.xlu0 0
    %1509 = vperm.xlu0 %1508, %v1023
    %v1510 = vpop.permute.xlu0 %1509
    %1513 = vset.pattern.permute.xlu0 0
    %1514 = vperm.xlu0 %1513, %v1024
    %v1515 = vpop.permute.xlu0 %1514
    %1518 = vset.pattern.permute.xlu0 0
    %1519 = vperm.xlu0 %1518, %v1025
    %v1520 = vpop.permute.xlu0 %1519
    %1523 = vset.pattern.permute.xlu0 0
    %1524 = vperm.xlu0 %1523, %v1026
    %v1525 = vpop.permute.xlu0 %1524
    %1528 = vset.pattern.permute.xlu0 0
    %1529 = vperm.xlu0 %1528, %v1027
    %v1530 = vpop.permute.xlu0 %1529
    %1533 = vset.pattern.permute.xlu0 0
    %1534 = vperm.xlu0 %1533, %v1028
    %v1535 = vpop.permute.xlu0 %1534
    %1538 = vset.pattern.permute.xlu0 0
    %1539 = vperm.xlu0 %1538, %v1029
    %v1540 = vpop.permute.xlu0 %1539
    %1543 = vset.pattern.permute.xlu0 0
    %1544 = vperm.xlu0 %1543, %v1030
    %v1545 = vpop.permute.xlu0 %1544
    %1548 = vset.pattern.permute.xlu0 0
    %1549 = vperm.xlu0 %1548, %v1031
    %v1550 = vpop.permute.xlu0 %1549
    %1553 = vset.pattern.permute.xlu0 0
    %1554 = vperm.xlu0 %1553, %v1032
    %v1555 = vpop.permute.xlu0 %1554
    %1558 = vset.pattern.permute.xlu0 0
    %1559 = vperm.xlu0 %1558, %v1033
    %v1560 = vpop.permute.xlu0 %1559
    %1563 = vset.pattern.permute.xlu0 0
    %1564 = vperm.xlu0 %1563, %v1034
    %v1565 = vpop.permute.xlu0 %1564
    %1568 = vset.pattern.permute.xlu0 0
    %1569 = vperm.xlu0 %1568, %v1035
    %v1570 = vpop.permute.xlu0 %1569
    %1573 = vset.pattern.permute.xlu0 0
    %1574 = vperm.xlu0 %1573, %v1036
    %v1575 = vpop.permute.xlu0 %1574
    %1578 = vset.pattern.permute.xlu0 0
    %1579 = vperm.xlu0 %1578, %v1037
    %v1580 = vpop.permute.xlu0 %1579
    %1583 = vset.pattern.permute.xlu0 0
    %1584 = vperm.xlu0 %1583, %v1038
    %v1585 = vpop.permute.xlu0 %1584
    %1588 = vset.pattern.permute.xlu0 0
    %1589 = vperm.xlu0 %1588, %v1039
    %v1590 = vpop.permute.xlu0 %1589
    %1593 = vset.pattern.permute.xlu0 0
    %1594 = vperm.xlu0 %1593, %v1040
    %v1595 = vpop.permute.xlu0 %1594
    %1598 = vset.pattern.permute.xlu0 0
    %1599 = vperm.xlu0 %1598, %v1041
    %v1600 = vpop.permute.xlu0 %1599
    %1603 = vset.pattern.permute.xlu0 0
    %1604 = vperm.xlu0 %1603, %v1042
    %v1605 = vpop.permute.xlu0 %1604
    %1608 = vset.pattern.permute.xlu0 0
    %1609 = vperm.xlu0 %1608, %v1043
    %v1610 = vpop.permute.xlu0 %1609
    %1613 = vset.pattern.permute.xlu0 0
    %1614 = vperm.xlu0 %1613, %v1044
    %v1615 = vpop.permute.xlu0 %1614
    %1618 = vset.pattern.permute.xlu0 0
    %1619 = vperm.xlu0 %1618, %v1045
    %v1620 = vpop.permute.xlu0 %1619
    %1623 = vset.pattern.permute.xlu0 0
    %1624 = vperm.xlu0 %1623, %v1046
    %v1625 = vpop.permute.xlu0 %1624
    %1628 = vset.pattern.permute.xlu0 0
    %1629 = vperm.xlu0 %1628, %v1047
    %v1630 = vpop.permute.xlu0 %1629
    %1633 = vset.pattern.permute.xlu0 0
    %1634 = vperm.xlu0 %1633, %v1048
    %v1635 = vpop.permute.xlu0 %1634
    %1638 = vset.pattern.permute.xlu0 0
    %1639 = vperm.xlu0 %1638, %v1049
    %v1640 = vpop.permute.xlu0 %1639
    %1643 = vset.pattern.permute.xlu0 0
    %1644 = vperm.xlu0 %1643, %v1050
    %v1645 = vpop.permute.xlu0 %1644
    %1648 = vset.pattern.permute.xlu0 0
    %1649 = vperm.xlu0 %1648, %v1051
    %v1650 = vpop.permute.xlu0 %1649
    %1653 = vset.pattern.permute.xlu0 0
    %1654 = vperm.xlu0 %1653, %v1052
    %v1655 = vpop.permute.xlu0 %1654
    %1658 = vset.pattern.permute.xlu0 0
    %1659 = vperm.xlu0 %1658, %v1053
    %v1660 = vpop.permute.xlu0 %1659
    %1663 = vset.pattern.permute.xlu0 0
    %1664 = vperm.xlu0 %1663, %v1054
    %v1665 = vpop.permute.xlu0 %1664
    %1668 = vset.pattern.permute.xlu0 0
    %1669 = vperm.xlu0 %1668, %v1055
    %v1670 = vpop.permute.xlu0 %1669
    %1673 = vset.pattern.permute.xlu0 0
    %1674 = vperm.xlu0 %1673, %v1056
    %v1675 = vpop.permute.xlu0 %1674
    %1678 = vset.pattern.permute.xlu0 0
    %1679 = vperm.xlu0 %1678, %v1057
    %v1680 = vpop.permute.xlu0 %1679
    %1683 = vset.pattern.permute.xlu0 0
    %1684 = vperm.xlu0 %1683, %v1058
    %v1685 = vpop.permute.xlu0 %1684
    %1688 = vset.pattern.permute.xlu0 0
    %1689 = vperm.xlu0 %1688, %v1059
    %v1690 = vpop.permute.xlu0 %1689
    %1693 = vset.pattern.permute.xlu0 0
    %1694 = vperm.xlu0 %1693, %v1060
    %v1695 = vpop.permute.xlu0 %1694
    %1698 = vset.pattern.permute.xlu0 0
    %1699 = vperm.xlu0 %1698, %v1061
    %v1700 = vpop.permute.xlu0 %1699
    %1703 = vset.pattern.permute.xlu0 0
    %1704 = vperm.xlu0 %1703, %v1062
    %v1705 = vpop.permute.xlu0 %1704
    %1708 = vset.pattern.permute.xlu0 0
    %1709 = vperm.xlu0 %1708, %v1063
    %v1710 = vpop.permute.xlu0 %1709
    %1713 = vset.pattern.permute.xlu0 0
    %1714 = vperm.xlu0 %1713, %v1064
    %v1715 = vpop.permute.xlu0 %1714
    %1718 = vset.pattern.permute.xlu0 0
    %1719 = vperm.xlu0 %1718, %v1065
    %v1720 = vpop.permute.xlu0 %1719
    %1723 = vset.pattern.permute.xlu0 0
    %1724 = vperm.xlu0 %1723, %v1066
    %v1725 = vpop.permute.xlu0 %1724
    %1728 = vset.pattern.permute.xlu0 0
    %1729 = vperm.xlu0 %1728, %v1067
    %v1730 = vpop.permute.xlu0 %1729
    %1733 = vset.pattern.permute.xlu0 0
    %1734 = vperm.xlu0 %1733, %v1068
    %v1735 = vpop.permute.xlu0 %1734
    %1738 = vset.pattern.permute.xlu0 0
    %1739 = vperm.xlu0 %1738, %v1069
    %v1740 = vpop.permute.xlu0 %1739
    %1743 = vset.pattern.permute.xlu0 0
    %1744 = vperm.xlu0 %1743, %v1070
    %v1745 = vpop.permute.xlu0 %1744
    %1748 = vset.pattern.permute.xlu0 0
    %1749 = vperm.xlu0 %1748, %v1071
    %v1750 = vpop.permute.xlu0 %1749
    %1753 = vset.pattern.permute.xlu0 0
    %1754 = vperm.xlu0 %1753, %v1072
    %v1755 = vpop.permute.xlu0 %1754
    %1758 = vset.pattern.permute.xlu0 0
    %1759 = vperm.xlu0 %1758, %v1073
    %v1760 = vpop.permute.xlu0 %1759
    %1763 = vset.pattern.permute.xlu0 0
    %1764 = vperm.xlu0 %1763, %v1074
    %v1765 = vpop.permute.xlu0 %1764
    %1768 = vset.pattern.permute.xlu0 0
    %1769 = vperm.xlu0 %1768, %v1075
    %v1770 = vpop.permute.xlu0 %1769
    %1773 = vset.pattern.permute.xlu0 0
    %1774 = vperm.xlu0 %1773, %v1076
    %v1775 = vpop.permute.xlu0 %1774
    %1778 = vset.pattern.permute.xlu0 0
    %1779 = vperm.xlu0 %1778, %v1077
    %v1780 = vpop.permute.xlu0 %1779
    %1783 = vset.pattern.permute.xlu0 0
    %1784 = vperm.xlu0 %1783, %v1078
    %v1785 = vpop.permute.xlu0 %1784
    %1788 = vset.pattern.permute.xlu0 0
    %1789 = vperm.xlu0 %1788, %v1079
    %v1790 = vpop.permute.xlu0 %1789
    %1793 = vset.pattern.permute.xlu0 0
    %1794 = vperm.xlu0 %1793, %v1080
    %v1795 = vpop.permute.xlu0 %1794
    %1798 = vset.pattern.permute.xlu0 0
    %1799 = vperm.xlu0 %1798, %v1081
    %v1800 = vpop.permute.xlu0 %1799
    %1803 = vset.pattern.permute.xlu0 0
    %1804 = vperm.xlu0 %1803, %v1082
    %v1805 = vpop.permute.xlu0 %1804
    %1808 = vset.pattern.permute.xlu0 0
    %1809 = vperm.xlu0 %1808, %v1083
    %v1810 = vpop.permute.xlu0 %1809
    %1813 = vset.pattern.permute.xlu0 0
    %1814 = vperm.xlu0 %1813, %v1084
    %v1815 = vpop.permute.xlu0 %1814
    %1818 = vset.pattern.permute.xlu0 0
    %1819 = vperm.xlu0 %1818, %v1085
    %v1820 = vpop.permute.xlu0 %1819
    %1823 = vset.pattern.permute.xlu0 0
    %1824 = vperm.xlu0 %1823, %v1086
    %v1825 = vpop.permute.xlu0 %1824
    %1828 = vset.pattern.permute.xlu0 0
    %1829 = vperm.xlu0 %1828, %v1087
    %v1830 = vpop.permute.xlu0 %1829
    %1833 = vset.pattern.permute.xlu0 0
    %1834 = vperm.xlu0 %1833, %v1088
    %v1835 = vpop.permute.xlu0 %1834
    %1838 = vset.pattern.permute.xlu0 0
    %1839 = vperm.xlu0 %1838, %v1089
    %v1840 = vpop.permute.xlu0 %1839
    %1843 = vset.pattern.permute.xlu0 0
    %1844 = vperm.xlu0 %1843, %v1090
    %v1845 = vpop.permute.xlu0 %1844
    %1848 = vset.pattern.permute.xlu0 0
    %1849 = vperm.xlu0 %1848, %v1091
    %v1850 = vpop.permute.xlu0 %1849
    %1853 = vset.pattern.permute.xlu0 0
    %1854 = vperm.xlu0 %1853, %v1092
    %v1855 = vpop.permute.xlu0 %1854
    %1858 = vset.pattern.permute.xlu0 0
    %1859 = vperm.xlu0 %1858, %v1093
    %v1860 = vpop.permute.xlu0 %1859
    %1863 = vset.pattern.permute.xlu0 0
    %1864 = vperm.xlu0 %1863, %v1094
    %v1865 = vpop.permute.xlu0 %1864
    %1868 = vset.pattern.permute.xlu0 0
    %1869 = vperm.xlu0 %1868, %v1095
    %v1870 = vpop.permute.xlu0 %1869
    %1873 = vset.pattern.permute.xlu0 0
    %1874 = vperm.xlu0 %1873, %v1096
    %v1875 = vpop.permute.xlu0 %1874
    %1878 = vset.pattern.permute.xlu0 0
    %1879 = vperm.xlu0 %1878, %v1097
    %v1880 = vpop.permute.xlu0 %1879
    %1883 = vset.pattern.permute.xlu0 0
    %1884 = vperm.xlu0 %1883, %v1098
    %v1885 = vpop.permute.xlu0 %1884
    %1888 = vset.pattern.permute.xlu0 0
    %1889 = vperm.xlu0 %1888, %v1099
    %v1890 = vpop.permute.xlu0 %1889
    %1893 = vset.pattern.permute.xlu0 0
    %1894 = vperm.xlu0 %1893, %v1100
    %v1895 = vpop.permute.xlu0 %1894
    %1898 = vset.pattern.permute.xlu0 0
    %1899 = vperm.xlu0 %1898, %v1101
    %v1900 = vpop.permute.xlu0 %1899
    %1903 = vset.pattern.permute.xlu0 0
    %1904 = vperm.xlu0 %1903, %v1102
    %v1905 = vpop.permute.xlu0 %1904
    %1908 = vset.pattern.permute.xlu0 0
    %1909 = vperm.xlu0 %1908, %v1103
    %v1910 = vpop.permute.xlu0 %1909
    %1913 = vset.pattern.permute.xlu0 0
    %1914 = vperm.xlu0 %1913, %v1104
    %v1915 = vpop.permute.xlu0 %1914
    %1918 = vset.pattern.permute.xlu0 0
    %1919 = vperm.xlu0 %1918, %v1105
    %v1920 = vpop.permute.xlu0 %1919
    %1923 = vset.pattern.permute.xlu0 0
    %1924 = vperm.xlu0 %1923, %v1106
    %v1925 = vpop.permute.xlu0 %1924
    %1928 = vset.pattern.permute.xlu0 0
    %1929 = vperm.xlu0 %1928, %v1107
    %v1930 = vpop.permute.xlu0 %1929
    %1933 = vset.pattern.permute.xlu0 0
    %1934 = vperm.xlu0 %1933, %v1108
    %v1935 = vpop.permute.xlu0 %1934
    %1938 = vset.pattern.permute.xlu0 0
    %1939 = vperm.xlu0 %1938, %v1109
    %v1940 = vpop.permute.xlu0 %1939
    %1943 = vset.pattern.permute.xlu0 0
    %1944 = vperm.xlu0 %1943, %v1110
    %v1945 = vpop.permute.xlu0 %1944
    %1948 = vset.pattern.permute.xlu0 0
    %1949 = vperm.xlu0 %1948, %v1111
    %v1950 = vpop.permute.xlu0 %1949
    %1953 = vset.pattern.permute.xlu0 0
    %1954 = vperm.xlu0 %1953, %v1112
    %v1955 = vpop.permute.xlu0 %1954
    %1958 = vset.pattern.permute.xlu0 0
    %1959 = vperm.xlu0 %1958, %v1113
    %v1960 = vpop.permute.xlu0 %1959
    %1963 = vset.pattern.permute.xlu0 0
    %1964 = vperm.xlu0 %1963, %v1114
    %v1965 = vpop.permute.xlu0 %1964
    %1968 = vset.pattern.permute.xlu0 0
    %1969 = vperm.xlu0 %1968, %v1115
    %v1970 = vpop.permute.xlu0 %1969
    %1973 = vset.pattern.permute.xlu0 0
    %1974 = vperm.xlu0 %1973, %v1116
    %v1975 = vpop.permute.xlu0 %1974
    %1978 = vset.pattern.permute.xlu0 0
    %1979 = vperm.xlu0 %1978, %v1117
    %v1980 = vpop.permute.xlu0 %1979
    %1983 = vset.pattern.permute.xlu0 0
    %1984 = vperm.xlu0 %1983, %v1118
    %v1985 = vpop.permute.xlu0 %1984
    %1988 = vset.pattern.permute.xlu0 0
    %1989 = vperm.xlu0 %1988, %v1119
    %v1990 = vpop.permute.xlu0 %1989
    %1993 = vset.pattern.permute.xlu0 0
    %1994 = vperm.xlu0 %1993, %v1120
    %v1995 = vpop.permute.xlu0 %1994
    %1998 = vset.pattern.permute.xlu0 0
    %1999 = vperm.xlu0 %1998, %v1121
    %v2000 = vpop.permute.xlu0 %1999
    %2003 = vset.pattern.permute.xlu0 0
    %2004 = vperm.xlu0 %2003, %v1122
    %v2005 = vpop.permute.xlu0 %2004
    %2008 = vset.pattern.permute.xlu0 0
    %2009 = vperm.xlu0 %2008, %v1123
    %v2010 = vpop.permute.xlu0 %2009
    %2013 = vset.pattern.permute.xlu0 0
    %2014 = vperm.xlu0 %2013, %v1124
    %v2015 = vpop.permute.xlu0 %2014
    %2018 = vset.pattern.permute.xlu0 0
    %2019 = vperm.xlu0 %2018, %v1125
    %v2020 = vpop.permute.xlu0 %2019
    %2023 = vset.pattern.permute.xlu0 0
    %2024 = vperm.xlu0 %2023, %v1126
    %v2025 = vpop.permute.xlu0 %2024
    %2028 = vset.pattern.permute.xlu0 0
    %2029 = vperm.xlu0 %2028, %v1127
    %v2030 = vpop.permute.xlu0 %2029
    %2033 = vset.pattern.permute.xlu0 0
    %2034 = vperm.xlu0 %2033, %v1128
    %v2035 = vpop.permute.xlu0 %2034
    %2038 = vset.pattern.permute.xlu0 0
    %2039 = vperm.xlu0 %2038, %v1129
    %v2040 = vpop.permute.xlu0 %2039
    %2043 = vset.pattern.permute.xlu0 0
    %2044 = vperm.xlu0 %2043, %v1130
    %v2045 = vpop.permute.xlu0 %2044
    %2048 = vset.pattern.permute.xlu0 0
    %2049 = vperm.xlu0 %2048, %v1131
    %v2050 = vpop.permute.xlu0 %2049
    %2053 = vset.pattern.permute.xlu0 0
    %2054 = vperm.xlu0 %2053, %v1132
    %v2055 = vpop.permute.xlu0 %2054
    %2058 = vset.pattern.permute.xlu0 0
    %2059 = vperm.xlu0 %2058, %v1133
    %v2060 = vpop.permute.xlu0 %2059
    %2063 = vset.pattern.permute.xlu0 0
    %2064 = vperm.xlu0 %2063, %v1134
    %v2065 = vpop.permute.xlu0 %2064
    %2068 = vset.pattern.permute.xlu0 0
    %2069 = vperm.xlu0 %2068, %v1135
    %v2070 = vpop.permute.xlu0 %2069
    %2073 = vset.pattern.permute.xlu0 0
    %2074 = vperm.xlu0 %2073, %v1136
    %v2075 = vpop.permute.xlu0 %2074
    %2078 = vset.pattern.permute.xlu0 0
    %2079 = vperm.xlu0 %2078, %v1137
    %v2080 = vpop.permute.xlu0 %2079
    %2083 = vset.pattern.permute.xlu0 0
    %2084 = vperm.xlu0 %2083, %v1138
    %v2085 = vpop.permute.xlu0 %2084
    %2088 = vset.pattern.permute.xlu0 0
    %2089 = vperm.xlu0 %2088, %v1139
    %v2090 = vpop.permute.xlu0 %2089
    %2093 = vset.pattern.permute.xlu0 0
    %2094 = vperm.xlu0 %2093, %v1140
    %v2095 = vpop.permute.xlu0 %2094
    %2098 = vset.pattern.permute.xlu0 0
    %2099 = vperm.xlu0 %2098, %v1141
    %v2100 = vpop.permute.xlu0 %2099
    %vm2102 = vcmask 523264
    %v2104 = vsel %vm2102, %v604, 0
    %v2107 = vsel %vm2102, %v607, 0
    %v2110 = vsel %vm2102, %v610, 0
    %v2113 = vsel %vm2102, %v613, 0
    %v2116 = vsel %vm2102, %v616, 0
    %v2119 = vsel %vm2102, %v619, 0
    %v2122 = vsel %vm2102, %v622, 0
    %v2125 = vsel %vm2102, %v625, 0
    %v2128 = vsel %vm2102, %v628, 0
    %v2131 = vsel %vm2102, %v631, 0
    %v2134 = vsel %vm2102, %v634, 0
    %v2137 = vsel %vm2102, %v637, 0
    %v2140 = vsel %vm2102, %v640, 0
    %v2143 = vsel %vm2102, %v643, 0
    %v2146 = vsel %vm2102, %v646, 0
    %v2149 = vsel %vm2102, %v649, 0
    %v2152 = vsel %vm2102, %v652, 0
    %v2155 = vsel %vm2102, %v655, 0
    %v2158 = vsel %vm2102, %v658, 0
    %v2161 = vsel %vm2102, %v661, 0
    %v2164 = vsel %vm2102, %v664, 0
    %v2167 = vsel %vm2102, %v667, 0
    %v2170 = vsel %vm2102, %v670, 0
    %v2173 = vsel %vm2102, %v673, 0
    %v2176 = vsel %vm2102, %v676, 0
    %v2179 = vsel %vm2102, %v679, 0
    %v2182 = vsel %vm2102, %v682, 0
    %v2185 = vsel %vm2102, %v685, 0
    %v2188 = vsel %vm2102, %v688, 0
    %v2191 = vsel %vm2102, %v691, 0
    %v2194 = vsel %vm2102, %v694, 0
    %v2197 = vsel %vm2102, %v697, 0
    %v2200 = vsel %vm2102, %v700, 0
    %v2203 = vsel %vm2102, %v703, 0
    %v2206 = vsel %vm2102, %v706, 0
    %v2209 = vsel %vm2102, %v709, 0
    %v2212 = vsel %vm2102, %v712, 0
    %v2215 = vsel %vm2102, %v715, 0
    %v2218 = vsel %vm2102, %v718, 0
    %v2221 = vsel %vm2102, %v721, 0
    %v2224 = vsel %vm2102, %v724, 0
    %v2227 = vsel %vm2102, %v727, 0
    %v2230 = vsel %vm2102, %v730, 0
    %v2233 = vsel %vm2102, %v733, 0
    %v2236 = vsel %vm2102, %v736, 0
    %v2239 = vsel %vm2102, %v739, 0
    %v2242 = vsel %vm2102, %v742, 0
    %v2245 = vsel %vm2102, %v745, 0
    %v2248 = vsel %vm2102, %v748, 0
    %v2251 = vsel %vm2102, %v751, 0
    %v2254 = vsel %vm2102, %v754, 0
    %v2257 = vsel %vm2102, %v757, 0
    %v2260 = vsel %vm2102, %v760, 0
    %v2263 = vsel %vm2102, %v763, 0
    %v2266 = vsel %vm2102, %v766, 0
    %v2269 = vsel %vm2102, %v769, 0
    %v2272 = vsel %vm2102, %v772, 0
    %v2275 = vsel %vm2102, %v775, 0
    %v2278 = vsel %vm2102, %v778, 0
    %v2281 = vsel %vm2102, %v781, 0
    %v2284 = vsel %vm2102, %v784, 0
    %v2287 = vsel %vm2102, %v787, 0
    %v2290 = vsel %vm2102, %v790, 0
    %v2293 = vsel %vm2102, %v793, 0
    %v2296 = vsel %vm2102, %v796, 0
    %v2299 = vsel %vm2102, %v799, 0
    %v2302 = vsel %vm2102, %v802, 0
    %v2305 = vsel %vm2102, %v805, 0
    %v2308 = vsel %vm2102, %v808, 0
    %v2311 = vsel %vm2102, %v811, 0
    %v2314 = vsel %vm2102, %v814, 0
    %v2317 = vsel %vm2102, %v817, 0
    %v2320 = vsel %vm2102, %v820, 0
    %v2323 = vsel %vm2102, %v823, 0
    %v2326 = vsel %vm2102, %v826, 0
    %v2329 = vsel %vm2102, %v829, 0
    %v2332 = vsel %vm2102, %v832, 0
    %v2335 = vsel %vm2102, %v835, 0
    %v2338 = vsel %vm2102, %v838, 0
    %v2341 = vsel %vm2102, %v841, 0
    %v2344 = vsel %vm2102, %v844, 0
    %v2347 = vsel %vm2102, %v847, 0
    %v2350 = vsel %vm2102, %v850, 0
    %v2353 = vsel %vm2102, %v853, 0
    %v2356 = vsel %vm2102, %v856, 0
    %v2359 = vsel %vm2102, %v859, 0
    %v2362 = vsel %vm2102, %v862, 0
    %v2365 = vsel %vm2102, %v865, 0
    %v2368 = vsel %vm2102, %v868, 0
    %v2371 = vsel %vm2102, %v871, 0
    %v2374 = vsel %vm2102, %v874, 0
    %v2377 = vsel %vm2102, %v877, 0
    %v2380 = vsel %vm2102, %v880, 0
    %v2383 = vsel %vm2102, %v883, 0
    %v2386 = vsel %vm2102, %v886, 0
    %v2389 = vsel %vm2102, %v889, 0
    %2391 = vmatpush.bf16.msra.mxu0 %v937
    %2392 = vmatpush.bf16.msra.mxu0 %v936
    %2393 = vmatpush.bf16.msra.mxu0 %v935
    %2394 = vmatpush.bf16.msra.mxu0 %v934
    %2395 = vmatpush.bf16.msra.mxu0 %v933
    %2396 = vmatpush.bf16.msra.mxu0 %v932
    %2397 = vmatpush.bf16.msra.mxu0 %v931
    %2398 = vmatpush.bf16.msra.mxu0 %v930
    %2399 = vmatmul.bf16.gmra.mxu0 %v602
    %v2400 = vpop.f32.mrf.mxu0
    %v2401 = vadd.f32 %v1145, %v2400
    %v2402 = vpop.f32.mrf.mxu0
    %v2403 = vadd.f32 %v1150, %v2402
    %2404 = vmatmul.bf16.gmra.mxu0 %v605
    %v2405 = vpop.f32.mrf.mxu0
    %v2406 = vadd.f32 %v1155, %v2405
    %v2407 = vpop.f32.mrf.mxu0
    %v2408 = vadd.f32 %v1160, %v2407
    %2409 = vmatmul.bf16.gmra.mxu0 %v608
    %v2410 = vpop.f32.mrf.mxu0
    %v2411 = vadd.f32 %v1165, %v2410
    %v2412 = vpop.f32.mrf.mxu0
    %v2413 = vadd.f32 %v1170, %v2412
    %2414 = vmatmul.bf16.gmra.mxu0 %v611
    %v2415 = vpop.f32.mrf.mxu0
    %v2416 = vadd.f32 %v1175, %v2415
    %v2417 = vpop.f32.mrf.mxu0
    %v2418 = vadd.f32 %v1180, %v2417
    %2419 = vmatmul.bf16.gmra.mxu0 %v614
    %v2420 = vpop.f32.mrf.mxu0
    %v2421 = vadd.f32 %v1185, %v2420
    %v2422 = vpop.f32.mrf.mxu0
    %v2423 = vadd.f32 %v1190, %v2422
    %2424 = vmatmul.bf16.gmra.mxu0 %v617
    %v2425 = vpop.f32.mrf.mxu0
    %v2426 = vadd.f32 %v1195, %v2425
    %v2427 = vpop.f32.mrf.mxu0
    %v2428 = vadd.f32 %v1200, %v2427
    %2429 = vmatmul.bf16.gmra.mxu0 %v620
    %v2430 = vpop.f32.mrf.mxu0
    %v2431 = vadd.f32 %v1205, %v2430
    %v2432 = vpop.f32.mrf.mxu0
    %v2433 = vadd.f32 %v1210, %v2432
    %2434 = vmatmul.bf16.gmra.mxu0 %v623
    %v2435 = vpop.f32.mrf.mxu0
    %v2436 = vadd.f32 %v1215, %v2435
    %v2437 = vpop.f32.mrf.mxu0
    %v2438 = vadd.f32 %v1220, %v2437
    %2439 = vmatmul.bf16.gmra.mxu0 %v626
    %v2440 = vpop.f32.mrf.mxu0
    %v2441 = vadd.f32 %v1225, %v2440
    %v2442 = vpop.f32.mrf.mxu0
    %v2443 = vadd.f32 %v1230, %v2442
    %2444 = vmatmul.bf16.gmra.mxu0 %v629
    %v2445 = vpop.f32.mrf.mxu0
    %v2446 = vadd.f32 %v1235, %v2445
    %v2447 = vpop.f32.mrf.mxu0
    %v2448 = vadd.f32 %v1240, %v2447
    %2449 = vmatmul.bf16.gmra.mxu0 %v632
    %v2450 = vpop.f32.mrf.mxu0
    %v2451 = vadd.f32 %v1245, %v2450
    %v2452 = vpop.f32.mrf.mxu0
    %v2453 = vadd.f32 %v1250, %v2452
    %2454 = vmatmul.bf16.gmra.mxu0 %v635
    %v2455 = vpop.f32.mrf.mxu0
    %v2456 = vadd.f32 %v1255, %v2455
    %v2457 = vpop.f32.mrf.mxu0
    %v2458 = vadd.f32 %v1260, %v2457
    %2459 = vmatmul.bf16.gmra.mxu0 %v638
    %v2460 = vpop.f32.mrf.mxu0
    %v2461 = vadd.f32 %v1265, %v2460
    %v2462 = vpop.f32.mrf.mxu0
    %v2463 = vadd.f32 %v1270, %v2462
    %2464 = vmatmul.bf16.gmra.mxu0 %v641
    %v2465 = vpop.f32.mrf.mxu0
    %v2466 = vadd.f32 %v1275, %v2465
    %v2467 = vpop.f32.mrf.mxu0
    %v2468 = vadd.f32 %v1280, %v2467
    %2469 = vmatmul.bf16.gmra.mxu0 %v644
    %v2470 = vpop.f32.mrf.mxu0
    %v2471 = vadd.f32 %v1285, %v2470
    %v2472 = vpop.f32.mrf.mxu0
    %v2473 = vadd.f32 %v1290, %v2472
    %2474 = vmatmul.bf16.gmra.mxu0 %v647
    %v2475 = vpop.f32.mrf.mxu0
    %v2476 = vadd.f32 %v1295, %v2475
    %v2477 = vpop.f32.mrf.mxu0
    %v2478 = vadd.f32 %v1300, %v2477
    %2479 = vmatmul.bf16.gmra.mxu0 %v650
    %v2480 = vpop.f32.mrf.mxu0
    %v2481 = vadd.f32 %v1305, %v2480
    %v2482 = vpop.f32.mrf.mxu0
    %v2483 = vadd.f32 %v1310, %v2482
    %2484 = vmatmul.bf16.gmra.mxu0 %v653
    %v2485 = vpop.f32.mrf.mxu0
    %v2486 = vadd.f32 %v1315, %v2485
    %v2487 = vpop.f32.mrf.mxu0
    %v2488 = vadd.f32 %v1320, %v2487
    %2489 = vmatmul.bf16.gmra.mxu0 %v656
    %v2490 = vpop.f32.mrf.mxu0
    %v2491 = vadd.f32 %v1325, %v2490
    %v2492 = vpop.f32.mrf.mxu0
    %v2493 = vadd.f32 %v1330, %v2492
    %2494 = vmatmul.bf16.gmra.mxu0 %v659
    %v2495 = vpop.f32.mrf.mxu0
    %v2496 = vadd.f32 %v1335, %v2495
    %v2497 = vpop.f32.mrf.mxu0
    %v2498 = vadd.f32 %v1340, %v2497
    %2499 = vmatmul.bf16.gmra.mxu0 %v662
    %v2500 = vpop.f32.mrf.mxu0
    %v2501 = vadd.f32 %v1345, %v2500
    %v2502 = vpop.f32.mrf.mxu0
    %v2503 = vadd.f32 %v1350, %v2502
    %2504 = vmatmul.bf16.gmra.mxu0 %v665
    %v2505 = vpop.f32.mrf.mxu0
    %v2506 = vadd.f32 %v1355, %v2505
    %v2507 = vpop.f32.mrf.mxu0
    %v2508 = vadd.f32 %v1360, %v2507
    %2509 = vmatmul.bf16.gmra.mxu0 %v668
    %v2510 = vpop.f32.mrf.mxu0
    %v2511 = vadd.f32 %v1365, %v2510
    %v2512 = vpop.f32.mrf.mxu0
    %v2513 = vadd.f32 %v1370, %v2512
    %2514 = vmatmul.bf16.gmra.mxu0 %v671
    %v2515 = vpop.f32.mrf.mxu0
    %v2516 = vadd.f32 %v1375, %v2515
    %v2517 = vpop.f32.mrf.mxu0
    %v2518 = vadd.f32 %v1380, %v2517
    %2519 = vmatmul.bf16.gmra.mxu0 %v674
    %v2520 = vpop.f32.mrf.mxu0
    %v2521 = vadd.f32 %v1385, %v2520
    %v2522 = vpop.f32.mrf.mxu0
    %v2523 = vadd.f32 %v1390, %v2522
    %2524 = vmatmul.bf16.gmra.mxu0 %v677
    %v2525 = vpop.f32.mrf.mxu0
    %v2526 = vadd.f32 %v1395, %v2525
    %v2527 = vpop.f32.mrf.mxu0
    %v2528 = vadd.f32 %v1400, %v2527
    %2529 = vmatmul.bf16.gmra.mxu0 %v680
    %v2530 = vpop.f32.mrf.mxu0
    %v2531 = vadd.f32 %v1405, %v2530
    %v2532 = vpop.f32.mrf.mxu0
    %v2533 = vadd.f32 %v1410, %v2532
    %2534 = vmatmul.bf16.gmra.mxu0 %v683
    %v2535 = vpop.f32.mrf.mxu0
    %v2536 = vadd.f32 %v1415, %v2535
    %v2537 = vpop.f32.mrf.mxu0
    %v2538 = vadd.f32 %v1420, %v2537
    %2539 = vmatmul.bf16.gmra.mxu0 %v686
    %v2540 = vpop.f32.mrf.mxu0
    %v2541 = vadd.f32 %v1425, %v2540
    %v2542 = vpop.f32.mrf.mxu0
    %v2543 = vadd.f32 %v1430, %v2542
    %2544 = vmatmul.bf16.gmra.mxu0 %v689
    %v2545 = vpop.f32.mrf.mxu0
    %v2546 = vadd.f32 %v1435, %v2545
    %v2547 = vpop.f32.mrf.mxu0
    %v2548 = vadd.f32 %v1440, %v2547
    %2549 = vmatmul.bf16.gmra.mxu0 %v692
    %v2550 = vpop.f32.mrf.mxu0
    %v2551 = vadd.f32 %v1445, %v2550
    %v2552 = vpop.f32.mrf.mxu0
    %v2553 = vadd.f32 %v1450, %v2552
    %2554 = vmatmul.bf16.gmra.mxu0 %v695
    %v2555 = vpop.f32.mrf.mxu0
    %v2556 = vadd.f32 %v1455, %v2555
    %v2557 = vpop.f32.mrf.mxu0
    %v2558 = vadd.f32 %v1460, %v2557
    %2559 = vmatmul.bf16.gmra.mxu0 %v698
    %v2560 = vpop.f32.mrf.mxu0
    %v2561 = vadd.f32 %v1465, %v2560
    %v2562 = vpop.f32.mrf.mxu0
    %v2563 = vadd.f32 %v1470, %v2562
    %2564 = vmatmul.bf16.gmra.mxu0 %v701
    %v2565 = vpop.f32.mrf.mxu0
    %v2566 = vadd.f32 %v1475, %v2565
    %v2567 = vpop.f32.mrf.mxu0
    %v2568 = vadd.f32 %v1480, %v2567
    %2569 = vmatmul.bf16.gmra.mxu0 %v704
    %v2570 = vpop.f32.mrf.mxu0
    %v2571 = vadd.f32 %v1485, %v2570
    %v2572 = vpop.f32.mrf.mxu0
    %v2573 = vadd.f32 %v1490, %v2572
    %2574 = vmatmul.bf16.gmra.mxu0 %v707
    %v2575 = vpop.f32.mrf.mxu0
    %v2576 = vadd.f32 %v1495, %v2575
    %v2577 = vpop.f32.mrf.mxu0
    %v2578 = vadd.f32 %v1500, %v2577
    %2579 = vmatmul.bf16.gmra.mxu0 %v710
    %v2580 = vpop.f32.mrf.mxu0
    %v2581 = vadd.f32 %v1505, %v2580
    %v2582 = vpop.f32.mrf.mxu0
    %v2583 = vadd.f32 %v1510, %v2582
    %2584 = vmatmul.bf16.gmra.mxu0 %v713
    %v2585 = vpop.f32.mrf.mxu0
    %v2586 = vadd.f32 %v1515, %v2585
    %v2587 = vpop.f32.mrf.mxu0
    %v2588 = vadd.f32 %v1520, %v2587
    %2589 = vmatmul.bf16.gmra.mxu0 %v716
    %v2590 = vpop.f32.mrf.mxu0
    %v2591 = vadd.f32 %v1525, %v2590
    %v2592 = vpop.f32.mrf.mxu0
    %v2593 = vadd.f32 %v1530, %v2592
    %2594 = vmatmul.bf16.gmra.mxu0 %v719
    %v2595 = vpop.f32.mrf.mxu0
    %v2596 = vadd.f32 %v1535, %v2595
    %v2597 = vpop.f32.mrf.mxu0
    %v2598 = vadd.f32 %v1540, %v2597
    %2599 = vmatmul.bf16.gmra.mxu0 %v722
    %v2600 = vpop.f32.mrf.mxu0
    %v2601 = vadd.f32 %v1545, %v2600
    %v2602 = vpop.f32.mrf.mxu0
    %v2603 = vadd.f32 %v1550, %v2602
    %2604 = vmatmul.bf16.gmra.mxu0 %v725
    %v2605 = vpop.f32.mrf.mxu0
    %v2606 = vadd.f32 %v1555, %v2605
    %v2607 = vpop.f32.mrf.mxu0
    %v2608 = vadd.f32 %v1560, %v2607
    %2609 = vmatmul.bf16.gmra.mxu0 %v728
    %v2610 = vpop.f32.mrf.mxu0
    %v2611 = vadd.f32 %v1565, %v2610
    %v2612 = vpop.f32.mrf.mxu0
    %v2613 = vadd.f32 %v1570, %v2612
    %2614 = vmatmul.bf16.gmra.mxu0 %v731
    %v2615 = vpop.f32.mrf.mxu0
    %v2616 = vadd.f32 %v1575, %v2615
    %v2617 = vpop.f32.mrf.mxu0
    %v2618 = vadd.f32 %v1580, %v2617
    %2619 = vmatmul.bf16.gmra.mxu0 %v734
    %v2620 = vpop.f32.mrf.mxu0
    %v2621 = vadd.f32 %v1585, %v2620
    %v2622 = vpop.f32.mrf.mxu0
    %v2623 = vadd.f32 %v1590, %v2622
    %2624 = vmatmul.bf16.gmra.mxu0 %v737
    %v2625 = vpop.f32.mrf.mxu0
    %v2626 = vadd.f32 %v1595, %v2625
    %v2627 = vpop.f32.mrf.mxu0
    %v2628 = vadd.f32 %v1600, %v2627
    %2629 = vmatmul.bf16.gmra.mxu0 %v740
    %v2630 = vpop.f32.mrf.mxu0
    %v2631 = vadd.f32 %v1605, %v2630
    %v2632 = vpop.f32.mrf.mxu0
    %v2633 = vadd.f32 %v1610, %v2632
    %2634 = vmatmul.bf16.gmra.mxu0 %v743
    %v2635 = vpop.f32.mrf.mxu0
    %v2636 = vadd.f32 %v1615, %v2635
    %v2637 = vpop.f32.mrf.mxu0
    %v2638 = vadd.f32 %v1620, %v2637
    %2639 = vmatmul.bf16.gmra.mxu0 %v746
    %v2640 = vpop.f32.mrf.mxu0
    %v2641 = vadd.f32 %v1625, %v2640
    %v2642 = vpop.f32.mrf.mxu0
    %v2643 = vadd.f32 %v1630, %v2642
    %2644 = vmatmul.bf16.gmra.mxu0 %v749
    %v2645 = vpop.f32.mrf.mxu0
    %v2646 = vadd.f32 %v1635, %v2645
    %v2647 = vpop.f32.mrf.mxu0
    %v2648 = vadd.f32 %v1640, %v2647
    %2649 = vmatmul.bf16.gmra.mxu0 %v752
    %v2650 = vpop.f32.mrf.mxu0
    %v2651 = vadd.f32 %v1645, %v2650
    %v2652 = vpop.f32.mrf.mxu0
    %v2653 = vadd.f32 %v1650, %v2652
    %2654 = vmatmul.bf16.gmra.mxu0 %v755
    %v2655 = vpop.f32.mrf.mxu0
    %v2656 = vadd.f32 %v1655, %v2655
    %v2657 = vpop.f32.mrf.mxu0
    %v2658 = vadd.f32 %v1660, %v2657
    %2659 = vmatmul.bf16.gmra.mxu0 %v758
    %v2660 = vpop.f32.mrf.mxu0
    %v2661 = vadd.f32 %v1665, %v2660
    %v2662 = vpop.f32.mrf.mxu0
    %v2663 = vadd.f32 %v1670, %v2662
    %2664 = vmatmul.bf16.gmra.mxu0 %v761
    %v2665 = vpop.f32.mrf.mxu0
    %v2666 = vadd.f32 %v1675, %v2665
    %v2667 = vpop.f32.mrf.mxu0
    %v2668 = vadd.f32 %v1680, %v2667
    %2669 = vmatmul.bf16.gmra.mxu0 %v764
    %v2670 = vpop.f32.mrf.mxu0
    %v2671 = vadd.f32 %v1685, %v2670
    %v2672 = vpop.f32.mrf.mxu0
    %v2673 = vadd.f32 %v1690, %v2672
    %2674 = vmatmul.bf16.gmra.mxu0 %v767
    %v2675 = vpop.f32.mrf.mxu0
    %v2676 = vadd.f32 %v1695, %v2675
    %v2677 = vpop.f32.mrf.mxu0
    %v2678 = vadd.f32 %v1700, %v2677
    %2679 = vmatmul.bf16.gmra.mxu0 %v770
    %v2680 = vpop.f32.mrf.mxu0
    %v2681 = vadd.f32 %v1705, %v2680
    %v2682 = vpop.f32.mrf.mxu0
    %v2683 = vadd.f32 %v1710, %v2682
    %2684 = vmatmul.bf16.gmra.mxu0 %v773
    %v2685 = vpop.f32.mrf.mxu0
    %v2686 = vadd.f32 %v1715, %v2685
    %v2687 = vpop.f32.mrf.mxu0
    %v2688 = vadd.f32 %v1720, %v2687
    %2689 = vmatmul.bf16.gmra.mxu0 %v776
    %v2690 = vpop.f32.mrf.mxu0
    %v2691 = vadd.f32 %v1725, %v2690
    %v2692 = vpop.f32.mrf.mxu0
    %v2693 = vadd.f32 %v1730, %v2692
    %2694 = vmatmul.bf16.gmra.mxu0 %v779
    %v2695 = vpop.f32.mrf.mxu0
    %v2696 = vadd.f32 %v1735, %v2695
    %v2697 = vpop.f32.mrf.mxu0
    %v2698 = vadd.f32 %v1740, %v2697
    %2699 = vmatmul.bf16.gmra.mxu0 %v782
    %v2700 = vpop.f32.mrf.mxu0
    %v2701 = vadd.f32 %v1745, %v2700
    %v2702 = vpop.f32.mrf.mxu0
    %v2703 = vadd.f32 %v1750, %v2702
    %2704 = vmatmul.bf16.gmra.mxu0 %v785
    %v2705 = vpop.f32.mrf.mxu0
    %v2706 = vadd.f32 %v1755, %v2705
    %v2707 = vpop.f32.mrf.mxu0
    %v2708 = vadd.f32 %v1760, %v2707
    %2709 = vmatmul.bf16.gmra.mxu0 %v788
    %v2710 = vpop.f32.mrf.mxu0
    %v2711 = vadd.f32 %v1765, %v2710
    %v2712 = vpop.f32.mrf.mxu0
    %v2713 = vadd.f32 %v1770, %v2712
    %2714 = vmatmul.bf16.gmra.mxu0 %v791
    %v2715 = vpop.f32.mrf.mxu0
    %v2716 = vadd.f32 %v1775, %v2715
    %v2717 = vpop.f32.mrf.mxu0
    %v2718 = vadd.f32 %v1780, %v2717
    %2719 = vmatmul.bf16.gmra.mxu0 %v794
    %v2720 = vpop.f32.mrf.mxu0
    %v2721 = vadd.f32 %v1785, %v2720
    %v2722 = vpop.f32.mrf.mxu0
    %v2723 = vadd.f32 %v1790, %v2722
    %2724 = vmatmul.bf16.gmra.mxu0 %v797
    %v2725 = vpop.f32.mrf.mxu0
    %v2726 = vadd.f32 %v1795, %v2725
    %v2727 = vpop.f32.mrf.mxu0
    %v2728 = vadd.f32 %v1800, %v2727
    %2729 = vmatmul.bf16.gmra.mxu0 %v800
    %v2730 = vpop.f32.mrf.mxu0
    %v2731 = vadd.f32 %v1805, %v2730
    %v2732 = vpop.f32.mrf.mxu0
    %v2733 = vadd.f32 %v1810, %v2732
    %2734 = vmatmul.bf16.gmra.mxu0 %v803
    %v2735 = vpop.f32.mrf.mxu0
    %v2736 = vadd.f32 %v1815, %v2735
    %v2737 = vpop.f32.mrf.mxu0
    %v2738 = vadd.f32 %v1820, %v2737
    %2739 = vmatmul.bf16.gmra.mxu0 %v806
    %v2740 = vpop.f32.mrf.mxu0
    %v2741 = vadd.f32 %v1825, %v2740
    %v2742 = vpop.f32.mrf.mxu0
    %v2743 = vadd.f32 %v1830, %v2742
    %2744 = vmatmul.bf16.gmra.mxu0 %v809
    %v2745 = vpop.f32.mrf.mxu0
    %v2746 = vadd.f32 %v1835, %v2745
    %v2747 = vpop.f32.mrf.mxu0
    %v2748 = vadd.f32 %v1840, %v2747
    %2749 = vmatmul.bf16.gmra.mxu0 %v812
    %v2750 = vpop.f32.mrf.mxu0
    %v2751 = vadd.f32 %v1845, %v2750
    %v2752 = vpop.f32.mrf.mxu0
    %v2753 = vadd.f32 %v1850, %v2752
    %2754 = vmatmul.bf16.gmra.mxu0 %v815
    %v2755 = vpop.f32.mrf.mxu0
    %v2756 = vadd.f32 %v1855, %v2755
    %v2757 = vpop.f32.mrf.mxu0
    %v2758 = vadd.f32 %v1860, %v2757
    %2759 = vmatmul.bf16.gmra.mxu0 %v818
    %v2760 = vpop.f32.mrf.mxu0
    %v2761 = vadd.f32 %v1865, %v2760
    %v2762 = vpop.f32.mrf.mxu0
    %v2763 = vadd.f32 %v1870, %v2762
    %2764 = vmatmul.bf16.gmra.mxu0 %v821
    %v2765 = vpop.f32.mrf.mxu0
    %v2766 = vadd.f32 %v1875, %v2765
    %v2767 = vpop.f32.mrf.mxu0
    %v2768 = vadd.f32 %v1880, %v2767
    %2769 = vmatmul.bf16.gmra.mxu0 %v824
    %v2770 = vpop.f32.mrf.mxu0
    %v2771 = vadd.f32 %v1885, %v2770
    %v2772 = vpop.f32.mrf.mxu0
    %v2773 = vadd.f32 %v1890, %v2772
    %2774 = vmatmul.bf16.gmra.mxu0 %v827
    %v2775 = vpop.f32.mrf.mxu0
    %v2776 = vadd.f32 %v1895, %v2775
    %v2777 = vpop.f32.mrf.mxu0
    %v2778 = vadd.f32 %v1900, %v2777
    %2779 = vmatmul.bf16.gmra.mxu0 %v830
    %v2780 = vpop.f32.mrf.mxu0
    %v2781 = vadd.f32 %v1905, %v2780
    %v2782 = vpop.f32.mrf.mxu0
    %v2783 = vadd.f32 %v1910, %v2782
    %2784 = vmatmul.bf16.gmra.mxu0 %v833
    %v2785 = vpop.f32.mrf.mxu0
    %v2786 = vadd.f32 %v1915, %v2785
    %v2787 = vpop.f32.mrf.mxu0
    %v2788 = vadd.f32 %v1920, %v2787
    %2789 = vmatmul.bf16.gmra.mxu0 %v836
    %v2790 = vpop.f32.mrf.mxu0
    %v2791 = vadd.f32 %v1925, %v2790
    %v2792 = vpop.f32.mrf.mxu0
    %v2793 = vadd.f32 %v1930, %v2792
    %2794 = vmatmul.bf16.gmra.mxu0 %v839
    %v2795 = vpop.f32.mrf.mxu0
    %v2796 = vadd.f32 %v1935, %v2795
    %v2797 = vpop.f32.mrf.mxu0
    %v2798 = vadd.f32 %v1940, %v2797
    %2799 = vmatmul.bf16.gmra.mxu0 %v842
    %v2800 = vpop.f32.mrf.mxu0
    %v2801 = vadd.f32 %v1945, %v2800
    %v2802 = vpop.f32.mrf.mxu0
    %v2803 = vadd.f32 %v1950, %v2802
    %2804 = vmatmul.bf16.gmra.mxu0 %v845
    %v2805 = vpop.f32.mrf.mxu0
    %v2806 = vadd.f32 %v1955, %v2805
    %v2807 = vpop.f32.mrf.mxu0
    %v2808 = vadd.f32 %v1960, %v2807
    %2809 = vmatmul.bf16.gmra.mxu0 %v848
    %v2810 = vpop.f32.mrf.mxu0
    %v2811 = vadd.f32 %v1965, %v2810
    %v2812 = vpop.f32.mrf.mxu0
    %v2813 = vadd.f32 %v1970, %v2812
    %2814 = vmatmul.bf16.gmra.mxu0 %v851
    %v2815 = vpop.f32.mrf.mxu0
    %v2816 = vadd.f32 %v1975, %v2815
    %v2817 = vpop.f32.mrf.mxu0
    %v2818 = vadd.f32 %v1980, %v2817
    %2819 = vmatmul.bf16.gmra.mxu0 %v854
    %v2820 = vpop.f32.mrf.mxu0
    %v2821 = vadd.f32 %v1985, %v2820
    %v2822 = vpop.f32.mrf.mxu0
    %v2823 = vadd.f32 %v1990, %v2822
    %2824 = vmatmul.bf16.gmra.mxu0 %v857
    %v2825 = vpop.f32.mrf.mxu0
    %v2826 = vadd.f32 %v1995, %v2825
    %v2827 = vpop.f32.mrf.mxu0
    %v2828 = vadd.f32 %v2000, %v2827
    %2829 = vmatmul.bf16.gmra.mxu0 %v860
    %v2830 = vpop.f32.mrf.mxu0
    %v2831 = vadd.f32 %v2005, %v2830
    %v2832 = vpop.f32.mrf.mxu0
    %v2833 = vadd.f32 %v2010, %v2832
    %2834 = vmatmul.bf16.gmra.mxu0 %v863
    %v2835 = vpop.f32.mrf.mxu0
    %v2836 = vadd.f32 %v2015, %v2835
    %v2837 = vpop.f32.mrf.mxu0
    %v2838 = vadd.f32 %v2020, %v2837
    %2839 = vmatmul.bf16.gmra.mxu0 %v866
    %v2840 = vpop.f32.mrf.mxu0
    %v2841 = vadd.f32 %v2025, %v2840
    %v2842 = vpop.f32.mrf.mxu0
    %v2843 = vadd.f32 %v2030, %v2842
    %2844 = vmatmul.bf16.gmra.mxu0 %v869
    %v2845 = vpop.f32.mrf.mxu0
    %v2846 = vadd.f32 %v2035, %v2845
    %v2847 = vpop.f32.mrf.mxu0
    %v2848 = vadd.f32 %v2040, %v2847
    %2849 = vmatmul.bf16.gmra.mxu0 %v872
    %v2850 = vpop.f32.mrf.mxu0
    %v2851 = vadd.f32 %v2045, %v2850
    %v2852 = vpop.f32.mrf.mxu0
    %v2853 = vadd.f32 %v2050, %v2852
    %2854 = vmatmul.bf16.gmra.mxu0 %v875
    %v2855 = vpop.f32.mrf.mxu0
    %v2856 = vadd.f32 %v2055, %v2855
    %v2857 = vpop.f32.mrf.mxu0
    %v2858 = vadd.f32 %v2060, %v2857
    %2859 = vmatmul.bf16.gmra.mxu0 %v878
    %v2860 = vpop.f32.mrf.mxu0
    %v2861 = vadd.f32 %v2065, %v2860
    %v2862 = vpop.f32.mrf.mxu0
    %v2863 = vadd.f32 %v2070, %v2862
    %2864 = vmatmul.bf16.gmra.mxu0 %v881
    %v2865 = vpop.f32.mrf.mxu0
    %v2866 = vadd.f32 %v2075, %v2865
    %v2867 = vpop.f32.mrf.mxu0
    %v2868 = vadd.f32 %v2080, %v2867
    %2869 = vmatmul.bf16.gmra.mxu0 %v884
    %v2870 = vpop.f32.mrf.mxu0
    %v2871 = vadd.f32 %v2085, %v2870
    %v2872 = vpop.f32.mrf.mxu0
    %v2873 = vadd.f32 %v2090, %v2872
    %2874 = vmatmul.bf16.gmra.mxu0 %v887
    %v2875 = vpop.f32.mrf.mxu0
    %v2876 = vadd.f32 %v2095, %v2875
    %v2877 = vpop.f32.mrf.mxu0
    %v2878 = vadd.f32 %v2100, %v2877
    %2879 = vdwg.mxu0
    %2880 = vmatpush.bf16.msra.mxu0 %v945
    %2881 = vmatpush.bf16.msra.mxu0 %v944
    %2882 = vmatpush.bf16.msra.mxu0 %v943
    %2883 = vmatpush.bf16.msra.mxu0 %v942
    %2884 = vmatpush.bf16.msra.mxu0 %v941
    %2885 = vmatpush.bf16.msra.mxu0 %v940
    %2886 = vmatpush.bf16.msra.mxu0 %v939
    %2887 = vmatpush.bf16.msra.mxu0 %v938
    %2888 = vmatmul.bf16.gmra.mxu0 %v603
    %v2889 = vpop.f32.mrf.mxu0
    %v2890 = vadd.f32 %v2401, %v2889
    %v2891 = vpop.f32.mrf.mxu0
    %v2892 = vadd.f32 %v2403, %v2891
    %2893 = vmatmul.bf16.gmra.mxu0 %v606
    %v2894 = vpop.f32.mrf.mxu0
    %v2895 = vadd.f32 %v2406, %v2894
    %v2896 = vpop.f32.mrf.mxu0
    %v2897 = vadd.f32 %v2408, %v2896
    %2898 = vmatmul.bf16.gmra.mxu0 %v609
    %v2899 = vpop.f32.mrf.mxu0
    %v2900 = vadd.f32 %v2411, %v2899
    %v2901 = vpop.f32.mrf.mxu0
    %v2902 = vadd.f32 %v2413, %v2901
    %2903 = vmatmul.bf16.gmra.mxu0 %v612
    %v2904 = vpop.f32.mrf.mxu0
    %v2905 = vadd.f32 %v2416, %v2904
    %v2906 = vpop.f32.mrf.mxu0
    %v2907 = vadd.f32 %v2418, %v2906
    %2908 = vmatmul.bf16.gmra.mxu0 %v615
    %v2909 = vpop.f32.mrf.mxu0
    %v2910 = vadd.f32 %v2421, %v2909
    %v2911 = vpop.f32.mrf.mxu0
    %v2912 = vadd.f32 %v2423, %v2911
    %2913 = vmatmul.bf16.gmra.mxu0 %v618
    %v2914 = vpop.f32.mrf.mxu0
    %v2915 = vadd.f32 %v2426, %v2914
    %v2916 = vpop.f32.mrf.mxu0
    %v2917 = vadd.f32 %v2428, %v2916
    %2918 = vmatmul.bf16.gmra.mxu0 %v621
    %v2919 = vpop.f32.mrf.mxu0
    %v2920 = vadd.f32 %v2431, %v2919
    %v2921 = vpop.f32.mrf.mxu0
    %v2922 = vadd.f32 %v2433, %v2921
    %2923 = vmatmul.bf16.gmra.mxu0 %v624
    %v2924 = vpop.f32.mrf.mxu0
    %v2925 = vadd.f32 %v2436, %v2924
    %v2926 = vpop.f32.mrf.mxu0
    %v2927 = vadd.f32 %v2438, %v2926
    %2928 = vmatmul.bf16.gmra.mxu0 %v627
    %v2929 = vpop.f32.mrf.mxu0
    %v2930 = vadd.f32 %v2441, %v2929
    %v2931 = vpop.f32.mrf.mxu0
    %v2932 = vadd.f32 %v2443, %v2931
    %2933 = vmatmul.bf16.gmra.mxu0 %v630
    %v2934 = vpop.f32.mrf.mxu0
    %v2935 = vadd.f32 %v2446, %v2934
    %v2936 = vpop.f32.mrf.mxu0
    %v2937 = vadd.f32 %v2448, %v2936
    %2938 = vmatmul.bf16.gmra.mxu0 %v633
    %v2939 = vpop.f32.mrf.mxu0
    %v2940 = vadd.f32 %v2451, %v2939
    %v2941 = vpop.f32.mrf.mxu0
    %v2942 = vadd.f32 %v2453, %v2941
    %2943 = vmatmul.bf16.gmra.mxu0 %v636
    %v2944 = vpop.f32.mrf.mxu0
    %v2945 = vadd.f32 %v2456, %v2944
    %v2946 = vpop.f32.mrf.mxu0
    %v2947 = vadd.f32 %v2458, %v2946
    %2948 = vmatmul.bf16.gmra.mxu0 %v639
    %v2949 = vpop.f32.mrf.mxu0
    %v2950 = vadd.f32 %v2461, %v2949
    %v2951 = vpop.f32.mrf.mxu0
    %v2952 = vadd.f32 %v2463, %v2951
    %2953 = vmatmul.bf16.gmra.mxu0 %v642
    %v2954 = vpop.f32.mrf.mxu0
    %v2955 = vadd.f32 %v2466, %v2954
    %v2956 = vpop.f32.mrf.mxu0
    %v2957 = vadd.f32 %v2468, %v2956
    %2958 = vmatmul.bf16.gmra.mxu0 %v645
    %v2959 = vpop.f32.mrf.mxu0
    %v2960 = vadd.f32 %v2471, %v2959
    %v2961 = vpop.f32.mrf.mxu0
    %v2962 = vadd.f32 %v2473, %v2961
    %2963 = vmatmul.bf16.gmra.mxu0 %v648
    %v2964 = vpop.f32.mrf.mxu0
    %v2965 = vadd.f32 %v2476, %v2964
    %v2966 = vpop.f32.mrf.mxu0
    %v2967 = vadd.f32 %v2478, %v2966
    %2968 = vmatmul.bf16.gmra.mxu0 %v651
    %v2969 = vpop.f32.mrf.mxu0
    %v2970 = vadd.f32 %v2481, %v2969
    %v2971 = vpop.f32.mrf.mxu0
    %v2972 = vadd.f32 %v2483, %v2971
    %2973 = vmatmul.bf16.gmra.mxu0 %v654
    %v2974 = vpop.f32.mrf.mxu0
    %v2975 = vadd.f32 %v2486, %v2974
    %v2976 = vpop.f32.mrf.mxu0
    %v2977 = vadd.f32 %v2488, %v2976
    %2978 = vmatmul.bf16.gmra.mxu0 %v657
    %v2979 = vpop.f32.mrf.mxu0
    %v2980 = vadd.f32 %v2491, %v2979
    %v2981 = vpop.f32.mrf.mxu0
    %v2982 = vadd.f32 %v2493, %v2981
    %2983 = vmatmul.bf16.gmra.mxu0 %v660
    %v2984 = vpop.f32.mrf.mxu0
    %v2985 = vadd.f32 %v2496, %v2984
    %v2986 = vpop.f32.mrf.mxu0
    %v2987 = vadd.f32 %v2498, %v2986
    %2988 = vmatmul.bf16.gmra.mxu0 %v663
    %v2989 = vpop.f32.mrf.mxu0
    %v2990 = vadd.f32 %v2501, %v2989
    %v2991 = vpop.f32.mrf.mxu0
    %v2992 = vadd.f32 %v2503, %v2991
    %2993 = vmatmul.bf16.gmra.mxu0 %v666
    %v2994 = vpop.f32.mrf.mxu0
    %v2995 = vadd.f32 %v2506, %v2994
    %v2996 = vpop.f32.mrf.mxu0
    %v2997 = vadd.f32 %v2508, %v2996
    %2998 = vmatmul.bf16.gmra.mxu0 %v669
    %v2999 = vpop.f32.mrf.mxu0
    %v3000 = vadd.f32 %v2511, %v2999
    %v3001 = vpop.f32.mrf.mxu0
    %v3002 = vadd.f32 %v2513, %v3001
    %3003 = vmatmul.bf16.gmra.mxu0 %v672
    %v3004 = vpop.f32.mrf.mxu0
    %v3005 = vadd.f32 %v2516, %v3004
    %v3006 = vpop.f32.mrf.mxu0
    %v3007 = vadd.f32 %v2518, %v3006
    %3008 = vmatmul.bf16.gmra.mxu0 %v675
    %v3009 = vpop.f32.mrf.mxu0
    %v3010 = vadd.f32 %v2521, %v3009
    %v3011 = vpop.f32.mrf.mxu0
    %v3012 = vadd.f32 %v2523, %v3011
    %3013 = vmatmul.bf16.gmra.mxu0 %v678
    %v3014 = vpop.f32.mrf.mxu0
    %v3015 = vadd.f32 %v2526, %v3014
    %v3016 = vpop.f32.mrf.mxu0
    %v3017 = vadd.f32 %v2528, %v3016
    %3018 = vmatmul.bf16.gmra.mxu0 %v681
    %v3019 = vpop.f32.mrf.mxu0
    %v3020 = vadd.f32 %v2531, %v3019
    %v3021 = vpop.f32.mrf.mxu0
    %v3022 = vadd.f32 %v2533, %v3021
    %3023 = vmatmul.bf16.gmra.mxu0 %v684
    %v3024 = vpop.f32.mrf.mxu0
    %v3025 = vadd.f32 %v2536, %v3024
    %v3026 = vpop.f32.mrf.mxu0
    %v3027 = vadd.f32 %v2538, %v3026
    %3028 = vmatmul.bf16.gmra.mxu0 %v687
    %v3029 = vpop.f32.mrf.mxu0
    %v3030 = vadd.f32 %v2541, %v3029
    %v3031 = vpop.f32.mrf.mxu0
    %v3032 = vadd.f32 %v2543, %v3031
    %3033 = vmatmul.bf16.gmra.mxu0 %v690
    %v3034 = vpop.f32.mrf.mxu0
    %v3035 = vadd.f32 %v2546, %v3034
    %v3036 = vpop.f32.mrf.mxu0
    %v3037 = vadd.f32 %v2548, %v3036
    %3038 = vmatmul.bf16.gmra.mxu0 %v693
    %v3039 = vpop.f32.mrf.mxu0
    %v3040 = vadd.f32 %v2551, %v3039
    %v3041 = vpop.f32.mrf.mxu0
    %v3042 = vadd.f32 %v2553, %v3041
    %3043 = vmatmul.bf16.gmra.mxu0 %v696
    %v3044 = vpop.f32.mrf.mxu0
    %v3045 = vadd.f32 %v2556, %v3044
    %v3046 = vpop.f32.mrf.mxu0
    %v3047 = vadd.f32 %v2558, %v3046
    %3048 = vmatmul.bf16.gmra.mxu0 %v699
    %v3049 = vpop.f32.mrf.mxu0
    %v3050 = vadd.f32 %v2561, %v3049
    %v3051 = vpop.f32.mrf.mxu0
    %v3052 = vadd.f32 %v2563, %v3051
    %3053 = vmatmul.bf16.gmra.mxu0 %v702
    %v3054 = vpop.f32.mrf.mxu0
    %v3055 = vadd.f32 %v2566, %v3054
    %v3056 = vpop.f32.mrf.mxu0
    %v3057 = vadd.f32 %v2568, %v3056
    %3058 = vmatmul.bf16.gmra.mxu0 %v705
    %v3059 = vpop.f32.mrf.mxu0
    %v3060 = vadd.f32 %v2571, %v3059
    %v3061 = vpop.f32.mrf.mxu0
    %v3062 = vadd.f32 %v2573, %v3061
    %3063 = vmatmul.bf16.gmra.mxu0 %v708
    %v3064 = vpop.f32.mrf.mxu0
    %v3065 = vadd.f32 %v2576, %v3064
    %v3066 = vpop.f32.mrf.mxu0
    %v3067 = vadd.f32 %v2578, %v3066
    %3068 = vmatmul.bf16.gmra.mxu0 %v711
    %v3069 = vpop.f32.mrf.mxu0
    %v3070 = vadd.f32 %v2581, %v3069
    %v3071 = vpop.f32.mrf.mxu0
    %v3072 = vadd.f32 %v2583, %v3071
    %3073 = vmatmul.bf16.gmra.mxu0 %v714
    %v3074 = vpop.f32.mrf.mxu0
    %v3075 = vadd.f32 %v2586, %v3074
    %v3076 = vpop.f32.mrf.mxu0
    %v3077 = vadd.f32 %v2588, %v3076
    %3078 = vmatmul.bf16.gmra.mxu0 %v717
    %v3079 = vpop.f32.mrf.mxu0
    %v3080 = vadd.f32 %v2591, %v3079
    %v3081 = vpop.f32.mrf.mxu0
    %v3082 = vadd.f32 %v2593, %v3081
    %3083 = vmatmul.bf16.gmra.mxu0 %v720
    %v3084 = vpop.f32.mrf.mxu0
    %v3085 = vadd.f32 %v2596, %v3084
    %v3086 = vpop.f32.mrf.mxu0
    %v3087 = vadd.f32 %v2598, %v3086
    %3088 = vmatmul.bf16.gmra.mxu0 %v723
    %v3089 = vpop.f32.mrf.mxu0
    %v3090 = vadd.f32 %v2601, %v3089
    %v3091 = vpop.f32.mrf.mxu0
    %v3092 = vadd.f32 %v2603, %v3091
    %3093 = vmatmul.bf16.gmra.mxu0 %v726
    %v3094 = vpop.f32.mrf.mxu0
    %v3095 = vadd.f32 %v2606, %v3094
    %v3096 = vpop.f32.mrf.mxu0
    %v3097 = vadd.f32 %v2608, %v3096
    %3098 = vmatmul.bf16.gmra.mxu0 %v729
    %v3099 = vpop.f32.mrf.mxu0
    %v3100 = vadd.f32 %v2611, %v3099
    %v3101 = vpop.f32.mrf.mxu0
    %v3102 = vadd.f32 %v2613, %v3101
    %3103 = vmatmul.bf16.gmra.mxu0 %v732
    %v3104 = vpop.f32.mrf.mxu0
    %v3105 = vadd.f32 %v2616, %v3104
    %v3106 = vpop.f32.mrf.mxu0
    %v3107 = vadd.f32 %v2618, %v3106
    %3108 = vmatmul.bf16.gmra.mxu0 %v735
    %v3109 = vpop.f32.mrf.mxu0
    %v3110 = vadd.f32 %v2621, %v3109
    %v3111 = vpop.f32.mrf.mxu0
    %v3112 = vadd.f32 %v2623, %v3111
    %3113 = vmatmul.bf16.gmra.mxu0 %v738
    %v3114 = vpop.f32.mrf.mxu0
    %v3115 = vadd.f32 %v2626, %v3114
    %v3116 = vpop.f32.mrf.mxu0
    %v3117 = vadd.f32 %v2628, %v3116
    %3118 = vmatmul.bf16.gmra.mxu0 %v741
    %v3119 = vpop.f32.mrf.mxu0
    %v3120 = vadd.f32 %v2631, %v3119
    %v3121 = vpop.f32.mrf.mxu0
    %v3122 = vadd.f32 %v2633, %v3121
    %3123 = vmatmul.bf16.gmra.mxu0 %v744
    %v3124 = vpop.f32.mrf.mxu0
    %v3125 = vadd.f32 %v2636, %v3124
    %v3126 = vpop.f32.mrf.mxu0
    %v3127 = vadd.f32 %v2638, %v3126
    %3128 = vmatmul.bf16.gmra.mxu0 %v747
    %v3129 = vpop.f32.mrf.mxu0
    %v3130 = vadd.f32 %v2641, %v3129
    %v3131 = vpop.f32.mrf.mxu0
    %v3132 = vadd.f32 %v2643, %v3131
    %3133 = vmatmul.bf16.gmra.mxu0 %v750
    %v3134 = vpop.f32.mrf.mxu0
    %v3135 = vadd.f32 %v2646, %v3134
    %v3136 = vpop.f32.mrf.mxu0
    %v3137 = vadd.f32 %v2648, %v3136
    %3138 = vmatmul.bf16.gmra.mxu0 %v753
    %v3139 = vpop.f32.mrf.mxu0
    %v3140 = vadd.f32 %v2651, %v3139
    %v3141 = vpop.f32.mrf.mxu0
    %v3142 = vadd.f32 %v2653, %v3141
    %3143 = vmatmul.bf16.gmra.mxu0 %v756
    %v3144 = vpop.f32.mrf.mxu0
    %v3145 = vadd.f32 %v2656, %v3144
    %v3146 = vpop.f32.mrf.mxu0
    %v3147 = vadd.f32 %v2658, %v3146
    %3148 = vmatmul.bf16.gmra.mxu0 %v759
    %v3149 = vpop.f32.mrf.mxu0
    %v3150 = vadd.f32 %v2661, %v3149
    %v3151 = vpop.f32.mrf.mxu0
    %v3152 = vadd.f32 %v2663, %v3151
    %3153 = vmatmul.bf16.gmra.mxu0 %v762
    %v3154 = vpop.f32.mrf.mxu0
    %v3155 = vadd.f32 %v2666, %v3154
    %v3156 = vpop.f32.mrf.mxu0
    %v3157 = vadd.f32 %v2668, %v3156
    %3158 = vmatmul.bf16.gmra.mxu0 %v765
    %v3159 = vpop.f32.mrf.mxu0
    %v3160 = vadd.f32 %v2671, %v3159
    %v3161 = vpop.f32.mrf.mxu0
    %v3162 = vadd.f32 %v2673, %v3161
    %3163 = vmatmul.bf16.gmra.mxu0 %v768
    %v3164 = vpop.f32.mrf.mxu0
    %v3165 = vadd.f32 %v2676, %v3164
    %v3166 = vpop.f32.mrf.mxu0
    %v3167 = vadd.f32 %v2678, %v3166
    %3168 = vmatmul.bf16.gmra.mxu0 %v771
    %v3169 = vpop.f32.mrf.mxu0
    %v3170 = vadd.f32 %v2681, %v3169
    %v3171 = vpop.f32.mrf.mxu0
    %v3172 = vadd.f32 %v2683, %v3171
    %3173 = vmatmul.bf16.gmra.mxu0 %v774
    %v3174 = vpop.f32.mrf.mxu0
    %v3175 = vadd.f32 %v2686, %v3174
    %v3176 = vpop.f32.mrf.mxu0
    %v3177 = vadd.f32 %v2688, %v3176
    %3178 = vmatmul.bf16.gmra.mxu0 %v777
    %v3179 = vpop.f32.mrf.mxu0
    %v3180 = vadd.f32 %v2691, %v3179
    %v3181 = vpop.f32.mrf.mxu0
    %v3182 = vadd.f32 %v2693, %v3181
    %3183 = vmatmul.bf16.gmra.mxu0 %v780
    %v3184 = vpop.f32.mrf.mxu0
    %v3185 = vadd.f32 %v2696, %v3184
    %v3186 = vpop.f32.mrf.mxu0
    %v3187 = vadd.f32 %v2698, %v3186
    %3188 = vmatmul.bf16.gmra.mxu0 %v783
    %v3189 = vpop.f32.mrf.mxu0
    %v3190 = vadd.f32 %v2701, %v3189
    %v3191 = vpop.f32.mrf.mxu0
    %v3192 = vadd.f32 %v2703, %v3191
    %3193 = vmatmul.bf16.gmra.mxu0 %v786
    %v3194 = vpop.f32.mrf.mxu0
    %v3195 = vadd.f32 %v2706, %v3194
    %v3196 = vpop.f32.mrf.mxu0
    %v3197 = vadd.f32 %v2708, %v3196
    %3198 = vmatmul.bf16.gmra.mxu0 %v789
    %v3199 = vpop.f32.mrf.mxu0
    %v3200 = vadd.f32 %v2711, %v3199
    %v3201 = vpop.f32.mrf.mxu0
    %v3202 = vadd.f32 %v2713, %v3201
    %3203 = vmatmul.bf16.gmra.mxu0 %v792
    %v3204 = vpop.f32.mrf.mxu0
    %v3205 = vadd.f32 %v2716, %v3204
    %v3206 = vpop.f32.mrf.mxu0
    %v3207 = vadd.f32 %v2718, %v3206
    %3208 = vmatmul.bf16.gmra.mxu0 %v795
    %v3209 = vpop.f32.mrf.mxu0
    %v3210 = vadd.f32 %v2721, %v3209
    %v3211 = vpop.f32.mrf.mxu0
    %v3212 = vadd.f32 %v2723, %v3211
    %3213 = vmatmul.bf16.gmra.mxu0 %v798
    %v3214 = vpop.f32.mrf.mxu0
    %v3215 = vadd.f32 %v2726, %v3214
    %v3216 = vpop.f32.mrf.mxu0
    %v3217 = vadd.f32 %v2728, %v3216
    %3218 = vmatmul.bf16.gmra.mxu0 %v801
    %v3219 = vpop.f32.mrf.mxu0
    %v3220 = vadd.f32 %v2731, %v3219
    %v3221 = vpop.f32.mrf.mxu0
    %v3222 = vadd.f32 %v2733, %v3221
    %3223 = vmatmul.bf16.gmra.mxu0 %v804
    %v3224 = vpop.f32.mrf.mxu0
    %v3225 = vadd.f32 %v2736, %v3224
    %v3226 = vpop.f32.mrf.mxu0
    %v3227 = vadd.f32 %v2738, %v3226
    %3228 = vmatmul.bf16.gmra.mxu0 %v807
    %v3229 = vpop.f32.mrf.mxu0
    %v3230 = vadd.f32 %v2741, %v3229
    %v3231 = vpop.f32.mrf.mxu0
    %v3232 = vadd.f32 %v2743, %v3231
    %3233 = vmatmul.bf16.gmra.mxu0 %v810
    %v3234 = vpop.f32.mrf.mxu0
    %v3235 = vadd.f32 %v2746, %v3234
    %v3236 = vpop.f32.mrf.mxu0
    %v3237 = vadd.f32 %v2748, %v3236
    %3238 = vmatmul.bf16.gmra.mxu0 %v813
    %v3239 = vpop.f32.mrf.mxu0
    %v3240 = vadd.f32 %v2751, %v3239
    %v3241 = vpop.f32.mrf.mxu0
    %v3242 = vadd.f32 %v2753, %v3241
    %3243 = vmatmul.bf16.gmra.mxu0 %v816
    %v3244 = vpop.f32.mrf.mxu0
    %v3245 = vadd.f32 %v2756, %v3244
    %v3246 = vpop.f32.mrf.mxu0
    %v3247 = vadd.f32 %v2758, %v3246
    %3248 = vmatmul.bf16.gmra.mxu0 %v819
    %v3249 = vpop.f32.mrf.mxu0
    %v3250 = vadd.f32 %v2761, %v3249
    %v3251 = vpop.f32.mrf.mxu0
    %v3252 = vadd.f32 %v2763, %v3251
    %3253 = vmatmul.bf16.gmra.mxu0 %v822
    %v3254 = vpop.f32.mrf.mxu0
    %v3255 = vadd.f32 %v2766, %v3254
    %v3256 = vpop.f32.mrf.mxu0
    %v3257 = vadd.f32 %v2768, %v3256
    %3258 = vmatmul.bf16.gmra.mxu0 %v825
    %v3259 = vpop.f32.mrf.mxu0
    %v3260 = vadd.f32 %v2771, %v3259
    %v3261 = vpop.f32.mrf.mxu0
    %v3262 = vadd.f32 %v2773, %v3261
    %3263 = vmatmul.bf16.gmra.mxu0 %v828
    %v3264 = vpop.f32.mrf.mxu0
    %v3265 = vadd.f32 %v2776, %v3264
    %v3266 = vpop.f32.mrf.mxu0
    %v3267 = vadd.f32 %v2778, %v3266
    %3268 = vmatmul.bf16.gmra.mxu0 %v831
    %v3269 = vpop.f32.mrf.mxu0
    %v3270 = vadd.f32 %v2781, %v3269
    %v3271 = vpop.f32.mrf.mxu0
    %v3272 = vadd.f32 %v2783, %v3271
    %3273 = vmatmul.bf16.gmra.mxu0 %v834
    %v3274 = vpop.f32.mrf.mxu0
    %v3275 = vadd.f32 %v2786, %v3274
    %v3276 = vpop.f32.mrf.mxu0
    %v3277 = vadd.f32 %v2788, %v3276
    %3278 = vmatmul.bf16.gmra.mxu0 %v837
    %v3279 = vpop.f32.mrf.mxu0
    %v3280 = vadd.f32 %v2791, %v3279
    %v3281 = vpop.f32.mrf.mxu0
    %v3282 = vadd.f32 %v2793, %v3281
    %3283 = vmatmul.bf16.gmra.mxu0 %v840
    %v3284 = vpop.f32.mrf.mxu0
    %v3285 = vadd.f32 %v2796, %v3284
    %v3286 = vpop.f32.mrf.mxu0
    %v3287 = vadd.f32 %v2798, %v3286
    %3288 = vmatmul.bf16.gmra.mxu0 %v843
    %v3289 = vpop.f32.mrf.mxu0
    %v3290 = vadd.f32 %v2801, %v3289
    %v3291 = vpop.f32.mrf.mxu0
    %v3292 = vadd.f32 %v2803, %v3291
    %3293 = vmatmul.bf16.gmra.mxu0 %v846
    %v3294 = vpop.f32.mrf.mxu0
    %v3295 = vadd.f32 %v2806, %v3294
    %v3296 = vpop.f32.mrf.mxu0
    %v3297 = vadd.f32 %v2808, %v3296
    %3298 = vmatmul.bf16.gmra.mxu0 %v849
    %v3299 = vpop.f32.mrf.mxu0
    %v3300 = vadd.f32 %v2811, %v3299
    %v3301 = vpop.f32.mrf.mxu0
    %v3302 = vadd.f32 %v2813, %v3301
    %3303 = vmatmul.bf16.gmra.mxu0 %v852
    %v3304 = vpop.f32.mrf.mxu0
    %v3305 = vadd.f32 %v2816, %v3304
    %v3306 = vpop.f32.mrf.mxu0
    %v3307 = vadd.f32 %v2818, %v3306
    %3308 = vmatmul.bf16.gmra.mxu0 %v855
    %v3309 = vpop.f32.mrf.mxu0
    %v3310 = vadd.f32 %v2821, %v3309
    %v3311 = vpop.f32.mrf.mxu0
    %v3312 = vadd.f32 %v2823, %v3311
    %3313 = vmatmul.bf16.gmra.mxu0 %v858
    %v3314 = vpop.f32.mrf.mxu0
    %v3315 = vadd.f32 %v2826, %v3314
    %v3316 = vpop.f32.mrf.mxu0
    %v3317 = vadd.f32 %v2828, %v3316
    %3318 = vmatmul.bf16.gmra.mxu0 %v861
    %v3319 = vpop.f32.mrf.mxu0
    %v3320 = vadd.f32 %v2831, %v3319
    %v3321 = vpop.f32.mrf.mxu0
    %v3322 = vadd.f32 %v2833, %v3321
    %3323 = vmatmul.bf16.gmra.mxu0 %v864
    %v3324 = vpop.f32.mrf.mxu0
    %v3325 = vadd.f32 %v2836, %v3324
    %v3326 = vpop.f32.mrf.mxu0
    %v3327 = vadd.f32 %v2838, %v3326
    %3328 = vmatmul.bf16.gmra.mxu0 %v867
    %v3329 = vpop.f32.mrf.mxu0
    %v3330 = vadd.f32 %v2841, %v3329
    %v3331 = vpop.f32.mrf.mxu0
    %v3332 = vadd.f32 %v2843, %v3331
    %3333 = vmatmul.bf16.gmra.mxu0 %v870
    %v3334 = vpop.f32.mrf.mxu0
    %v3335 = vadd.f32 %v2846, %v3334
    %v3336 = vpop.f32.mrf.mxu0
    %v3337 = vadd.f32 %v2848, %v3336
    %3338 = vmatmul.bf16.gmra.mxu0 %v873
    %v3339 = vpop.f32.mrf.mxu0
    %v3340 = vadd.f32 %v2851, %v3339
    %v3341 = vpop.f32.mrf.mxu0
    %v3342 = vadd.f32 %v2853, %v3341
    %3343 = vmatmul.bf16.gmra.mxu0 %v876
    %v3344 = vpop.f32.mrf.mxu0
    %v3345 = vadd.f32 %v2856, %v3344
    %v3346 = vpop.f32.mrf.mxu0
    %v3347 = vadd.f32 %v2858, %v3346
    %3348 = vmatmul.bf16.gmra.mxu0 %v879
    %v3349 = vpop.f32.mrf.mxu0
    %v3350 = vadd.f32 %v2861, %v3349
    %v3351 = vpop.f32.mrf.mxu0
    %v3352 = vadd.f32 %v2863, %v3351
    %3353 = vmatmul.bf16.gmra.mxu0 %v882
    %v3354 = vpop.f32.mrf.mxu0
    %v3355 = vadd.f32 %v2866, %v3354
    %v3356 = vpop.f32.mrf.mxu0
    %v3357 = vadd.f32 %v2868, %v3356
    %3358 = vmatmul.bf16.gmra.mxu0 %v885
    %v3359 = vpop.f32.mrf.mxu0
    %v3360 = vadd.f32 %v2871, %v3359
    %v3361 = vpop.f32.mrf.mxu0
    %v3362 = vadd.f32 %v2873, %v3361
    %3363 = vmatmul.bf16.gmra.mxu0 %v888
    %v3364 = vpop.f32.mrf.mxu0
    %v3365 = vadd.f32 %v2876, %v3364
    %v3366 = vpop.f32.mrf.mxu0
    %v3367 = vadd.f32 %v2878, %v3366
    %3368 = vdwg.mxu0
    %3369 = vmatpush.bf16.msra.mxu0 0
    %3370 = vmatpush.bf16.msra.mxu0 0
    %3371 = vmatpush.bf16.msra.mxu0 0
    %3372 = vmatpush.bf16.msra.mxu0 0
    %3373 = vmatpush.bf16.msra.mxu0 %v949
    %3374 = vmatpush.bf16.msra.mxu0 %v948
    %3375 = vmatpush.bf16.msra.mxu0 %v947
    %3376 = vmatpush.bf16.msra.mxu0 %v946
    %3377 = vmatmul.bf16.gmra.mxu0 %v2104
    %v3378 = vpop.f32.mrf.mxu0
    %v3379 = vadd.f32 %v2890, %v3378
    %v3380 = vpop.f32.mrf.mxu0
    %v3381 = vadd.f32 %v2892, %v3380
    %3382 = vmatmul.bf16.gmra.mxu0 %v2107
    %v3383 = vpop.f32.mrf.mxu0
    %v3384 = vadd.f32 %v2895, %v3383
    %v3385 = vpop.f32.mrf.mxu0
    %v3386 = vadd.f32 %v2897, %v3385
    %3387 = vmatmul.bf16.gmra.mxu0 %v2110
    %v3388 = vpop.f32.mrf.mxu0
    %v3389 = vadd.f32 %v2900, %v3388
    %v3390 = vpop.f32.mrf.mxu0
    %v3391 = vadd.f32 %v2902, %v3390
    %3392 = vmatmul.bf16.gmra.mxu0 %v2113
    %v3393 = vpop.f32.mrf.mxu0
    %v3394 = vadd.f32 %v2905, %v3393
    %v3395 = vpop.f32.mrf.mxu0
    %v3396 = vadd.f32 %v2907, %v3395
    %3397 = vmatmul.bf16.gmra.mxu0 %v2116
    %v3398 = vpop.f32.mrf.mxu0
    %v3399 = vadd.f32 %v2910, %v3398
    %v3400 = vpop.f32.mrf.mxu0
    %v3401 = vadd.f32 %v2912, %v3400
    %3402 = vmatmul.bf16.gmra.mxu0 %v2119
    %v3403 = vpop.f32.mrf.mxu0
    %v3404 = vadd.f32 %v2915, %v3403
    %v3405 = vpop.f32.mrf.mxu0
    %v3406 = vadd.f32 %v2917, %v3405
    %3407 = vmatmul.bf16.gmra.mxu0 %v2122
    %v3408 = vpop.f32.mrf.mxu0
    %v3409 = vadd.f32 %v2920, %v3408
    %v3410 = vpop.f32.mrf.mxu0
    %v3411 = vadd.f32 %v2922, %v3410
    %3412 = vmatmul.bf16.gmra.mxu0 %v2125
    %v3413 = vpop.f32.mrf.mxu0
    %v3414 = vadd.f32 %v2925, %v3413
    %v3415 = vpop.f32.mrf.mxu0
    %v3416 = vadd.f32 %v2927, %v3415
    %3417 = vmatmul.bf16.gmra.mxu0 %v2128
    %v3418 = vpop.f32.mrf.mxu0
    %v3419 = vadd.f32 %v2930, %v3418
    %v3420 = vpop.f32.mrf.mxu0
    %v3421 = vadd.f32 %v2932, %v3420
    %3422 = vmatmul.bf16.gmra.mxu0 %v2131
    %v3423 = vpop.f32.mrf.mxu0
    %v3424 = vadd.f32 %v2935, %v3423
    %v3425 = vpop.f32.mrf.mxu0
    %v3426 = vadd.f32 %v2937, %v3425
    %3427 = vmatmul.bf16.gmra.mxu0 %v2134
    %v3428 = vpop.f32.mrf.mxu0
    %v3429 = vadd.f32 %v2940, %v3428
    %v3430 = vpop.f32.mrf.mxu0
    %v3431 = vadd.f32 %v2942, %v3430
    %3432 = vmatmul.bf16.gmra.mxu0 %v2137
    %v3433 = vpop.f32.mrf.mxu0
    %v3434 = vadd.f32 %v2945, %v3433
    %v3435 = vpop.f32.mrf.mxu0
    %v3436 = vadd.f32 %v2947, %v3435
    %3437 = vmatmul.bf16.gmra.mxu0 %v2140
    %v3438 = vpop.f32.mrf.mxu0
    %v3439 = vadd.f32 %v2950, %v3438
    %v3440 = vpop.f32.mrf.mxu0
    %v3441 = vadd.f32 %v2952, %v3440
    %3442 = vmatmul.bf16.gmra.mxu0 %v2143
    %v3443 = vpop.f32.mrf.mxu0
    %v3444 = vadd.f32 %v2955, %v3443
    %v3445 = vpop.f32.mrf.mxu0
    %v3446 = vadd.f32 %v2957, %v3445
    %3447 = vmatmul.bf16.gmra.mxu0 %v2146
    %v3448 = vpop.f32.mrf.mxu0
    %v3449 = vadd.f32 %v2960, %v3448
    %v3450 = vpop.f32.mrf.mxu0
    %v3451 = vadd.f32 %v2962, %v3450
    %3452 = vmatmul.bf16.gmra.mxu0 %v2149
    %v3453 = vpop.f32.mrf.mxu0
    %v3454 = vadd.f32 %v2965, %v3453
    %v3455 = vpop.f32.mrf.mxu0
    %v3456 = vadd.f32 %v2967, %v3455
    %3457 = vmatmul.bf16.gmra.mxu0 %v2152
    %v3458 = vpop.f32.mrf.mxu0
    %v3459 = vadd.f32 %v2970, %v3458
    %v3460 = vpop.f32.mrf.mxu0
    %v3461 = vadd.f32 %v2972, %v3460
    %3462 = vmatmul.bf16.gmra.mxu0 %v2155
    %v3463 = vpop.f32.mrf.mxu0
    %v3464 = vadd.f32 %v2975, %v3463
    %v3465 = vpop.f32.mrf.mxu0
    %v3466 = vadd.f32 %v2977, %v3465
    %3467 = vmatmul.bf16.gmra.mxu0 %v2158
    %v3468 = vpop.f32.mrf.mxu0
    %v3469 = vadd.f32 %v2980, %v3468
    %v3470 = vpop.f32.mrf.mxu0
    %v3471 = vadd.f32 %v2982, %v3470
    %3472 = vmatmul.bf16.gmra.mxu0 %v2161
    %v3473 = vpop.f32.mrf.mxu0
    %v3474 = vadd.f32 %v2985, %v3473
    %v3475 = vpop.f32.mrf.mxu0
    %v3476 = vadd.f32 %v2987, %v3475
    %3477 = vmatmul.bf16.gmra.mxu0 %v2164
    %v3478 = vpop.f32.mrf.mxu0
    %v3479 = vadd.f32 %v2990, %v3478
    %v3480 = vpop.f32.mrf.mxu0
    %v3481 = vadd.f32 %v2992, %v3480
    %3482 = vmatmul.bf16.gmra.mxu0 %v2167
    %v3483 = vpop.f32.mrf.mxu0
    %v3484 = vadd.f32 %v2995, %v3483
    %v3485 = vpop.f32.mrf.mxu0
    %v3486 = vadd.f32 %v2997, %v3485
    %3487 = vmatmul.bf16.gmra.mxu0 %v2170
    %v3488 = vpop.f32.mrf.mxu0
    %v3489 = vadd.f32 %v3000, %v3488
    %v3490 = vpop.f32.mrf.mxu0
    %v3491 = vadd.f32 %v3002, %v3490
    %3492 = vmatmul.bf16.gmra.mxu0 %v2173
    %v3493 = vpop.f32.mrf.mxu0
    %v3494 = vadd.f32 %v3005, %v3493
    %v3495 = vpop.f32.mrf.mxu0
    %v3496 = vadd.f32 %v3007, %v3495
    %3497 = vmatmul.bf16.gmra.mxu0 %v2176
    %v3498 = vpop.f32.mrf.mxu0
    %v3499 = vadd.f32 %v3010, %v3498
    %v3500 = vpop.f32.mrf.mxu0
    %v3501 = vadd.f32 %v3012, %v3500
    %3502 = vmatmul.bf16.gmra.mxu0 %v2179
    %v3503 = vpop.f32.mrf.mxu0
    %v3504 = vadd.f32 %v3015, %v3503
    %v3505 = vpop.f32.mrf.mxu0
    %v3506 = vadd.f32 %v3017, %v3505
    %3507 = vmatmul.bf16.gmra.mxu0 %v2182
    %v3508 = vpop.f32.mrf.mxu0
    %v3509 = vadd.f32 %v3020, %v3508
    %v3510 = vpop.f32.mrf.mxu0
    %v3511 = vadd.f32 %v3022, %v3510
    %3512 = vmatmul.bf16.gmra.mxu0 %v2185
    %v3513 = vpop.f32.mrf.mxu0
    %v3514 = vadd.f32 %v3025, %v3513
    %v3515 = vpop.f32.mrf.mxu0
    %v3516 = vadd.f32 %v3027, %v3515
    %3517 = vmatmul.bf16.gmra.mxu0 %v2188
    %v3518 = vpop.f32.mrf.mxu0
    %v3519 = vadd.f32 %v3030, %v3518
    %v3520 = vpop.f32.mrf.mxu0
    %v3521 = vadd.f32 %v3032, %v3520
    %3522 = vmatmul.bf16.gmra.mxu0 %v2191
    %v3523 = vpop.f32.mrf.mxu0
    %v3524 = vadd.f32 %v3035, %v3523
    %v3525 = vpop.f32.mrf.mxu0
    %v3526 = vadd.f32 %v3037, %v3525
    %3527 = vmatmul.bf16.gmra.mxu0 %v2194
    %v3528 = vpop.f32.mrf.mxu0
    %v3529 = vadd.f32 %v3040, %v3528
    %v3530 = vpop.f32.mrf.mxu0
    %v3531 = vadd.f32 %v3042, %v3530
    %3532 = vmatmul.bf16.gmra.mxu0 %v2197
    %v3533 = vpop.f32.mrf.mxu0
    %v3534 = vadd.f32 %v3045, %v3533
    %v3535 = vpop.f32.mrf.mxu0
    %v3536 = vadd.f32 %v3047, %v3535
    %3537 = vmatmul.bf16.gmra.mxu0 %v2200
    %v3538 = vpop.f32.mrf.mxu0
    %v3539 = vadd.f32 %v3050, %v3538
    %v3540 = vpop.f32.mrf.mxu0
    %v3541 = vadd.f32 %v3052, %v3540
    %3542 = vmatmul.bf16.gmra.mxu0 %v2203
    %v3543 = vpop.f32.mrf.mxu0
    %v3544 = vadd.f32 %v3055, %v3543
    %v3545 = vpop.f32.mrf.mxu0
    %v3546 = vadd.f32 %v3057, %v3545
    %3547 = vmatmul.bf16.gmra.mxu0 %v2206
    %v3548 = vpop.f32.mrf.mxu0
    %v3549 = vadd.f32 %v3060, %v3548
    %v3550 = vpop.f32.mrf.mxu0
    %v3551 = vadd.f32 %v3062, %v3550
    %3552 = vmatmul.bf16.gmra.mxu0 %v2209
    %v3553 = vpop.f32.mrf.mxu0
    %v3554 = vadd.f32 %v3065, %v3553
    %v3555 = vpop.f32.mrf.mxu0
    %v3556 = vadd.f32 %v3067, %v3555
    %3557 = vmatmul.bf16.gmra.mxu0 %v2212
    %v3558 = vpop.f32.mrf.mxu0
    %v3559 = vadd.f32 %v3070, %v3558
    %v3560 = vpop.f32.mrf.mxu0
    %v3561 = vadd.f32 %v3072, %v3560
    %3562 = vmatmul.bf16.gmra.mxu0 %v2215
    %v3563 = vpop.f32.mrf.mxu0
    %v3564 = vadd.f32 %v3075, %v3563
    %v3565 = vpop.f32.mrf.mxu0
    %v3566 = vadd.f32 %v3077, %v3565
    %3567 = vmatmul.bf16.gmra.mxu0 %v2218
    %v3568 = vpop.f32.mrf.mxu0
    %v3569 = vadd.f32 %v3080, %v3568
    %v3570 = vpop.f32.mrf.mxu0
    %v3571 = vadd.f32 %v3082, %v3570
    %3572 = vmatmul.bf16.gmra.mxu0 %v2221
    %v3573 = vpop.f32.mrf.mxu0
    %v3574 = vadd.f32 %v3085, %v3573
    %v3575 = vpop.f32.mrf.mxu0
    %v3576 = vadd.f32 %v3087, %v3575
    %3577 = vmatmul.bf16.gmra.mxu0 %v2224
    %v3578 = vpop.f32.mrf.mxu0
    %v3579 = vadd.f32 %v3090, %v3578
    %v3580 = vpop.f32.mrf.mxu0
    %v3581 = vadd.f32 %v3092, %v3580
    %3582 = vmatmul.bf16.gmra.mxu0 %v2227
    %v3583 = vpop.f32.mrf.mxu0
    %v3584 = vadd.f32 %v3095, %v3583
    %v3585 = vpop.f32.mrf.mxu0
    %v3586 = vadd.f32 %v3097, %v3585
    %3587 = vmatmul.bf16.gmra.mxu0 %v2230
    %v3588 = vpop.f32.mrf.mxu0
    %v3589 = vadd.f32 %v3100, %v3588
    %v3590 = vpop.f32.mrf.mxu0
    %v3591 = vadd.f32 %v3102, %v3590
    %3592 = vmatmul.bf16.gmra.mxu0 %v2233
    %v3593 = vpop.f32.mrf.mxu0
    %v3594 = vadd.f32 %v3105, %v3593
    %v3595 = vpop.f32.mrf.mxu0
    %v3596 = vadd.f32 %v3107, %v3595
    %3597 = vmatmul.bf16.gmra.mxu0 %v2236
    %v3598 = vpop.f32.mrf.mxu0
    %v3599 = vadd.f32 %v3110, %v3598
    %v3600 = vpop.f32.mrf.mxu0
    %v3601 = vadd.f32 %v3112, %v3600
    %3602 = vmatmul.bf16.gmra.mxu0 %v2239
    %v3603 = vpop.f32.mrf.mxu0
    %v3604 = vadd.f32 %v3115, %v3603
    %v3605 = vpop.f32.mrf.mxu0
    %v3606 = vadd.f32 %v3117, %v3605
    %3607 = vmatmul.bf16.gmra.mxu0 %v2242
    %v3608 = vpop.f32.mrf.mxu0
    %v3609 = vadd.f32 %v3120, %v3608
    %v3610 = vpop.f32.mrf.mxu0
    %v3611 = vadd.f32 %v3122, %v3610
    %3612 = vmatmul.bf16.gmra.mxu0 %v2245
    %v3613 = vpop.f32.mrf.mxu0
    %v3614 = vadd.f32 %v3125, %v3613
    %v3615 = vpop.f32.mrf.mxu0
    %v3616 = vadd.f32 %v3127, %v3615
    %3617 = vmatmul.bf16.gmra.mxu0 %v2248
    %v3618 = vpop.f32.mrf.mxu0
    %v3619 = vadd.f32 %v3130, %v3618
    %v3620 = vpop.f32.mrf.mxu0
    %v3621 = vadd.f32 %v3132, %v3620
    %3622 = vmatmul.bf16.gmra.mxu0 %v2251
    %v3623 = vpop.f32.mrf.mxu0
    %v3624 = vadd.f32 %v3135, %v3623
    %v3625 = vpop.f32.mrf.mxu0
    %v3626 = vadd.f32 %v3137, %v3625
    %3627 = vmatmul.bf16.gmra.mxu0 %v2254
    %v3628 = vpop.f32.mrf.mxu0
    %v3629 = vadd.f32 %v3140, %v3628
    %v3630 = vpop.f32.mrf.mxu0
    %v3631 = vadd.f32 %v3142, %v3630
    %3632 = vmatmul.bf16.gmra.mxu0 %v2257
    %v3633 = vpop.f32.mrf.mxu0
    %v3634 = vadd.f32 %v3145, %v3633
    %v3635 = vpop.f32.mrf.mxu0
    %v3636 = vadd.f32 %v3147, %v3635
    %3637 = vmatmul.bf16.gmra.mxu0 %v2260
    %v3638 = vpop.f32.mrf.mxu0
    %v3639 = vadd.f32 %v3150, %v3638
    %v3640 = vpop.f32.mrf.mxu0
    %v3641 = vadd.f32 %v3152, %v3640
    %3642 = vmatmul.bf16.gmra.mxu0 %v2263
    %v3643 = vpop.f32.mrf.mxu0
    %v3644 = vadd.f32 %v3155, %v3643
    %v3645 = vpop.f32.mrf.mxu0
    %v3646 = vadd.f32 %v3157, %v3645
    %3647 = vmatmul.bf16.gmra.mxu0 %v2266
    %v3648 = vpop.f32.mrf.mxu0
    %v3649 = vadd.f32 %v3160, %v3648
    %v3650 = vpop.f32.mrf.mxu0
    %v3651 = vadd.f32 %v3162, %v3650
    %3652 = vmatmul.bf16.gmra.mxu0 %v2269
    %v3653 = vpop.f32.mrf.mxu0
    %v3654 = vadd.f32 %v3165, %v3653
    %v3655 = vpop.f32.mrf.mxu0
    %v3656 = vadd.f32 %v3167, %v3655
    %3657 = vmatmul.bf16.gmra.mxu0 %v2272
    %v3658 = vpop.f32.mrf.mxu0
    %v3659 = vadd.f32 %v3170, %v3658
    %v3660 = vpop.f32.mrf.mxu0
    %v3661 = vadd.f32 %v3172, %v3660
    %3662 = vmatmul.bf16.gmra.mxu0 %v2275
    %v3663 = vpop.f32.mrf.mxu0
    %v3664 = vadd.f32 %v3175, %v3663
    %v3665 = vpop.f32.mrf.mxu0
    %v3666 = vadd.f32 %v3177, %v3665
    %3667 = vmatmul.bf16.gmra.mxu0 %v2278
    %v3668 = vpop.f32.mrf.mxu0
    %v3669 = vadd.f32 %v3180, %v3668
    %v3670 = vpop.f32.mrf.mxu0
    %v3671 = vadd.f32 %v3182, %v3670
    %3672 = vmatmul.bf16.gmra.mxu0 %v2281
    %v3673 = vpop.f32.mrf.mxu0
    %v3674 = vadd.f32 %v3185, %v3673
    %v3675 = vpop.f32.mrf.mxu0
    %v3676 = vadd.f32 %v3187, %v3675
    %3677 = vmatmul.bf16.gmra.mxu0 %v2284
    %v3678 = vpop.f32.mrf.mxu0
    %v3679 = vadd.f32 %v3190, %v3678
    %v3680 = vpop.f32.mrf.mxu0
    %v3681 = vadd.f32 %v3192, %v3680
    %3682 = vmatmul.bf16.gmra.mxu0 %v2287
    %v3683 = vpop.f32.mrf.mxu0
    %v3684 = vadd.f32 %v3195, %v3683
    %v3685 = vpop.f32.mrf.mxu0
    %v3686 = vadd.f32 %v3197, %v3685
    %3687 = vmatmul.bf16.gmra.mxu0 %v2290
    %v3688 = vpop.f32.mrf.mxu0
    %v3689 = vadd.f32 %v3200, %v3688
    %v3690 = vpop.f32.mrf.mxu0
    %v3691 = vadd.f32 %v3202, %v3690
    %3692 = vmatmul.bf16.gmra.mxu0 %v2293
    %v3693 = vpop.f32.mrf.mxu0
    %v3694 = vadd.f32 %v3205, %v3693
    %v3695 = vpop.f32.mrf.mxu0
    %v3696 = vadd.f32 %v3207, %v3695
    %3697 = vmatmul.bf16.gmra.mxu0 %v2296
    %v3698 = vpop.f32.mrf.mxu0
    %v3699 = vadd.f32 %v3210, %v3698
    %v3700 = vpop.f32.mrf.mxu0
    %v3701 = vadd.f32 %v3212, %v3700
    %3702 = vmatmul.bf16.gmra.mxu0 %v2299
    %v3703 = vpop.f32.mrf.mxu0
    %v3704 = vadd.f32 %v3215, %v3703
    %v3705 = vpop.f32.mrf.mxu0
    %v3706 = vadd.f32 %v3217, %v3705
    %3707 = vmatmul.bf16.gmra.mxu0 %v2302
    %v3708 = vpop.f32.mrf.mxu0
    %v3709 = vadd.f32 %v3220, %v3708
    %v3710 = vpop.f32.mrf.mxu0
    %v3711 = vadd.f32 %v3222, %v3710
    %3712 = vmatmul.bf16.gmra.mxu0 %v2305
    %v3713 = vpop.f32.mrf.mxu0
    %v3714 = vadd.f32 %v3225, %v3713
    %v3715 = vpop.f32.mrf.mxu0
    %v3716 = vadd.f32 %v3227, %v3715
    %3717 = vmatmul.bf16.gmra.mxu0 %v2308
    %v3718 = vpop.f32.mrf.mxu0
    %v3719 = vadd.f32 %v3230, %v3718
    %v3720 = vpop.f32.mrf.mxu0
    %v3721 = vadd.f32 %v3232, %v3720
    %3722 = vmatmul.bf16.gmra.mxu0 %v2311
    %v3723 = vpop.f32.mrf.mxu0
    %v3724 = vadd.f32 %v3235, %v3723
    %v3725 = vpop.f32.mrf.mxu0
    %v3726 = vadd.f32 %v3237, %v3725
    %3727 = vmatmul.bf16.gmra.mxu0 %v2314
    %v3728 = vpop.f32.mrf.mxu0
    %v3729 = vadd.f32 %v3240, %v3728
    %v3730 = vpop.f32.mrf.mxu0
    %v3731 = vadd.f32 %v3242, %v3730
    %3732 = vmatmul.bf16.gmra.mxu0 %v2317
    %v3733 = vpop.f32.mrf.mxu0
    %v3734 = vadd.f32 %v3245, %v3733
    %v3735 = vpop.f32.mrf.mxu0
    %v3736 = vadd.f32 %v3247, %v3735
    %3737 = vmatmul.bf16.gmra.mxu0 %v2320
    %v3738 = vpop.f32.mrf.mxu0
    %v3739 = vadd.f32 %v3250, %v3738
    %v3740 = vpop.f32.mrf.mxu0
    %v3741 = vadd.f32 %v3252, %v3740
    %3742 = vmatmul.bf16.gmra.mxu0 %v2323
    %v3743 = vpop.f32.mrf.mxu0
    %v3744 = vadd.f32 %v3255, %v3743
    %v3745 = vpop.f32.mrf.mxu0
    %v3746 = vadd.f32 %v3257, %v3745
    %3747 = vmatmul.bf16.gmra.mxu0 %v2326
    %v3748 = vpop.f32.mrf.mxu0
    %v3749 = vadd.f32 %v3260, %v3748
    %v3750 = vpop.f32.mrf.mxu0
    %v3751 = vadd.f32 %v3262, %v3750
    %3752 = vmatmul.bf16.gmra.mxu0 %v2329
    %v3753 = vpop.f32.mrf.mxu0
    %v3754 = vadd.f32 %v3265, %v3753
    %v3755 = vpop.f32.mrf.mxu0
    %v3756 = vadd.f32 %v3267, %v3755
    %3757 = vmatmul.bf16.gmra.mxu0 %v2332
    %v3758 = vpop.f32.mrf.mxu0
    %v3759 = vadd.f32 %v3270, %v3758
    %v3760 = vpop.f32.mrf.mxu0
    %v3761 = vadd.f32 %v3272, %v3760
    %3762 = vmatmul.bf16.gmra.mxu0 %v2335
    %v3763 = vpop.f32.mrf.mxu0
    %v3764 = vadd.f32 %v3275, %v3763
    %v3765 = vpop.f32.mrf.mxu0
    %v3766 = vadd.f32 %v3277, %v3765
    %3767 = vmatmul.bf16.gmra.mxu0 %v2338
    %v3768 = vpop.f32.mrf.mxu0
    %v3769 = vadd.f32 %v3280, %v3768
    %v3770 = vpop.f32.mrf.mxu0
    %v3771 = vadd.f32 %v3282, %v3770
    %3772 = vmatmul.bf16.gmra.mxu0 %v2341
    %v3773 = vpop.f32.mrf.mxu0
    %v3774 = vadd.f32 %v3285, %v3773
    %v3775 = vpop.f32.mrf.mxu0
    %v3776 = vadd.f32 %v3287, %v3775
    %3777 = vmatmul.bf16.gmra.mxu0 %v2344
    %v3778 = vpop.f32.mrf.mxu0
    %v3779 = vadd.f32 %v3290, %v3778
    %v3780 = vpop.f32.mrf.mxu0
    %v3781 = vadd.f32 %v3292, %v3780
    %3782 = vmatmul.bf16.gmra.mxu0 %v2347
    %v3783 = vpop.f32.mrf.mxu0
    %v3784 = vadd.f32 %v3295, %v3783
    %v3785 = vpop.f32.mrf.mxu0
    %v3786 = vadd.f32 %v3297, %v3785
    %3787 = vmatmul.bf16.gmra.mxu0 %v2350
    %v3788 = vpop.f32.mrf.mxu0
    %v3789 = vadd.f32 %v3300, %v3788
    %v3790 = vpop.f32.mrf.mxu0
    %v3791 = vadd.f32 %v3302, %v3790
    %3792 = vmatmul.bf16.gmra.mxu0 %v2353
    %v3793 = vpop.f32.mrf.mxu0
    %v3794 = vadd.f32 %v3305, %v3793
    %v3795 = vpop.f32.mrf.mxu0
    %v3796 = vadd.f32 %v3307, %v3795
    %3797 = vmatmul.bf16.gmra.mxu0 %v2356
    %v3798 = vpop.f32.mrf.mxu0
    %v3799 = vadd.f32 %v3310, %v3798
    %v3800 = vpop.f32.mrf.mxu0
    %v3801 = vadd.f32 %v3312, %v3800
    %3802 = vmatmul.bf16.gmra.mxu0 %v2359
    %v3803 = vpop.f32.mrf.mxu0
    %v3804 = vadd.f32 %v3315, %v3803
    %v3805 = vpop.f32.mrf.mxu0
    %v3806 = vadd.f32 %v3317, %v3805
    %3807 = vmatmul.bf16.gmra.mxu0 %v2362
    %v3808 = vpop.f32.mrf.mxu0
    %v3809 = vadd.f32 %v3320, %v3808
    %v3810 = vpop.f32.mrf.mxu0
    %v3811 = vadd.f32 %v3322, %v3810
    %3812 = vmatmul.bf16.gmra.mxu0 %v2365
    %v3813 = vpop.f32.mrf.mxu0
    %v3814 = vadd.f32 %v3325, %v3813
    %v3815 = vpop.f32.mrf.mxu0
    %v3816 = vadd.f32 %v3327, %v3815
    %3817 = vmatmul.bf16.gmra.mxu0 %v2368
    %v3818 = vpop.f32.mrf.mxu0
    %v3819 = vadd.f32 %v3330, %v3818
    %v3820 = vpop.f32.mrf.mxu0
    %v3821 = vadd.f32 %v3332, %v3820
    %3822 = vmatmul.bf16.gmra.mxu0 %v2371
    %v3823 = vpop.f32.mrf.mxu0
    %v3824 = vadd.f32 %v3335, %v3823
    %v3825 = vpop.f32.mrf.mxu0
    %v3826 = vadd.f32 %v3337, %v3825
    %3827 = vmatmul.bf16.gmra.mxu0 %v2374
    %v3828 = vpop.f32.mrf.mxu0
    %v3829 = vadd.f32 %v3340, %v3828
    %v3830 = vpop.f32.mrf.mxu0
    %v3831 = vadd.f32 %v3342, %v3830
    %3832 = vmatmul.bf16.gmra.mxu0 %v2377
    %v3833 = vpop.f32.mrf.mxu0
    %v3834 = vadd.f32 %v3345, %v3833
    %v3835 = vpop.f32.mrf.mxu0
    %v3836 = vadd.f32 %v3347, %v3835
    %3837 = vmatmul.bf16.gmra.mxu0 %v2380
    %v3838 = vpop.f32.mrf.mxu0
    %v3839 = vadd.f32 %v3350, %v3838
    %v3840 = vpop.f32.mrf.mxu0
    %v3841 = vadd.f32 %v3352, %v3840
    %3842 = vmatmul.bf16.gmra.mxu0 %v2383
    %v3843 = vpop.f32.mrf.mxu0
    %v3844 = vadd.f32 %v3355, %v3843
    %v3845 = vpop.f32.mrf.mxu0
    %v3846 = vadd.f32 %v3357, %v3845
    %3847 = vmatmul.bf16.gmra.mxu0 %v2386
    %v3848 = vpop.f32.mrf.mxu0
    %v3849 = vadd.f32 %v3360, %v3848
    %v3850 = vpop.f32.mrf.mxu0
    %v3851 = vadd.f32 %v3362, %v3850
    %3852 = vmatmul.bf16.gmra.mxu0 %v2389
    %v3853 = vpop.f32.mrf.mxu0
    %v3854 = vadd.f32 %v3365, %v3853
    %v3855 = vpop.f32.mrf.mxu0
    %v3856 = vadd.f32 %v3367, %v3855
    %3857 = vdwg.mxu0
    %v3858 = vpack.c.bf16 %v3379, %v3379
    %v3859 = vpack.c.bf16 %v3381, %v3381
    %v3860 = vpack.c.bf16 %v3384, %v3384
    %v3861 = vpack.c.bf16 %v3386, %v3386
    %v3862 = vpack.c.bf16 %v3389, %v3389
    %v3863 = vpack.c.bf16 %v3391, %v3391
    %v3864 = vpack.c.bf16 %v3394, %v3394
    %v3865 = vpack.c.bf16 %v3396, %v3396
    %v3866 = vpack.c.bf16 %v3399, %v3399
    %v3867 = vpack.c.bf16 %v3401, %v3401
    %v3868 = vpack.c.bf16 %v3404, %v3404
    %v3869 = vpack.c.bf16 %v3406, %v3406
    %v3870 = vpack.c.bf16 %v3409, %v3409
    %v3871 = vpack.c.bf16 %v3411, %v3411
    %v3872 = vpack.c.bf16 %v3414, %v3414
    %v3873 = vpack.c.bf16 %v3416, %v3416
    %v3874 = vpack.c.bf16 %v3419, %v3419
    %v3875 = vpack.c.bf16 %v3421, %v3421
    %v3876 = vpack.c.bf16 %v3424, %v3424
    %v3877 = vpack.c.bf16 %v3426, %v3426
    %v3878 = vpack.c.bf16 %v3429, %v3429
    %v3879 = vpack.c.bf16 %v3431, %v3431
    %v3880 = vpack.c.bf16 %v3434, %v3434
    %v3881 = vpack.c.bf16 %v3436, %v3436
    %v3882 = vpack.c.bf16 %v3439, %v3439
    %v3883 = vpack.c.bf16 %v3441, %v3441
    %v3884 = vpack.c.bf16 %v3444, %v3444
    %v3885 = vpack.c.bf16 %v3446, %v3446
    %v3886 = vpack.c.bf16 %v3449, %v3449
    %v3887 = vpack.c.bf16 %v3451, %v3451
    %v3888 = vpack.c.bf16 %v3454, %v3454
    %v3889 = vpack.c.bf16 %v3456, %v3456
    %v3890 = vpack.c.bf16 %v3459, %v3459
    %v3891 = vpack.c.bf16 %v3461, %v3461
    %v3892 = vpack.c.bf16 %v3464, %v3464
    %v3893 = vpack.c.bf16 %v3466, %v3466
    %v3894 = vpack.c.bf16 %v3469, %v3469
    %v3895 = vpack.c.bf16 %v3471, %v3471
    %v3896 = vpack.c.bf16 %v3474, %v3474
    %v3897 = vpack.c.bf16 %v3476, %v3476
    %v3898 = vpack.c.bf16 %v3479, %v3479
    %v3899 = vpack.c.bf16 %v3481, %v3481
    %v3900 = vpack.c.bf16 %v3484, %v3484
    %v3901 = vpack.c.bf16 %v3486, %v3486
    %v3902 = vpack.c.bf16 %v3489, %v3489
    %v3903 = vpack.c.bf16 %v3491, %v3491
    %v3904 = vpack.c.bf16 %v3494, %v3494
    %v3905 = vpack.c.bf16 %v3496, %v3496
    %v3906 = vpack.c.bf16 %v3499, %v3499
    %v3907 = vpack.c.bf16 %v3501, %v3501
    %v3908 = vpack.c.bf16 %v3504, %v3504
    %v3909 = vpack.c.bf16 %v3506, %v3506
    %v3910 = vpack.c.bf16 %v3509, %v3509
    %v3911 = vpack.c.bf16 %v3511, %v3511
    %v3912 = vpack.c.bf16 %v3514, %v3514
    %v3913 = vpack.c.bf16 %v3516, %v3516
    %v3914 = vpack.c.bf16 %v3519, %v3519
    %v3915 = vpack.c.bf16 %v3521, %v3521
    %v3916 = vpack.c.bf16 %v3524, %v3524
    %v3917 = vpack.c.bf16 %v3526, %v3526
    %v3918 = vpack.c.bf16 %v3529, %v3529
    %v3919 = vpack.c.bf16 %v3531, %v3531
    %v3920 = vpack.c.bf16 %v3534, %v3534
    %v3921 = vpack.c.bf16 %v3536, %v3536
    %v3922 = vpack.c.bf16 %v3539, %v3539
    %v3923 = vpack.c.bf16 %v3541, %v3541
    %v3924 = vpack.c.bf16 %v3544, %v3544
    %v3925 = vpack.c.bf16 %v3546, %v3546
    %v3926 = vpack.c.bf16 %v3549, %v3549
    %v3927 = vpack.c.bf16 %v3551, %v3551
    %v3928 = vpack.c.bf16 %v3554, %v3554
    %v3929 = vpack.c.bf16 %v3556, %v3556
    %v3930 = vpack.c.bf16 %v3559, %v3559
    %v3931 = vpack.c.bf16 %v3561, %v3561
    %v3932 = vpack.c.bf16 %v3564, %v3564
    %v3933 = vpack.c.bf16 %v3566, %v3566
    %v3934 = vpack.c.bf16 %v3569, %v3569
    %v3935 = vpack.c.bf16 %v3571, %v3571
    %v3936 = vpack.c.bf16 %v3574, %v3574
    %v3937 = vpack.c.bf16 %v3576, %v3576
    %v3938 = vpack.c.bf16 %v3579, %v3579
    %v3939 = vpack.c.bf16 %v3581, %v3581
    %v3940 = vpack.c.bf16 %v3584, %v3584
    %v3941 = vpack.c.bf16 %v3586, %v3586
    %v3942 = vpack.c.bf16 %v3589, %v3589
    %v3943 = vpack.c.bf16 %v3591, %v3591
    %v3944 = vpack.c.bf16 %v3594, %v3594
    %v3945 = vpack.c.bf16 %v3596, %v3596
    %v3946 = vpack.c.bf16 %v3599, %v3599
    %v3947 = vpack.c.bf16 %v3601, %v3601
    %v3948 = vpack.c.bf16 %v3604, %v3604
    %v3949 = vpack.c.bf16 %v3606, %v3606
    %v3950 = vpack.c.bf16 %v3609, %v3609
    %v3951 = vpack.c.bf16 %v3611, %v3611
    %v3952 = vpack.c.bf16 %v3614, %v3614
    %v3953 = vpack.c.bf16 %v3616, %v3616
    %v3954 = vpack.c.bf16 %v3619, %v3619
    %v3955 = vpack.c.bf16 %v3621, %v3621
    %v3956 = vpack.c.bf16 %v3624, %v3624
    %v3957 = vpack.c.bf16 %v3626, %v3626
    %v3958 = vpack.c.bf16 %v3629, %v3629
    %v3959 = vpack.c.bf16 %v3631, %v3631
    %v3960 = vpack.c.bf16 %v3634, %v3634
    %v3961 = vpack.c.bf16 %v3636, %v3636
    %v3962 = vpack.c.bf16 %v3639, %v3639
    %v3963 = vpack.c.bf16 %v3641, %v3641
    %v3964 = vpack.c.bf16 %v3644, %v3644
    %v3965 = vpack.c.bf16 %v3646, %v3646
    %v3966 = vpack.c.bf16 %v3649, %v3649
    %v3967 = vpack.c.bf16 %v3651, %v3651
    %v3968 = vpack.c.bf16 %v3654, %v3654
    %v3969 = vpack.c.bf16 %v3656, %v3656
    %v3970 = vpack.c.bf16 %v3659, %v3659
    %v3971 = vpack.c.bf16 %v3661, %v3661
    %v3972 = vpack.c.bf16 %v3664, %v3664
    %v3973 = vpack.c.bf16 %v3666, %v3666
    %v3974 = vpack.c.bf16 %v3669, %v3669
    %v3975 = vpack.c.bf16 %v3671, %v3671
    %v3976 = vpack.c.bf16 %v3674, %v3674
    %v3977 = vpack.c.bf16 %v3676, %v3676
    %v3978 = vpack.c.bf16 %v3679, %v3679
    %v3979 = vpack.c.bf16 %v3681, %v3681
    %v3980 = vpack.c.bf16 %v3684, %v3684
    %v3981 = vpack.c.bf16 %v3686, %v3686
    %v3982 = vpack.c.bf16 %v3689, %v3689
    %v3983 = vpack.c.bf16 %v3691, %v3691
    %v3984 = vpack.c.bf16 %v3694, %v3694
    %v3985 = vpack.c.bf16 %v3696, %v3696
    %v3986 = vpack.c.bf16 %v3699, %v3699
    %v3987 = vpack.c.bf16 %v3701, %v3701
    %v3988 = vpack.c.bf16 %v3704, %v3704
    %v3989 = vpack.c.bf16 %v3706, %v3706
    %v3990 = vpack.c.bf16 %v3709, %v3709
    %v3991 = vpack.c.bf16 %v3711, %v3711
    %v3992 = vpack.c.bf16 %v3714, %v3714
    %v3993 = vpack.c.bf16 %v3716, %v3716
    %v3994 = vpack.c.bf16 %v3719, %v3719
    %v3995 = vpack.c.bf16 %v3721, %v3721
    %v3996 = vpack.c.bf16 %v3724, %v3724
    %v3997 = vpack.c.bf16 %v3726, %v3726
    %v3998 = vpack.c.bf16 %v3729, %v3729
    %v3999 = vpack.c.bf16 %v3731, %v3731
    %v4000 = vpack.c.bf16 %v3734, %v3734
    %v4001 = vpack.c.bf16 %v3736, %v3736
    %v4002 = vpack.c.bf16 %v3739, %v3739
    %v4003 = vpack.c.bf16 %v3741, %v3741
    %v4004 = vpack.c.bf16 %v3744, %v3744
    %v4005 = vpack.c.bf16 %v3746, %v3746
    %v4006 = vpack.c.bf16 %v3749, %v3749
    %v4007 = vpack.c.bf16 %v3751, %v3751
    %v4008 = vpack.c.bf16 %v3754, %v3754
    %v4009 = vpack.c.bf16 %v3756, %v3756
    %v4010 = vpack.c.bf16 %v3759, %v3759
    %v4011 = vpack.c.bf16 %v3761, %v3761
    %v4012 = vpack.c.bf16 %v3764, %v3764
    %v4013 = vpack.c.bf16 %v3766, %v3766
    %v4014 = vpack.c.bf16 %v3769, %v3769
    %v4015 = vpack.c.bf16 %v3771, %v3771
    %v4016 = vpack.c.bf16 %v3774, %v3774
    %v4017 = vpack.c.bf16 %v3776, %v3776
    %v4018 = vpack.c.bf16 %v3779, %v3779
    %v4019 = vpack.c.bf16 %v3781, %v3781
    %v4020 = vpack.c.bf16 %v3784, %v3784
    %v4021 = vpack.c.bf16 %v3786, %v3786
    %v4022 = vpack.c.bf16 %v3789, %v3789
    %v4023 = vpack.c.bf16 %v3791, %v3791
    %v4024 = vpack.c.bf16 %v3794, %v3794
    %v4025 = vpack.c.bf16 %v3796, %v3796
    %v4026 = vpack.c.bf16 %v3799, %v3799
    %v4027 = vpack.c.bf16 %v3801, %v3801
    %v4028 = vpack.c.bf16 %v3804, %v3804
    %v4029 = vpack.c.bf16 %v3806, %v3806
    %v4030 = vpack.c.bf16 %v3809, %v3809
    %v4031 = vpack.c.bf16 %v3811, %v3811
    %v4032 = vpack.c.bf16 %v3814, %v3814
    %v4033 = vpack.c.bf16 %v3816, %v3816
    %v4034 = vpack.c.bf16 %v3819, %v3819
    %v4035 = vpack.c.bf16 %v3821, %v3821
    %v4036 = vpack.c.bf16 %v3824, %v3824
    %v4037 = vpack.c.bf16 %v3826, %v3826
    %v4038 = vpack.c.bf16 %v3829, %v3829
    %v4039 = vpack.c.bf16 %v3831, %v3831
    %v4040 = vpack.c.bf16 %v3834, %v3834
    %v4041 = vpack.c.bf16 %v3836, %v3836
    %v4042 = vpack.c.bf16 %v3839, %v3839
    %v4043 = vpack.c.bf16 %v3841, %v3841
    %v4044 = vpack.c.bf16 %v3844, %v3844
    %v4045 = vpack.c.bf16 %v3846, %v3846
    %v4046 = vpack.c.bf16 %v3849, %v3849
    %v4047 = vpack.c.bf16 %v3851, %v3851
    %v4048 = vpack.c.bf16 %v3854, %v3854
    %v4049 = vpack.c.bf16 %v3856, %v3856
    %4050 = vst [vmem:[#allocation2] sm:$0xf] %v3858
    %4051 = vst [vmem:[#allocation2 + $0x4] sm:$0xf] %v3859
    %4052 = vst [vmem:[#allocation2 + $0x8] sm:$0xf] %v3860
    %4053 = vst [vmem:[#allocation2 + $0xc] sm:$0xf] %v3861
    %4054 = vst [vmem:[#allocation2 + $0x10] sm:$0xf] %v3862
    %4055 = vst [vmem:[#allocation2 + $0x14] sm:$0xf] %v3863
    %4056 = vst [vmem:[#allocation2 + $0x18] sm:$0xf] %v3864
    %4057 = vst [vmem:[#allocation2 + $0x1c] sm:$0xf] %v3865
    %4058 = vst [vmem:[#allocation2 + $0x20] sm:$0xf] %v3866
    %4059 = vst [vmem:[#allocation2 + $0x24] sm:$0xf] %v3867
    %4060 = vst [vmem:[#allocation2 + $0x28] sm:$0xf] %v3868
    %4061 = vst [vmem:[#allocation2 + $0x2c] sm:$0xf] %v3869
    %4062 = vst [vmem:[#allocation2 + $0x30] sm:$0xf] %v3870
    %4063 = vst [vmem:[#allocation2 + $0x34] sm:$0xf] %v3871
    %4064 = vst [vmem:[#allocation2 + $0x38] sm:$0xf] %v3872
    %4065 = vst [vmem:[#allocation2 + $0x3c] sm:$0xf] %v3873
    %4066 = vst [vmem:[#allocation2 + $0x40] sm:$0xf] %v3874
    %4067 = vst [vmem:[#allocation2 + $0x44] sm:$0xf] %v3875
    %4068 = vst [vmem:[#allocation2 + $0x48] sm:$0xf] %v3876
    %4069 = vst [vmem:[#allocation2 + $0x4c] sm:$0xf] %v3877
    %4070 = vst [vmem:[#allocation2 + $0x50] sm:$0xf] %v3878
    %4071 = vst [vmem:[#allocation2 + $0x54] sm:$0xf] %v3879
    %4072 = vst [vmem:[#allocation2 + $0x58] sm:$0xf] %v3880
    %4073 = vst [vmem:[#allocation2 + $0x5c] sm:$0xf] %v3881
    %4074 = vst [vmem:[#allocation2 + $0x60] sm:$0xf] %v3882
    %4075 = vst [vmem:[#allocation2 + $0x64] sm:$0xf] %v3883
    %4076 = vst [vmem:[#allocation2 + $0x68] sm:$0xf] %v3884
    %4077 = vst [vmem:[#allocation2 + $0x6c] sm:$0xf] %v3885
    %4078 = vst [vmem:[#allocation2 + $0x70] sm:$0xf] %v3886
    %4079 = vst [vmem:[#allocation2 + $0x74] sm:$0xf] %v3887
    %4080 = vst [vmem:[#allocation2 + $0x78] sm:$0xf] %v3888
    %4081 = vst [vmem:[#allocation2 + $0x7c] sm:$0xf] %v3889
    %4082 = vst [vmem:[#allocation2 + $0x80] sm:$0xf] %v3890
    %4083 = vst [vmem:[#allocation2 + $0x84] sm:$0xf] %v3891
    %4084 = vst [vmem:[#allocation2 + $0x88] sm:$0xf] %v3892
    %4085 = vst [vmem:[#allocation2 + $0x8c] sm:$0xf] %v3893
    %4086 = vst [vmem:[#allocation2 + $0x90] sm:$0xf] %v3894
    %4087 = vst [vmem:[#allocation2 + $0x94] sm:$0xf] %v3895
    %4088 = vst [vmem:[#allocation2 + $0x98] sm:$0xf] %v3896
    %4089 = vst [vmem:[#allocation2 + $0x9c] sm:$0xf] %v3897
    %4090 = vst [vmem:[#allocation2 + $0xa0] sm:$0xf] %v3898
    %4091 = vst [vmem:[#allocation2 + $0xa4] sm:$0xf] %v3899
    %4092 = vst [vmem:[#allocation2 + $0xa8] sm:$0xf] %v3900
    %4093 = vst [vmem:[#allocation2 + $0xac] sm:$0xf] %v3901
    %4094 = vst [vmem:[#allocation2 + $0xb0] sm:$0xf] %v3902
    %4095 = vst [vmem:[#allocation2 + $0xb4] sm:$0xf] %v3903
    %4096 = vst [vmem:[#allocation2 + $0xb8] sm:$0xf] %v3904
    %4097 = vst [vmem:[#allocation2 + $0xbc] sm:$0xf] %v3905
    %4098 = vst [vmem:[#allocation2 + $0xc0] sm:$0xf] %v3906
    %4099 = vst [vmem:[#allocation2 + $0xc4] sm:$0xf] %v3907
    %4100 = vst [vmem:[#allocation2 + $0xc8] sm:$0xf] %v3908
    %4101 = vst [vmem:[#allocation2 + $0xcc] sm:$0xf] %v3909
    %4102 = vst [vmem:[#allocation2 + $0xd0] sm:$0xf] %v3910
    %4103 = vst [vmem:[#allocation2 + $0xd4] sm:$0xf] %v3911
    %4104 = vst [vmem:[#allocation2 + $0xd8] sm:$0xf] %v3912
    %4105 = vst [vmem:[#allocation2 + $0xdc] sm:$0xf] %v3913
    %4106 = vst [vmem:[#allocation2 + $0xe0] sm:$0xf] %v3914
    %4107 = vst [vmem:[#allocation2 + $0xe4] sm:$0xf] %v3915
    %4108 = vst [vmem:[#allocation2 + $0xe8] sm:$0xf] %v3916
    %4109 = vst [vmem:[#allocation2 + $0xec] sm:$0xf] %v3917
    %4110 = vst [vmem:[#allocation2 + $0xf0] sm:$0xf] %v3918
    %4111 = vst [vmem:[#allocation2 + $0xf4] sm:$0xf] %v3919
    %4112 = vst [vmem:[#allocation2 + $0xf8] sm:$0xf] %v3920
    %4113 = vst [vmem:[#allocation2 + $0xfc] sm:$0xf] %v3921
    %4114 = vst [vmem:[#allocation2 + $0x100] sm:$0xf] %v3922
    %4115 = vst [vmem:[#allocation2 + $0x104] sm:$0xf] %v3923
    %4116 = vst [vmem:[#allocation2 + $0x108] sm:$0xf] %v3924
    %4117 = vst [vmem:[#allocation2 + $0x10c] sm:$0xf] %v3925
    %4118 = vst [vmem:[#allocation2 + $0x110] sm:$0xf] %v3926
    %4119 = vst [vmem:[#allocation2 + $0x114] sm:$0xf] %v3927
    %4120 = vst [vmem:[#allocation2 + $0x118] sm:$0xf] %v3928
    %4121 = vst [vmem:[#allocation2 + $0x11c] sm:$0xf] %v3929
    %4122 = vst [vmem:[#allocation2 + $0x120] sm:$0xf] %v3930
    %4123 = vst [vmem:[#allocation2 + $0x124] sm:$0xf] %v3931
    %4124 = vst [vmem:[#allocation2 + $0x128] sm:$0xf] %v3932
    %4125 = vst [vmem:[#allocation2 + $0x12c] sm:$0xf] %v3933
    %4126 = vst [vmem:[#allocation2 + $0x130] sm:$0xf] %v3934
    %4127 = vst [vmem:[#allocation2 + $0x134] sm:$0xf] %v3935
    %4128 = vst [vmem:[#allocation2 + $0x138] sm:$0xf] %v3936
    %4129 = vst [vmem:[#allocation2 + $0x13c] sm:$0xf] %v3937
    %4130 = vst [vmem:[#allocation2 + $0x140] sm:$0xf] %v3938
    %4131 = vst [vmem:[#allocation2 + $0x144] sm:$0xf] %v3939
    %4132 = vst [vmem:[#allocation2 + $0x148] sm:$0xf] %v3940
    %4133 = vst [vmem:[#allocation2 + $0x14c] sm:$0xf] %v3941
    %4134 = vst [vmem:[#allocation2 + $0x150] sm:$0xf] %v3942
    %4135 = vst [vmem:[#allocation2 + $0x154] sm:$0xf] %v3943
    %4136 = vst [vmem:[#allocation2 + $0x158] sm:$0xf] %v3944
    %4137 = vst [vmem:[#allocation2 + $0x15c] sm:$0xf] %v3945
    %4138 = vst [vmem:[#allocation2 + $0x160] sm:$0xf] %v3946
    %4139 = vst [vmem:[#allocation2 + $0x164] sm:$0xf] %v3947
    %4140 = vst [vmem:[#allocation2 + $0x168] sm:$0xf] %v3948
    %4141 = vst [vmem:[#allocation2 + $0x16c] sm:$0xf] %v3949
    %4142 = vst [vmem:[#allocation2 + $0x170] sm:$0xf] %v3950
    %4143 = vst [vmem:[#allocation2 + $0x174] sm:$0xf] %v3951
    %4144 = vst [vmem:[#allocation2 + $0x178] sm:$0xf] %v3952
    %4145 = vst [vmem:[#allocation2 + $0x17c] sm:$0xf] %v3953
    %4146 = vst [vmem:[#allocation2 + $0x180] sm:$0xf] %v3954
    %4147 = vst [vmem:[#allocation2 + $0x184] sm:$0xf] %v3955
    %4148 = vst [vmem:[#allocation2 + $0x188] sm:$0xf] %v3956
    %4149 = vst [vmem:[#allocation2 + $0x18c] sm:$0xf] %v3957
    %4150 = vst [vmem:[#allocation2 + $0x190] sm:$0xf] %v3958
    %4151 = vst [vmem:[#allocation2 + $0x194] sm:$0xf] %v3959
    %4152 = vst [vmem:[#allocation2 + $0x198] sm:$0xf] %v3960
    %4153 = vst [vmem:[#allocation2 + $0x19c] sm:$0xf] %v3961
    %4154 = vst [vmem:[#allocation2 + $0x1a0] sm:$0xf] %v3962
    %4155 = vst [vmem:[#allocation2 + $0x1a4] sm:$0xf] %v3963
    %4156 = vst [vmem:[#allocation2 + $0x1a8] sm:$0xf] %v3964
    %4157 = vst [vmem:[#allocation2 + $0x1ac] sm:$0xf] %v3965
    %4158 = vst [vmem:[#allocation2 + $0x1b0] sm:$0xf] %v3966
    %4159 = vst [vmem:[#allocation2 + $0x1b4] sm:$0xf] %v3967
    %4160 = vst [vmem:[#allocation2 + $0x1b8] sm:$0xf] %v3968
    %4161 = vst [vmem:[#allocation2 + $0x1bc] sm:$0xf] %v3969
    %4162 = vst [vmem:[#allocation2 + $0x1c0] sm:$0xf] %v3970
    %4163 = vst [vmem:[#allocation2 + $0x1c4] sm:$0xf] %v3971
    %4164 = vst [vmem:[#allocation2 + $0x1c8] sm:$0xf] %v3972
    %4165 = vst [vmem:[#allocation2 + $0x1cc] sm:$0xf] %v3973
    %4166 = vst [vmem:[#allocation2 + $0x1d0] sm:$0xf] %v3974
    %4167 = vst [vmem:[#allocation2 + $0x1d4] sm:$0xf] %v3975
    %4168 = vst [vmem:[#allocation2 + $0x1d8] sm:$0xf] %v3976
    %4169 = vst [vmem:[#allocation2 + $0x1dc] sm:$0xf] %v3977
    %4170 = vst [vmem:[#allocation2 + $0x1e0] sm:$0xf] %v3978
    %4171 = vst [vmem:[#allocation2 + $0x1e4] sm:$0xf] %v3979
    %4172 = vst [vmem:[#allocation2 + $0x1e8] sm:$0xf] %v3980
    %4173 = vst [vmem:[#allocation2 + $0x1ec] sm:$0xf] %v3981
    %4174 = vst [vmem:[#allocation2 + $0x1f0] sm:$0xf] %v3982
    %4175 = vst [vmem:[#allocation2 + $0x1f4] sm:$0xf] %v3983
    %4176 = vst [vmem:[#allocation2 + $0x1f8] sm:$0xf] %v3984
    %4177 = vst [vmem:[#allocation2 + $0x1fc] sm:$0xf] %v3985
    %4178 = vst [vmem:[#allocation2 + $0x200] sm:$0xf] %v3986
    %4179 = vst [vmem:[#allocation2 + $0x204] sm:$0xf] %v3987
    %4180 = vst [vmem:[#allocation2 + $0x208] sm:$0xf] %v3988
    %4181 = vst [vmem:[#allocation2 + $0x20c] sm:$0xf] %v3989
    %4182 = vst [vmem:[#allocation2 + $0x210] sm:$0xf] %v3990
    %4183 = vst [vmem:[#allocation2 + $0x214] sm:$0xf] %v3991
    %4184 = vst [vmem:[#allocation2 + $0x218] sm:$0xf] %v3992
    %4185 = vst [vmem:[#allocation2 + $0x21c] sm:$0xf] %v3993
    %4186 = vst [vmem:[#allocation2 + $0x220] sm:$0xf] %v3994
    %4187 = vst [vmem:[#allocation2 + $0x224] sm:$0xf] %v3995
    %4188 = vst [vmem:[#allocation2 + $0x228] sm:$0xf] %v3996
    %4189 = vst [vmem:[#allocation2 + $0x22c] sm:$0xf] %v3997
    %4190 = vst [vmem:[#allocation2 + $0x230] sm:$0xf] %v3998
    %4191 = vst [vmem:[#allocation2 + $0x234] sm:$0xf] %v3999
    %4192 = vst [vmem:[#allocation2 + $0x238] sm:$0xf] %v4000
    %4193 = vst [vmem:[#allocation2 + $0x23c] sm:$0xf] %v4001
    %4194 = vst [vmem:[#allocation2 + $0x240] sm:$0xf] %v4002
    %4195 = vst [vmem:[#allocation2 + $0x244] sm:$0xf] %v4003
    %4196 = vst [vmem:[#allocation2 + $0x248] sm:$0xf] %v4004
    %4197 = vst [vmem:[#allocation2 + $0x24c] sm:$0xf] %v4005
    %4198 = vst [vmem:[#allocation2 + $0x250] sm:$0xf] %v4006
    %4199 = vst [vmem:[#allocation2 + $0x254] sm:$0xf] %v4007
    %4200 = vst [vmem:[#allocation2 + $0x258] sm:$0xf] %v4008
    %4201 = vst [vmem:[#allocation2 + $0x25c] sm:$0xf] %v4009
    %4202 = vst [vmem:[#allocation2 + $0x260] sm:$0xf] %v4010
    %4203 = vst [vmem:[#allocation2 + $0x264] sm:$0xf] %v4011
    %4204 = vst [vmem:[#allocation2 + $0x268] sm:$0xf] %v4012
    %4205 = vst [vmem:[#allocation2 + $0x26c] sm:$0xf] %v4013
    %4206 = vst [vmem:[#allocation2 + $0x270] sm:$0xf] %v4014
    %4207 = vst [vmem:[#allocation2 + $0x274] sm:$0xf] %v4015
    %4208 = vst [vmem:[#allocation2 + $0x278] sm:$0xf] %v4016
    %4209 = vst [vmem:[#allocation2 + $0x27c] sm:$0xf] %v4017
    %4210 = vst [vmem:[#allocation2 + $0x280] sm:$0xf] %v4018
    %4211 = vst [vmem:[#allocation2 + $0x284] sm:$0xf] %v4019
    %4212 = vst [vmem:[#allocation2 + $0x288] sm:$0xf] %v4020
    %4213 = vst [vmem:[#allocation2 + $0x28c] sm:$0xf] %v4021
    %4214 = vst [vmem:[#allocation2 + $0x290] sm:$0xf] %v4022
    %4215 = vst [vmem:[#allocation2 + $0x294] sm:$0xf] %v4023
    %4216 = vst [vmem:[#allocation2 + $0x298] sm:$0xf] %v4024
    %4217 = vst [vmem:[#allocation2 + $0x29c] sm:$0xf] %v4025
    %4218 = vst [vmem:[#allocation2 + $0x2a0] sm:$0xf] %v4026
    %4219 = vst [vmem:[#allocation2 + $0x2a4] sm:$0xf] %v4027
    %4220 = vst [vmem:[#allocation2 + $0x2a8] sm:$0xf] %v4028
    %4221 = vst [vmem:[#allocation2 + $0x2ac] sm:$0xf] %v4029
    %4222 = vst [vmem:[#allocation2 + $0x2b0] sm:$0xf] %v4030
    %4223 = vst [vmem:[#allocation2 + $0x2b4] sm:$0xf] %v4031
    %4224 = vst [vmem:[#allocation2 + $0x2b8] sm:$0xf] %v4032
    %4225 = vst [vmem:[#allocation2 + $0x2bc] sm:$0xf] %v4033
    %4226 = vst [vmem:[#allocation2 + $0x2c0] sm:$0xf] %v4034
    %4227 = vst [vmem:[#allocation2 + $0x2c4] sm:$0xf] %v4035
    %4228 = vst [vmem:[#allocation2 + $0x2c8] sm:$0xf] %v4036
    %4229 = vst [vmem:[#allocation2 + $0x2cc] sm:$0xf] %v4037
    %4230 = vst [vmem:[#allocation2 + $0x2d0] sm:$0xf] %v4038
    %4231 = vst [vmem:[#allocation2 + $0x2d4] sm:$0xf] %v4039
    %4232 = vst [vmem:[#allocation2 + $0x2d8] sm:$0xf] %v4040
    %4233 = vst [vmem:[#allocation2 + $0x2dc] sm:$0xf] %v4041
    %4234 = vst [vmem:[#allocation2 + $0x2e0] sm:$0xf] %v4042
    %4235 = vst [vmem:[#allocation2 + $0x2e4] sm:$0xf] %v4043
    %4236 = vst [vmem:[#allocation2 + $0x2e8] sm:$0xf] %v4044
    %4237 = vst [vmem:[#allocation2 + $0x2ec] sm:$0xf] %v4045
    %4238 = vst [vmem:[#allocation2 + $0x2f0] sm:$0xf] %v4046
    %4239 = vst [vmem:[#allocation2 + $0x2f4] sm:$0xf] %v4047
    %4240 = vst [vmem:[#allocation2 + $0x2f8] sm:$0xf] %v4048
    %4241 = vst [vmem:[#allocation2 + $0x2fc] sm:$0xf] %v4049
    %v4242 = vunpack.c.l.bf16 %v3858
    %v4243 = vunpack.c.l.bf16 %v3859
    %v4244 = vunpack.c.l.bf16 %v3860
    %v4245 = vunpack.c.l.bf16 %v3861
    %v4246 = vunpack.c.l.bf16 %v3862
    %v4247 = vunpack.c.l.bf16 %v3863
    %v4248 = vunpack.c.l.bf16 %v3864
    %v4249 = vunpack.c.l.bf16 %v3865
    %v4250 = vunpack.c.l.bf16 %v3866
    %v4251 = vunpack.c.l.bf16 %v3867
    %v4252 = vunpack.c.l.bf16 %v3868
    %v4253 = vunpack.c.l.bf16 %v3869
    %v4254 = vunpack.c.l.bf16 %v3870
    %v4255 = vunpack.c.l.bf16 %v3871
    %v4256 = vunpack.c.l.bf16 %v3872
    %v4257 = vunpack.c.l.bf16 %v3873
    %v4258 = vunpack.c.l.bf16 %v3874
    %v4259 = vunpack.c.l.bf16 %v3875
    %v4260 = vunpack.c.l.bf16 %v3876
    %v4261 = vunpack.c.l.bf16 %v3877
    %v4262 = vunpack.c.l.bf16 %v3878
    %v4263 = vunpack.c.l.bf16 %v3879
    %v4264 = vunpack.c.l.bf16 %v3880
    %v4265 = vunpack.c.l.bf16 %v3881
    %v4266 = vunpack.c.l.bf16 %v3882
    %v4267 = vunpack.c.l.bf16 %v3883
    %v4268 = vunpack.c.l.bf16 %v3884
    %v4269 = vunpack.c.l.bf16 %v3885
    %v4270 = vunpack.c.l.bf16 %v3886
    %v4271 = vunpack.c.l.bf16 %v3887
    %v4272 = vunpack.c.l.bf16 %v3888
    %v4273 = vunpack.c.l.bf16 %v3889
    %v4274 = vunpack.c.l.bf16 %v3890
    %v4275 = vunpack.c.l.bf16 %v3891
    %v4276 = vunpack.c.l.bf16 %v3892
    %v4277 = vunpack.c.l.bf16 %v3893
    %v4278 = vunpack.c.l.bf16 %v3894
    %v4279 = vunpack.c.l.bf16 %v3895
    %v4280 = vunpack.c.l.bf16 %v3896
    %v4281 = vunpack.c.l.bf16 %v3897
    %v4282 = vunpack.c.l.bf16 %v3898
    %v4283 = vunpack.c.l.bf16 %v3899
    %v4284 = vunpack.c.l.bf16 %v3900
    %v4285 = vunpack.c.l.bf16 %v3901
    %v4286 = vunpack.c.l.bf16 %v3902
    %v4287 = vunpack.c.l.bf16 %v3903
    %v4288 = vunpack.c.l.bf16 %v3904
    %v4289 = vunpack.c.l.bf16 %v3905
    %v4290 = vunpack.c.l.bf16 %v3906
    %v4291 = vunpack.c.l.bf16 %v3907
    %v4292 = vunpack.c.l.bf16 %v3908
    %v4293 = vunpack.c.l.bf16 %v3909
    %v4294 = vunpack.c.l.bf16 %v3910
    %v4295 = vunpack.c.l.bf16 %v3911
    %v4296 = vunpack.c.l.bf16 %v3912
    %v4297 = vunpack.c.l.bf16 %v3913
    %v4298 = vunpack.c.l.bf16 %v3914
    %v4299 = vunpack.c.l.bf16 %v3915
    %v4300 = vunpack.c.l.bf16 %v3916
    %v4301 = vunpack.c.l.bf16 %v3917
    %v4302 = vunpack.c.l.bf16 %v3918
    %v4303 = vunpack.c.l.bf16 %v3919
    %v4304 = vunpack.c.l.bf16 %v3920
    %v4305 = vunpack.c.l.bf16 %v3921
    %v4306 = vunpack.c.l.bf16 %v3922
    %v4307 = vunpack.c.l.bf16 %v3923
    %v4308 = vunpack.c.l.bf16 %v3924
    %v4309 = vunpack.c.l.bf16 %v3925
    %v4310 = vunpack.c.l.bf16 %v3926
    %v4311 = vunpack.c.l.bf16 %v3927
    %v4312 = vunpack.c.l.bf16 %v3928
    %v4313 = vunpack.c.l.bf16 %v3929
    %v4314 = vunpack.c.l.bf16 %v3930
    %v4315 = vunpack.c.l.bf16 %v3931
    %v4316 = vunpack.c.l.bf16 %v3932
    %v4317 = vunpack.c.l.bf16 %v3933
    %v4318 = vunpack.c.l.bf16 %v3934
    %v4319 = vunpack.c.l.bf16 %v3935
    %v4320 = vunpack.c.l.bf16 %v3936
    %v4321 = vunpack.c.l.bf16 %v3937
    %v4322 = vunpack.c.l.bf16 %v3938
    %v4323 = vunpack.c.l.bf16 %v3939
    %v4324 = vunpack.c.l.bf16 %v3940
    %v4325 = vunpack.c.l.bf16 %v3941
    %v4326 = vunpack.c.l.bf16 %v3942
    %v4327 = vunpack.c.l.bf16 %v3943
    %v4328 = vunpack.c.l.bf16 %v3944
    %v4329 = vunpack.c.l.bf16 %v3945
    %v4330 = vunpack.c.l.bf16 %v3946
    %v4331 = vunpack.c.l.bf16 %v3947
    %v4332 = vunpack.c.l.bf16 %v3948
    %v4333 = vunpack.c.l.bf16 %v3949
    %v4334 = vunpack.c.l.bf16 %v3950
    %v4335 = vunpack.c.l.bf16 %v3951
    %v4336 = vunpack.c.l.bf16 %v3952
    %v4337 = vunpack.c.l.bf16 %v3953
    %v4338 = vunpack.c.l.bf16 %v3954
    %v4339 = vunpack.c.l.bf16 %v3955
    %v4340 = vunpack.c.l.bf16 %v3956
    %v4341 = vunpack.c.l.bf16 %v3957
    %v4342 = vunpack.c.l.bf16 %v3958
    %v4343 = vunpack.c.l.bf16 %v3959
    %v4344 = vunpack.c.l.bf16 %v3960
    %v4345 = vunpack.c.l.bf16 %v3961
    %v4346 = vunpack.c.l.bf16 %v3962
    %v4347 = vunpack.c.l.bf16 %v3963
    %v4348 = vunpack.c.l.bf16 %v3964
    %v4349 = vunpack.c.l.bf16 %v3965
    %v4350 = vunpack.c.l.bf16 %v3966
    %v4351 = vunpack.c.l.bf16 %v3967
    %v4352 = vunpack.c.l.bf16 %v3968
    %v4353 = vunpack.c.l.bf16 %v3969
    %v4354 = vunpack.c.l.bf16 %v3970
    %v4355 = vunpack.c.l.bf16 %v3971
    %v4356 = vunpack.c.l.bf16 %v3972
    %v4357 = vunpack.c.l.bf16 %v3973
    %v4358 = vunpack.c.l.bf16 %v3974
    %v4359 = vunpack.c.l.bf16 %v3975
    %v4360 = vunpack.c.l.bf16 %v3976
    %v4361 = vunpack.c.l.bf16 %v3977
    %v4362 = vunpack.c.l.bf16 %v3978
    %v4363 = vunpack.c.l.bf16 %v3979
    %v4364 = vunpack.c.l.bf16 %v3980
    %v4365 = vunpack.c.l.bf16 %v3981
    %v4366 = vunpack.c.l.bf16 %v3982
    %v4367 = vunpack.c.l.bf16 %v3983
    %v4368 = vunpack.c.l.bf16 %v3984
    %v4369 = vunpack.c.l.bf16 %v3985
    %v4370 = vunpack.c.l.bf16 %v3986
    %v4371 = vunpack.c.l.bf16 %v3987
    %v4372 = vunpack.c.l.bf16 %v3988
    %v4373 = vunpack.c.l.bf16 %v3989
    %v4374 = vunpack.c.l.bf16 %v3990
    %v4375 = vunpack.c.l.bf16 %v3991
    %v4376 = vunpack.c.l.bf16 %v3992
    %v4377 = vunpack.c.l.bf16 %v3993
    %v4378 = vunpack.c.l.bf16 %v3994
    %v4379 = vunpack.c.l.bf16 %v3995
    %v4380 = vunpack.c.l.bf16 %v3996
    %v4381 = vunpack.c.l.bf16 %v3997
    %v4382 = vunpack.c.l.bf16 %v3998
    %v4383 = vunpack.c.l.bf16 %v3999
    %v4384 = vunpack.c.l.bf16 %v4000
    %v4385 = vunpack.c.l.bf16 %v4001
    %v4386 = vunpack.c.l.bf16 %v4002
    %v4387 = vunpack.c.l.bf16 %v4003
    %v4388 = vunpack.c.l.bf16 %v4004
    %v4389 = vunpack.c.l.bf16 %v4005
    %v4390 = vunpack.c.l.bf16 %v4006
    %v4391 = vunpack.c.l.bf16 %v4007
    %v4392 = vunpack.c.l.bf16 %v4008
    %v4393 = vunpack.c.l.bf16 %v4009
    %v4394 = vunpack.c.l.bf16 %v4010
    %v4395 = vunpack.c.l.bf16 %v4011
    %v4396 = vunpack.c.l.bf16 %v4012
    %v4397 = vunpack.c.l.bf16 %v4013
    %v4398 = vunpack.c.l.bf16 %v4014
    %v4399 = vunpack.c.l.bf16 %v4015
    %v4400 = vunpack.c.l.bf16 %v4016
    %v4401 = vunpack.c.l.bf16 %v4017
    %v4402 = vunpack.c.l.bf16 %v4018
    %v4403 = vunpack.c.l.bf16 %v4019
    %v4404 = vunpack.c.l.bf16 %v4020
    %v4405 = vunpack.c.l.bf16 %v4021
    %v4406 = vunpack.c.l.bf16 %v4022
    %v4407 = vunpack.c.l.bf16 %v4023
    %v4408 = vunpack.c.l.bf16 %v4024
    %v4409 = vunpack.c.l.bf16 %v4025
    %v4410 = vunpack.c.l.bf16 %v4026
    %v4411 = vunpack.c.l.bf16 %v4027
    %v4412 = vunpack.c.l.bf16 %v4028
    %v4413 = vunpack.c.l.bf16 %v4029
    %v4414 = vunpack.c.l.bf16 %v4030
    %v4415 = vunpack.c.l.bf16 %v4031
    %v4416 = vunpack.c.l.bf16 %v4032
    %v4417 = vunpack.c.l.bf16 %v4033
    %v4418 = vunpack.c.l.bf16 %v4034
    %v4419 = vunpack.c.l.bf16 %v4035
    %v4420 = vunpack.c.l.bf16 %v4036
    %v4421 = vunpack.c.l.bf16 %v4037
    %v4422 = vunpack.c.l.bf16 %v4038
    %v4423 = vunpack.c.l.bf16 %v4039
    %v4424 = vunpack.c.l.bf16 %v4040
    %v4425 = vunpack.c.l.bf16 %v4041
    %v4426 = vunpack.c.l.bf16 %v4042
    %v4427 = vunpack.c.l.bf16 %v4043
    %v4428 = vunpack.c.l.bf16 %v4044
    %v4429 = vunpack.c.l.bf16 %v4045
    %v4430 = vunpack.c.l.bf16 %v4046
    %v4431 = vunpack.c.l.bf16 %v4047
    %v4432 = vunpack.c.l.bf16 %v4048
    %v4433 = vunpack.c.l.bf16 %v4049
    %v4434 = vld [vmem:[%s4] sm:$0xf]
    %v4435 = vld [vmem:[%s4 + $0x4] sm:$0xf]
    %v4436 = vld [vmem:[%s4 + $0x8] sm:$0xf]
    %v4437 = vld [vmem:[%s4 + $0xc] sm:$0xf]
    %v4438 = vld [vmem:[%s4 + $0x10] sm:$0xf]
    %v4439 = vld [vmem:[%s4 + $0x14] sm:$0xf]
    %v4440 = vld [vmem:[%s4 + $0x18] sm:$0xf]
    %v4441 = vld [vmem:[%s4 + $0x1c] sm:$0xf]
    %v4442 = vld [vmem:[%s4 + $0x20] sm:$0xf]
    %v4443 = vld [vmem:[%s4 + $0x24] sm:$0xf]
    %v4444 = vld [vmem:[%s4 + $0x28] sm:$0xf]
    %v4445 = vld [vmem:[%s4 + $0x2c] sm:$0xf]
    %v4446 = vld [vmem:[%s4 + $0x30] sm:$0xf]
    %v4447 = vld [vmem:[%s4 + $0x34] sm:$0xf]
    %v4448 = vld [vmem:[%s4 + $0x38] sm:$0xf]
    %v4449 = vld [vmem:[%s4 + $0x3c] sm:$0xf]
    %v4450 = vld [vmem:[%s4 + $0x40] sm:$0xf]
    %v4451 = vld [vmem:[%s4 + $0x44] sm:$0xf]
    %v4452 = vld [vmem:[%s4 + $0x48] sm:$0xf]
    %v4453 = vld [vmem:[%s4 + $0x4c] sm:$0xf]
    %v4454 = vld [vmem:[%s4 + $0x50] sm:$0xf]
    %v4455 = vld [vmem:[%s4 + $0x54] sm:$0xf]
    %v4456 = vld [vmem:[%s4 + $0x58] sm:$0xf]
    %v4457 = vld [vmem:[%s4 + $0x5c] sm:$0xf]
    %v4458 = vld [vmem:[%s4 + $0x60] sm:$0xf]
    %v4459 = vld [vmem:[%s4 + $0x64] sm:$0xf]
    %v4460 = vld [vmem:[%s4 + $0x68] sm:$0xf]
    %v4461 = vld [vmem:[%s4 + $0x6c] sm:$0xf]
    %v4462 = vld [vmem:[%s4 + $0x70] sm:$0xf]
    %v4463 = vld [vmem:[%s4 + $0x74] sm:$0xf]
    %v4464 = vld [vmem:[%s4 + $0x78] sm:$0xf]
    %v4465 = vld [vmem:[%s4 + $0x7c] sm:$0xf]
    %v4466 = vld [vmem:[%s4 + $0x80] sm:$0xf]
    %v4467 = vld [vmem:[%s4 + $0x84] sm:$0xf]
    %v4468 = vld [vmem:[%s4 + $0x88] sm:$0xf]
    %v4469 = vld [vmem:[%s4 + $0x8c] sm:$0xf]
    %v4470 = vld [vmem:[%s4 + $0x90] sm:$0xf]
    %v4471 = vld [vmem:[%s4 + $0x94] sm:$0xf]
    %v4472 = vld [vmem:[%s4 + $0x98] sm:$0xf]
    %v4473 = vld [vmem:[%s4 + $0x9c] sm:$0xf]
    %v4474 = vld [vmem:[%s4 + $0xa0] sm:$0xf]
    %v4475 = vld [vmem:[%s4 + $0xa4] sm:$0xf]
    %v4476 = vld [vmem:[%s4 + $0xa8] sm:$0xf]
    %v4477 = vld [vmem:[%s4 + $0xac] sm:$0xf]
    %v4478 = vld [vmem:[%s4 + $0xb0] sm:$0xf]
    %v4479 = vld [vmem:[%s4 + $0xb4] sm:$0xf]
    %v4480 = vld [vmem:[%s4 + $0xb8] sm:$0xf]
    %v4481 = vld [vmem:[%s4 + $0xbc] sm:$0xf]
    %v4482 = vld [vmem:[%s4 + $0xc0] sm:$0xf]
    %v4483 = vld [vmem:[%s4 + $0xc4] sm:$0xf]
    %v4484 = vld [vmem:[%s4 + $0xc8] sm:$0xf]
    %v4485 = vld [vmem:[%s4 + $0xcc] sm:$0xf]
    %v4486 = vld [vmem:[%s4 + $0xd0] sm:$0xf]
    %v4487 = vld [vmem:[%s4 + $0xd4] sm:$0xf]
    %v4488 = vld [vmem:[%s4 + $0xd8] sm:$0xf]
    %v4489 = vld [vmem:[%s4 + $0xdc] sm:$0xf]
    %v4490 = vld [vmem:[%s4 + $0xe0] sm:$0xf]
    %v4491 = vld [vmem:[%s4 + $0xe4] sm:$0xf]
    %v4492 = vld [vmem:[%s4 + $0xe8] sm:$0xf]
    %v4493 = vld [vmem:[%s4 + $0xec] sm:$0xf]
    %v4494 = vld [vmem:[%s4 + $0xf0] sm:$0xf]
    %v4495 = vld [vmem:[%s4 + $0xf4] sm:$0xf]
    %v4496 = vld [vmem:[%s4 + $0xf8] sm:$0xf]
    %v4497 = vld [vmem:[%s4 + $0xfc] sm:$0xf]
    %v4498 = vld [vmem:[%s4 + $0x100] sm:$0xf]
    %v4499 = vld [vmem:[%s4 + $0x104] sm:$0xf]
    %v4500 = vld [vmem:[%s4 + $0x108] sm:$0xf]
    %v4501 = vld [vmem:[%s4 + $0x10c] sm:$0xf]
    %v4502 = vld [vmem:[%s4 + $0x110] sm:$0xf]
    %v4503 = vld [vmem:[%s4 + $0x114] sm:$0xf]
    %v4504 = vld [vmem:[%s4 + $0x118] sm:$0xf]
    %v4505 = vld [vmem:[%s4 + $0x11c] sm:$0xf]
    %v4506 = vld [vmem:[%s4 + $0x120] sm:$0xf]
    %v4507 = vld [vmem:[%s4 + $0x124] sm:$0xf]
    %v4508 = vld [vmem:[%s4 + $0x128] sm:$0xf]
    %v4509 = vld [vmem:[%s4 + $0x12c] sm:$0xf]
    %v4510 = vld [vmem:[%s4 + $0x130] sm:$0xf]
    %v4511 = vld [vmem:[%s4 + $0x134] sm:$0xf]
    %v4512 = vld [vmem:[%s4 + $0x138] sm:$0xf]
    %v4513 = vld [vmem:[%s4 + $0x13c] sm:$0xf]
    %v4514 = vld [vmem:[%s4 + $0x140] sm:$0xf]
    %v4515 = vld [vmem:[%s4 + $0x144] sm:$0xf]
    %v4516 = vld [vmem:[%s4 + $0x148] sm:$0xf]
    %v4517 = vld [vmem:[%s4 + $0x14c] sm:$0xf]
    %v4518 = vld [vmem:[%s4 + $0x150] sm:$0xf]
    %v4519 = vld [vmem:[%s4 + $0x154] sm:$0xf]
    %v4520 = vld [vmem:[%s4 + $0x158] sm:$0xf]
    %v4521 = vld [vmem:[%s4 + $0x15c] sm:$0xf]
    %v4522 = vld [vmem:[%s4 + $0x160] sm:$0xf]
    %v4523 = vld [vmem:[%s4 + $0x164] sm:$0xf]
    %v4524 = vld [vmem:[%s4 + $0x168] sm:$0xf]
    %v4525 = vld [vmem:[%s4 + $0x16c] sm:$0xf]
    %v4526 = vld [vmem:[%s4 + $0x170] sm:$0xf]
    %v4527 = vld [vmem:[%s4 + $0x174] sm:$0xf]
    %v4528 = vld [vmem:[%s4 + $0x178] sm:$0xf]
    %v4529 = vld [vmem:[%s4 + $0x17c] sm:$0xf]
    %v4530 = vld [vmem:[%s4 + $0x180] sm:$0xf]
    %v4531 = vld [vmem:[%s4 + $0x184] sm:$0xf]
    %v4532 = vld [vmem:[%s4 + $0x188] sm:$0xf]
    %v4533 = vld [vmem:[%s4 + $0x18c] sm:$0xf]
    %v4534 = vld [vmem:[%s4 + $0x190] sm:$0xf]
    %v4535 = vld [vmem:[%s4 + $0x194] sm:$0xf]
    %v4536 = vld [vmem:[%s4 + $0x198] sm:$0xf]
    %v4537 = vld [vmem:[%s4 + $0x19c] sm:$0xf]
    %v4538 = vld [vmem:[%s4 + $0x1a0] sm:$0xf]
    %v4539 = vld [vmem:[%s4 + $0x1a4] sm:$0xf]
    %v4540 = vld [vmem:[%s4 + $0x1a8] sm:$0xf]
    %v4541 = vld [vmem:[%s4 + $0x1ac] sm:$0xf]
    %v4542 = vld [vmem:[%s4 + $0x1b0] sm:$0xf]
    %v4543 = vld [vmem:[%s4 + $0x1b4] sm:$0xf]
    %v4544 = vld [vmem:[%s4 + $0x1b8] sm:$0xf]
    %v4545 = vld [vmem:[%s4 + $0x1bc] sm:$0xf]
    %v4546 = vld [vmem:[%s4 + $0x1c0] sm:$0xf]
    %v4547 = vld [vmem:[%s4 + $0x1c4] sm:$0xf]
    %v4548 = vld [vmem:[%s4 + $0x1c8] sm:$0xf]
    %v4549 = vld [vmem:[%s4 + $0x1cc] sm:$0xf]
    %v4550 = vld [vmem:[%s4 + $0x1d0] sm:$0xf]
    %v4551 = vld [vmem:[%s4 + $0x1d4] sm:$0xf]
    %v4552 = vld [vmem:[%s4 + $0x1d8] sm:$0xf]
    %v4553 = vld [vmem:[%s4 + $0x1dc] sm:$0xf]
    %v4554 = vld [vmem:[%s4 + $0x1e0] sm:$0xf]
    %v4555 = vld [vmem:[%s4 + $0x1e4] sm:$0xf]
    %v4556 = vld [vmem:[%s4 + $0x1e8] sm:$0xf]
    %v4557 = vld [vmem:[%s4 + $0x1ec] sm:$0xf]
    %v4558 = vld [vmem:[%s4 + $0x1f0] sm:$0xf]
    %v4559 = vld [vmem:[%s4 + $0x1f4] sm:$0xf]
    %v4560 = vld [vmem:[%s4 + $0x1f8] sm:$0xf]
    %v4561 = vld [vmem:[%s4 + $0x1fc] sm:$0xf]
    %v4562 = vld [vmem:[%s4 + $0x200] sm:$0xf]
    %v4563 = vld [vmem:[%s4 + $0x204] sm:$0xf]
    %v4564 = vld [vmem:[%s4 + $0x208] sm:$0xf]
    %v4565 = vld [vmem:[%s4 + $0x20c] sm:$0xf]
    %v4566 = vld [vmem:[%s4 + $0x210] sm:$0xf]
    %v4567 = vld [vmem:[%s4 + $0x214] sm:$0xf]
    %v4568 = vld [vmem:[%s4 + $0x218] sm:$0xf]
    %v4569 = vld [vmem:[%s4 + $0x21c] sm:$0xf]
    %v4570 = vld [vmem:[%s4 + $0x220] sm:$0xf]
    %v4571 = vld [vmem:[%s4 + $0x224] sm:$0xf]
    %v4572 = vld [vmem:[%s4 + $0x228] sm:$0xf]
    %v4573 = vld [vmem:[%s4 + $0x22c] sm:$0xf]
    %v4574 = vld [vmem:[%s4 + $0x230] sm:$0xf]
    %v4575 = vld [vmem:[%s4 + $0x234] sm:$0xf]
    %v4576 = vld [vmem:[%s4 + $0x238] sm:$0xf]
    %v4577 = vld [vmem:[%s4 + $0x23c] sm:$0xf]
    %v4578 = vld [vmem:[%s4 + $0x240] sm:$0xf]
    %v4579 = vld [vmem:[%s4 + $0x244] sm:$0xf]
    %v4580 = vld [vmem:[%s4 + $0x248] sm:$0xf]
    %v4581 = vld [vmem:[%s4 + $0x24c] sm:$0xf]
    %v4582 = vld [vmem:[%s4 + $0x250] sm:$0xf]
    %v4583 = vld [vmem:[%s4 + $0x254] sm:$0xf]
    %v4584 = vld [vmem:[%s4 + $0x258] sm:$0xf]
    %v4585 = vld [vmem:[%s4 + $0x25c] sm:$0xf]
    %v4586 = vld [vmem:[%s4 + $0x260] sm:$0xf]
    %v4587 = vld [vmem:[%s4 + $0x264] sm:$0xf]
    %v4588 = vld [vmem:[%s4 + $0x268] sm:$0xf]
    %v4589 = vld [vmem:[%s4 + $0x26c] sm:$0xf]
    %v4590 = vld [vmem:[%s4 + $0x270] sm:$0xf]
    %v4591 = vld [vmem:[%s4 + $0x274] sm:$0xf]
    %v4592 = vld [vmem:[%s4 + $0x278] sm:$0xf]
    %v4593 = vld [vmem:[%s4 + $0x27c] sm:$0xf]
    %v4594 = vld [vmem:[%s4 + $0x280] sm:$0xf]
    %v4595 = vld [vmem:[%s4 + $0x284] sm:$0xf]
    %v4596 = vld [vmem:[%s4 + $0x288] sm:$0xf]
    %v4597 = vld [vmem:[%s4 + $0x28c] sm:$0xf]
    %v4598 = vld [vmem:[%s4 + $0x290] sm:$0xf]
    %v4599 = vld [vmem:[%s4 + $0x294] sm:$0xf]
    %v4600 = vld [vmem:[%s4 + $0x298] sm:$0xf]
    %v4601 = vld [vmem:[%s4 + $0x29c] sm:$0xf]
    %v4602 = vld [vmem:[%s4 + $0x2a0] sm:$0xf]
    %v4603 = vld [vmem:[%s4 + $0x2a4] sm:$0xf]
    %v4604 = vld [vmem:[%s4 + $0x2a8] sm:$0xf]
    %v4605 = vld [vmem:[%s4 + $0x2ac] sm:$0xf]
    %v4606 = vld [vmem:[%s4 + $0x2b0] sm:$0xf]
    %v4607 = vld [vmem:[%s4 + $0x2b4] sm:$0xf]
    %v4608 = vld [vmem:[%s4 + $0x2b8] sm:$0xf]
    %v4609 = vld [vmem:[%s4 + $0x2bc] sm:$0xf]
    %v4610 = vld [vmem:[%s4 + $0x2c0] sm:$0xf]
    %v4611 = vld [vmem:[%s4 + $0x2c4] sm:$0xf]
    %v4612 = vld [vmem:[%s4 + $0x2c8] sm:$0xf]
    %v4613 = vld [vmem:[%s4 + $0x2cc] sm:$0xf]
    %v4614 = vld [vmem:[%s4 + $0x2d0] sm:$0xf]
    %v4615 = vld [vmem:[%s4 + $0x2d4] sm:$0xf]
    %v4616 = vld [vmem:[%s4 + $0x2d8] sm:$0xf]
    %v4617 = vld [vmem:[%s4 + $0x2dc] sm:$0xf]
    %v4618 = vld [vmem:[%s4 + $0x2e0] sm:$0xf]
    %v4619 = vld [vmem:[%s4 + $0x2e4] sm:$0xf]
    %v4620 = vld [vmem:[%s4 + $0x2e8] sm:$0xf]
    %v4621 = vld [vmem:[%s4 + $0x2ec] sm:$0xf]
    %v4622 = vld [vmem:[%s4 + $0x2f0] sm:$0xf]
    %v4623 = vld [vmem:[%s4 + $0x2f4] sm:$0xf]
    %v4624 = vld [vmem:[%s4 + $0x2f8] sm:$0xf]
    %v4625 = vld [vmem:[%s4 + $0x2fc] sm:$0xf]
    %v4626 = vunpack.c.l.bf16 %v4434
    %v4627 = vunpack.c.l.bf16 %v4435
    %v4628 = vunpack.c.l.bf16 %v4436
    %v4629 = vunpack.c.l.bf16 %v4437
    %v4630 = vunpack.c.l.bf16 %v4438
    %v4631 = vunpack.c.l.bf16 %v4439
    %v4632 = vunpack.c.l.bf16 %v4440
    %v4633 = vunpack.c.l.bf16 %v4441
    %v4634 = vunpack.c.l.bf16 %v4442
    %v4635 = vunpack.c.l.bf16 %v4443
    %v4636 = vunpack.c.l.bf16 %v4444
    %v4637 = vunpack.c.l.bf16 %v4445
    %v4638 = vunpack.c.l.bf16 %v4446
    %v4639 = vunpack.c.l.bf16 %v4447
    %v4640 = vunpack.c.l.bf16 %v4448
    %v4641 = vunpack.c.l.bf16 %v4449
    %v4642 = vunpack.c.l.bf16 %v4450
    %v4643 = vunpack.c.l.bf16 %v4451
    %v4644 = vunpack.c.l.bf16 %v4452
    %v4645 = vunpack.c.l.bf16 %v4453
    %v4646 = vunpack.c.l.bf16 %v4454
    %v4647 = vunpack.c.l.bf16 %v4455
    %v4648 = vunpack.c.l.bf16 %v4456
    %v4649 = vunpack.c.l.bf16 %v4457
    %v4650 = vunpack.c.l.bf16 %v4458
    %v4651 = vunpack.c.l.bf16 %v4459
    %v4652 = vunpack.c.l.bf16 %v4460
    %v4653 = vunpack.c.l.bf16 %v4461
    %v4654 = vunpack.c.l.bf16 %v4462
    %v4655 = vunpack.c.l.bf16 %v4463
    %v4656 = vunpack.c.l.bf16 %v4464
    %v4657 = vunpack.c.l.bf16 %v4465
    %v4658 = vunpack.c.l.bf16 %v4466
    %v4659 = vunpack.c.l.bf16 %v4467
    %v4660 = vunpack.c.l.bf16 %v4468
    %v4661 = vunpack.c.l.bf16 %v4469
    %v4662 = vunpack.c.l.bf16 %v4470
    %v4663 = vunpack.c.l.bf16 %v4471
    %v4664 = vunpack.c.l.bf16 %v4472
    %v4665 = vunpack.c.l.bf16 %v4473
    %v4666 = vunpack.c.l.bf16 %v4474
    %v4667 = vunpack.c.l.bf16 %v4475
    %v4668 = vunpack.c.l.bf16 %v4476
    %v4669 = vunpack.c.l.bf16 %v4477
    %v4670 = vunpack.c.l.bf16 %v4478
    %v4671 = vunpack.c.l.bf16 %v4479
    %v4672 = vunpack.c.l.bf16 %v4480
    %v4673 = vunpack.c.l.bf16 %v4481
    %v4674 = vunpack.c.l.bf16 %v4482
    %v4675 = vunpack.c.l.bf16 %v4483
    %v4676 = vunpack.c.l.bf16 %v4484
    %v4677 = vunpack.c.l.bf16 %v4485
    %v4678 = vunpack.c.l.bf16 %v4486
    %v4679 = vunpack.c.l.bf16 %v4487
    %v4680 = vunpack.c.l.bf16 %v4488
    %v4681 = vunpack.c.l.bf16 %v4489
    %v4682 = vunpack.c.l.bf16 %v4490
    %v4683 = vunpack.c.l.bf16 %v4491
    %v4684 = vunpack.c.l.bf16 %v4492
    %v4685 = vunpack.c.l.bf16 %v4493
    %v4686 = vunpack.c.l.bf16 %v4494
    %v4687 = vunpack.c.l.bf16 %v4495
    %v4688 = vunpack.c.l.bf16 %v4496
    %v4689 = vunpack.c.l.bf16 %v4497
    %v4690 = vunpack.c.l.bf16 %v4498
    %v4691 = vunpack.c.l.bf16 %v4499
    %v4692 = vunpack.c.l.bf16 %v4500
    %v4693 = vunpack.c.l.bf16 %v4501
    %v4694 = vunpack.c.l.bf16 %v4502
    %v4695 = vunpack.c.l.bf16 %v4503
    %v4696 = vunpack.c.l.bf16 %v4504
    %v4697 = vunpack.c.l.bf16 %v4505
    %v4698 = vunpack.c.l.bf16 %v4506
    %v4699 = vunpack.c.l.bf16 %v4507
    %v4700 = vunpack.c.l.bf16 %v4508
    %v4701 = vunpack.c.l.bf16 %v4509
    %v4702 = vunpack.c.l.bf16 %v4510
    %v4703 = vunpack.c.l.bf16 %v4511
    %v4704 = vunpack.c.l.bf16 %v4512
    %v4705 = vunpack.c.l.bf16 %v4513
    %v4706 = vunpack.c.l.bf16 %v4514
    %v4707 = vunpack.c.l.bf16 %v4515
    %v4708 = vunpack.c.l.bf16 %v4516
    %v4709 = vunpack.c.l.bf16 %v4517
    %v4710 = vunpack.c.l.bf16 %v4518
    %v4711 = vunpack.c.l.bf16 %v4519
    %v4712 = vunpack.c.l.bf16 %v4520
    %v4713 = vunpack.c.l.bf16 %v4521
    %v4714 = vunpack.c.l.bf16 %v4522
    %v4715 = vunpack.c.l.bf16 %v4523
    %v4716 = vunpack.c.l.bf16 %v4524
    %v4717 = vunpack.c.l.bf16 %v4525
    %v4718 = vunpack.c.l.bf16 %v4526
    %v4719 = vunpack.c.l.bf16 %v4527
    %v4720 = vunpack.c.l.bf16 %v4528
    %v4721 = vunpack.c.l.bf16 %v4529
    %v4722 = vunpack.c.l.bf16 %v4530
    %v4723 = vunpack.c.l.bf16 %v4531
    %v4724 = vunpack.c.l.bf16 %v4532
    %v4725 = vunpack.c.l.bf16 %v4533
    %v4726 = vunpack.c.l.bf16 %v4534
    %v4727 = vunpack.c.l.bf16 %v4535
    %v4728 = vunpack.c.l.bf16 %v4536
    %v4729 = vunpack.c.l.bf16 %v4537
    %v4730 = vunpack.c.l.bf16 %v4538
    %v4731 = vunpack.c.l.bf16 %v4539
    %v4732 = vunpack.c.l.bf16 %v4540
    %v4733 = vunpack.c.l.bf16 %v4541
    %v4734 = vunpack.c.l.bf16 %v4542
    %v4735 = vunpack.c.l.bf16 %v4543
    %v4736 = vunpack.c.l.bf16 %v4544
    %v4737 = vunpack.c.l.bf16 %v4545
    %v4738 = vunpack.c.l.bf16 %v4546
    %v4739 = vunpack.c.l.bf16 %v4547
    %v4740 = vunpack.c.l.bf16 %v4548
    %v4741 = vunpack.c.l.bf16 %v4549
    %v4742 = vunpack.c.l.bf16 %v4550
    %v4743 = vunpack.c.l.bf16 %v4551
    %v4744 = vunpack.c.l.bf16 %v4552
    %v4745 = vunpack.c.l.bf16 %v4553
    %v4746 = vunpack.c.l.bf16 %v4554
    %v4747 = vunpack.c.l.bf16 %v4555
    %v4748 = vunpack.c.l.bf16 %v4556
    %v4749 = vunpack.c.l.bf16 %v4557
    %v4750 = vunpack.c.l.bf16 %v4558
    %v4751 = vunpack.c.l.bf16 %v4559
    %v4752 = vunpack.c.l.bf16 %v4560
    %v4753 = vunpack.c.l.bf16 %v4561
    %v4754 = vunpack.c.l.bf16 %v4562
    %v4755 = vunpack.c.l.bf16 %v4563
    %v4756 = vunpack.c.l.bf16 %v4564
    %v4757 = vunpack.c.l.bf16 %v4565
    %v4758 = vunpack.c.l.bf16 %v4566
    %v4759 = vunpack.c.l.bf16 %v4567
    %v4760 = vunpack.c.l.bf16 %v4568
    %v4761 = vunpack.c.l.bf16 %v4569
    %v4762 = vunpack.c.l.bf16 %v4570
    %v4763 = vunpack.c.l.bf16 %v4571
    %v4764 = vunpack.c.l.bf16 %v4572
    %v4765 = vunpack.c.l.bf16 %v4573
    %v4766 = vunpack.c.l.bf16 %v4574
    %v4767 = vunpack.c.l.bf16 %v4575
    %v4768 = vunpack.c.l.bf16 %v4576
    %v4769 = vunpack.c.l.bf16 %v4577
    %v4770 = vunpack.c.l.bf16 %v4578
    %v4771 = vunpack.c.l.bf16 %v4579
    %v4772 = vunpack.c.l.bf16 %v4580
    %v4773 = vunpack.c.l.bf16 %v4581
    %v4774 = vunpack.c.l.bf16 %v4582
    %v4775 = vunpack.c.l.bf16 %v4583
    %v4776 = vunpack.c.l.bf16 %v4584
    %v4777 = vunpack.c.l.bf16 %v4585
    %v4778 = vunpack.c.l.bf16 %v4586
    %v4779 = vunpack.c.l.bf16 %v4587
    %v4780 = vunpack.c.l.bf16 %v4588
    %v4781 = vunpack.c.l.bf16 %v4589
    %v4782 = vunpack.c.l.bf16 %v4590
    %v4783 = vunpack.c.l.bf16 %v4591
    %v4784 = vunpack.c.l.bf16 %v4592
    %v4785 = vunpack.c.l.bf16 %v4593
    %v4786 = vunpack.c.l.bf16 %v4594
    %v4787 = vunpack.c.l.bf16 %v4595
    %v4788 = vunpack.c.l.bf16 %v4596
    %v4789 = vunpack.c.l.bf16 %v4597
    %v4790 = vunpack.c.l.bf16 %v4598
    %v4791 = vunpack.c.l.bf16 %v4599
    %v4792 = vunpack.c.l.bf16 %v4600
    %v4793 = vunpack.c.l.bf16 %v4601
    %v4794 = vunpack.c.l.bf16 %v4602
    %v4795 = vunpack.c.l.bf16 %v4603
    %v4796 = vunpack.c.l.bf16 %v4604
    %v4797 = vunpack.c.l.bf16 %v4605
    %v4798 = vunpack.c.l.bf16 %v4606
    %v4799 = vunpack.c.l.bf16 %v4607
    %v4800 = vunpack.c.l.bf16 %v4608
    %v4801 = vunpack.c.l.bf16 %v4609
    %v4802 = vunpack.c.l.bf16 %v4610
    %v4803 = vunpack.c.l.bf16 %v4611
    %v4804 = vunpack.c.l.bf16 %v4612
    %v4805 = vunpack.c.l.bf16 %v4613
    %v4806 = vunpack.c.l.bf16 %v4614
    %v4807 = vunpack.c.l.bf16 %v4615
    %v4808 = vunpack.c.l.bf16 %v4616
    %v4809 = vunpack.c.l.bf16 %v4617
    %v4810 = vunpack.c.l.bf16 %v4618
    %v4811 = vunpack.c.l.bf16 %v4619
    %v4812 = vunpack.c.l.bf16 %v4620
    %v4813 = vunpack.c.l.bf16 %v4621
    %v4814 = vunpack.c.l.bf16 %v4622
    %v4815 = vunpack.c.l.bf16 %v4623
    %v4816 = vunpack.c.l.bf16 %v4624
    %v4817 = vunpack.c.l.bf16 %v4625
    %v4818 = vsub.f32 %v4242, %v4626
    %v4819 = vsub.f32 %v4243, %v4627
    %v4820 = vsub.f32 %v4244, %v4628
    %v4821 = vsub.f32 %v4245, %v4629
    %v4822 = vsub.f32 %v4246, %v4630
    %v4823 = vsub.f32 %v4247, %v4631
    %v4824 = vsub.f32 %v4248, %v4632
    %v4825 = vsub.f32 %v4249, %v4633
    %v4826 = vsub.f32 %v4250, %v4634
    %v4827 = vsub.f32 %v4251, %v4635
    %v4828 = vsub.f32 %v4252, %v4636
    %v4829 = vsub.f32 %v4253, %v4637
    %v4830 = vsub.f32 %v4254, %v4638
    %v4831 = vsub.f32 %v4255, %v4639
    %v4832 = vsub.f32 %v4256, %v4640
    %v4833 = vsub.f32 %v4257, %v4641
    %v4834 = vsub.f32 %v4258, %v4642
    %v4835 = vsub.f32 %v4259, %v4643
    %v4836 = vsub.f32 %v4260, %v4644
    %v4837 = vsub.f32 %v4261, %v4645
    %v4838 = vsub.f32 %v4262, %v4646
    %v4839 = vsub.f32 %v4263, %v4647
    %v4840 = vsub.f32 %v4264, %v4648
    %v4841 = vsub.f32 %v4265, %v4649
    %v4842 = vsub.f32 %v4266, %v4650
    %v4843 = vsub.f32 %v4267, %v4651
    %v4844 = vsub.f32 %v4268, %v4652
    %v4845 = vsub.f32 %v4269, %v4653
    %v4846 = vsub.f32 %v4270, %v4654
    %v4847 = vsub.f32 %v4271, %v4655
    %v4848 = vsub.f32 %v4272, %v4656
    %v4849 = vsub.f32 %v4273, %v4657
    %v4850 = vsub.f32 %v4274, %v4658
    %v4851 = vsub.f32 %v4275, %v4659
    %v4852 = vsub.f32 %v4276, %v4660
    %v4853 = vsub.f32 %v4277, %v4661
    %v4854 = vsub.f32 %v4278, %v4662
    %v4855 = vsub.f32 %v4279, %v4663
    %v4856 = vsub.f32 %v4280, %v4664
    %v4857 = vsub.f32 %v4281, %v4665
    %v4858 = vsub.f32 %v4282, %v4666
    %v4859 = vsub.f32 %v4283, %v4667
    %v4860 = vsub.f32 %v4284, %v4668
    %v4861 = vsub.f32 %v4285, %v4669
    %v4862 = vsub.f32 %v4286, %v4670
    %v4863 = vsub.f32 %v4287, %v4671
    %v4864 = vsub.f32 %v4288, %v4672
    %v4865 = vsub.f32 %v4289, %v4673
    %v4866 = vsub.f32 %v4290, %v4674
    %v4867 = vsub.f32 %v4291, %v4675
    %v4868 = vsub.f32 %v4292, %v4676
    %v4869 = vsub.f32 %v4293, %v4677
    %v4870 = vsub.f32 %v4294, %v4678
    %v4871 = vsub.f32 %v4295, %v4679
    %v4872 = vsub.f32 %v4296, %v4680
    %v4873 = vsub.f32 %v4297, %v4681
    %v4874 = vsub.f32 %v4298, %v4682
    %v4875 = vsub.f32 %v4299, %v4683
    %v4876 = vsub.f32 %v4300, %v4684
    %v4877 = vsub.f32 %v4301, %v4685
    %v4878 = vsub.f32 %v4302, %v4686
    %v4879 = vsub.f32 %v4303, %v4687
    %v4880 = vsub.f32 %v4304, %v4688
    %v4881 = vsub.f32 %v4305, %v4689
    %v4882 = vsub.f32 %v4306, %v4690
    %v4883 = vsub.f32 %v4307, %v4691
    %v4884 = vsub.f32 %v4308, %v4692
    %v4885 = vsub.f32 %v4309, %v4693
    %v4886 = vsub.f32 %v4310, %v4694
    %v4887 = vsub.f32 %v4311, %v4695
    %v4888 = vsub.f32 %v4312, %v4696
    %v4889 = vsub.f32 %v4313, %v4697
    %v4890 = vsub.f32 %v4314, %v4698
    %v4891 = vsub.f32 %v4315, %v4699
    %v4892 = vsub.f32 %v4316, %v4700
    %v4893 = vsub.f32 %v4317, %v4701
    %v4894 = vsub.f32 %v4318, %v4702
    %v4895 = vsub.f32 %v4319, %v4703
    %v4896 = vsub.f32 %v4320, %v4704
    %v4897 = vsub.f32 %v4321, %v4705
    %v4898 = vsub.f32 %v4322, %v4706
    %v4899 = vsub.f32 %v4323, %v4707
    %v4900 = vsub.f32 %v4324, %v4708
    %v4901 = vsub.f32 %v4325, %v4709
    %v4902 = vsub.f32 %v4326, %v4710
    %v4903 = vsub.f32 %v4327, %v4711
    %v4904 = vsub.f32 %v4328, %v4712
    %v4905 = vsub.f32 %v4329, %v4713
    %v4906 = vsub.f32 %v4330, %v4714
    %v4907 = vsub.f32 %v4331, %v4715
    %v4908 = vsub.f32 %v4332, %v4716
    %v4909 = vsub.f32 %v4333, %v4717
    %v4910 = vsub.f32 %v4334, %v4718
    %v4911 = vsub.f32 %v4335, %v4719
    %v4912 = vsub.f32 %v4336, %v4720
    %v4913 = vsub.f32 %v4337, %v4721
    %v4914 = vsub.f32 %v4338, %v4722
    %v4915 = vsub.f32 %v4339, %v4723
    %v4916 = vsub.f32 %v4340, %v4724
    %v4917 = vsub.f32 %v4341, %v4725
    %v4918 = vsub.f32 %v4342, %v4726
    %v4919 = vsub.f32 %v4343, %v4727
    %v4920 = vsub.f32 %v4344, %v4728
    %v4921 = vsub.f32 %v4345, %v4729
    %v4922 = vsub.f32 %v4346, %v4730
    %v4923 = vsub.f32 %v4347, %v4731
    %v4924 = vsub.f32 %v4348, %v4732
    %v4925 = vsub.f32 %v4349, %v4733
    %v4926 = vsub.f32 %v4350, %v4734
    %v4927 = vsub.f32 %v4351, %v4735
    %v4928 = vsub.f32 %v4352, %v4736
    %v4929 = vsub.f32 %v4353, %v4737
    %v4930 = vsub.f32 %v4354, %v4738
    %v4931 = vsub.f32 %v4355, %v4739
    %v4932 = vsub.f32 %v4356, %v4740
    %v4933 = vsub.f32 %v4357, %v4741
    %v4934 = vsub.f32 %v4358, %v4742
    %v4935 = vsub.f32 %v4359, %v4743
    %v4936 = vsub.f32 %v4360, %v4744
    %v4937 = vsub.f32 %v4361, %v4745
    %v4938 = vsub.f32 %v4362, %v4746
    %v4939 = vsub.f32 %v4363, %v4747
    %v4940 = vsub.f32 %v4364, %v4748
    %v4941 = vsub.f32 %v4365, %v4749
    %v4942 = vsub.f32 %v4366, %v4750
    %v4943 = vsub.f32 %v4367, %v4751
    %v4944 = vsub.f32 %v4368, %v4752
    %v4945 = vsub.f32 %v4369, %v4753
    %v4946 = vsub.f32 %v4370, %v4754
    %v4947 = vsub.f32 %v4371, %v4755
    %v4948 = vsub.f32 %v4372, %v4756
    %v4949 = vsub.f32 %v4373, %v4757
    %v4950 = vsub.f32 %v4374, %v4758
    %v4951 = vsub.f32 %v4375, %v4759
    %v4952 = vsub.f32 %v4376, %v4760
    %v4953 = vsub.f32 %v4377, %v4761
    %v4954 = vsub.f32 %v4378, %v4762
    %v4955 = vsub.f32 %v4379, %v4763
    %v4956 = vsub.f32 %v4380, %v4764
    %v4957 = vsub.f32 %v4381, %v4765
    %v4958 = vsub.f32 %v4382, %v4766
    %v4959 = vsub.f32 %v4383, %v4767
    %v4960 = vsub.f32 %v4384, %v4768
    %v4961 = vsub.f32 %v4385, %v4769
    %v4962 = vsub.f32 %v4386, %v4770
    %v4963 = vsub.f32 %v4387, %v4771
    %v4964 = vsub.f32 %v4388, %v4772
    %v4965 = vsub.f32 %v4389, %v4773
    %v4966 = vsub.f32 %v4390, %v4774
    %v4967 = vsub.f32 %v4391, %v4775
    %v4968 = vsub.f32 %v4392, %v4776
    %v4969 = vsub.f32 %v4393, %v4777
    %v4970 = vsub.f32 %v4394, %v4778
    %v4971 = vsub.f32 %v4395, %v4779
    %v4972 = vsub.f32 %v4396, %v4780
    %v4973 = vsub.f32 %v4397, %v4781
    %v4974 = vsub.f32 %v4398, %v4782
    %v4975 = vsub.f32 %v4399, %v4783
    %v4976 = vsub.f32 %v4400, %v4784
    %v4977 = vsub.f32 %v4401, %v4785
    %v4978 = vsub.f32 %v4402, %v4786
    %v4979 = vsub.f32 %v4403, %v4787
    %v4980 = vsub.f32 %v4404, %v4788
    %v4981 = vsub.f32 %v4405, %v4789
    %v4982 = vsub.f32 %v4406, %v4790
    %v4983 = vsub.f32 %v4407, %v4791
    %v4984 = vsub.f32 %v4408, %v4792
    %v4985 = vsub.f32 %v4409, %v4793
    %v4986 = vsub.f32 %v4410, %v4794
    %v4987 = vsub.f32 %v4411, %v4795
    %v4988 = vsub.f32 %v4412, %v4796
    %v4989 = vsub.f32 %v4413, %v4797
    %v4990 = vsub.f32 %v4414, %v4798
    %v4991 = vsub.f32 %v4415, %v4799
    %v4992 = vsub.f32 %v4416, %v4800
    %v4993 = vsub.f32 %v4417, %v4801
    %v4994 = vsub.f32 %v4418, %v4802
    %v4995 = vsub.f32 %v4419, %v4803
    %v4996 = vsub.f32 %v4420, %v4804
    %v4997 = vsub.f32 %v4421, %v4805
    %v4998 = vsub.f32 %v4422, %v4806
    %v4999 = vsub.f32 %v4423, %v4807
    %v5000 = vsub.f32 %v4424, %v4808
    %v5001 = vsub.f32 %v4425, %v4809
    %v5002 = vsub.f32 %v4426, %v4810
    %v5003 = vsub.f32 %v4427, %v4811
    %v5004 = vsub.f32 %v4428, %v4812
    %v5005 = vsub.f32 %v4429, %v4813
    %v5006 = vsub.f32 %v4430, %v4814
    %v5007 = vsub.f32 %v4431, %v4815
    %v5008 = vsub.f32 %v4432, %v4816
    %v5009 = vsub.f32 %v4433, %v4817
    %v5010 = vmul.f32 %v4818, %v4818
    %v5011 = vmul.f32 %v4819, %v4819
    %v5012 = vmul.f32 %v4820, %v4820
    %v5013 = vmul.f32 %v4821, %v4821
    %v5014 = vmul.f32 %v4822, %v4822
    %v5015 = vmul.f32 %v4823, %v4823
    %v5016 = vmul.f32 %v4824, %v4824
    %v5017 = vmul.f32 %v4825, %v4825
    %v5018 = vmul.f32 %v4826, %v4826
    %v5019 = vmul.f32 %v4827, %v4827
    %v5020 = vmul.f32 %v4828, %v4828
    %v5021 = vmul.f32 %v4829, %v4829
    %v5022 = vmul.f32 %v4830, %v4830
    %v5023 = vmul.f32 %v4831, %v4831
    %v5024 = vmul.f32 %v4832, %v4832
    %v5025 = vmul.f32 %v4833, %v4833
    %v5026 = vmul.f32 %v4834, %v4834
    %v5027 = vmul.f32 %v4835, %v4835
    %v5028 = vmul.f32 %v4836, %v4836
    %v5029 = vmul.f32 %v4837, %v4837
    %v5030 = vmul.f32 %v4838, %v4838
    %v5031 = vmul.f32 %v4839, %v4839
    %v5032 = vmul.f32 %v4840, %v4840
    %v5033 = vmul.f32 %v4841, %v4841
    %v5034 = vmul.f32 %v4842, %v4842
    %v5035 = vmul.f32 %v4843, %v4843
    %v5036 = vmul.f32 %v4844, %v4844
    %v5037 = vmul.f32 %v4845, %v4845
    %v5038 = vmul.f32 %v4846, %v4846
    %v5039 = vmul.f32 %v4847, %v4847
    %v5040 = vmul.f32 %v4848, %v4848
    %v5041 = vmul.f32 %v4849, %v4849
    %v5042 = vmul.f32 %v4850, %v4850
    %v5043 = vmul.f32 %v4851, %v4851
    %v5044 = vmul.f32 %v4852, %v4852
    %v5045 = vmul.f32 %v4853, %v4853
    %v5046 = vmul.f32 %v4854, %v4854
    %v5047 = vmul.f32 %v4855, %v4855
    %v5048 = vmul.f32 %v4856, %v4856
    %v5049 = vmul.f32 %v4857, %v4857
    %v5050 = vmul.f32 %v4858, %v4858
    %v5051 = vmul.f32 %v4859, %v4859
    %v5052 = vmul.f32 %v4860, %v4860
    %v5053 = vmul.f32 %v4861, %v4861
    %v5054 = vmul.f32 %v4862, %v4862
    %v5055 = vmul.f32 %v4863, %v4863
    %v5056 = vmul.f32 %v4864, %v4864
    %v5057 = vmul.f32 %v4865, %v4865
    %v5058 = vmul.f32 %v4866, %v4866
    %v5059 = vmul.f32 %v4867, %v4867
    %v5060 = vmul.f32 %v4868, %v4868
    %v5061 = vmul.f32 %v4869, %v4869
    %v5062 = vmul.f32 %v4870, %v4870
    %v5063 = vmul.f32 %v4871, %v4871
    %v5064 = vmul.f32 %v4872, %v4872
    %v5065 = vmul.f32 %v4873, %v4873
    %v5066 = vmul.f32 %v4874, %v4874
    %v5067 = vmul.f32 %v4875, %v4875
    %v5068 = vmul.f32 %v4876, %v4876
    %v5069 = vmul.f32 %v4877, %v4877
    %v5070 = vmul.f32 %v4878, %v4878
    %v5071 = vmul.f32 %v4879, %v4879
    %v5072 = vmul.f32 %v4880, %v4880
    %v5073 = vmul.f32 %v4881, %v4881
    %v5074 = vmul.f32 %v4882, %v4882
    %v5075 = vmul.f32 %v4883, %v4883
    %v5076 = vmul.f32 %v4884, %v4884
    %v5077 = vmul.f32 %v4885, %v4885
    %v5078 = vmul.f32 %v4886, %v4886
    %v5079 = vmul.f32 %v4887, %v4887
    %v5080 = vmul.f32 %v4888, %v4888
    %v5081 = vmul.f32 %v4889, %v4889
    %v5082 = vmul.f32 %v4890, %v4890
    %v5083 = vmul.f32 %v4891, %v4891
    %v5084 = vmul.f32 %v4892, %v4892
    %v5085 = vmul.f32 %v4893, %v4893
    %v5086 = vmul.f32 %v4894, %v4894
    %v5087 = vmul.f32 %v4895, %v4895
    %v5088 = vmul.f32 %v4896, %v4896
    %v5089 = vmul.f32 %v4897, %v4897
    %v5090 = vmul.f32 %v4898, %v4898
    %v5091 = vmul.f32 %v4899, %v4899
    %v5092 = vmul.f32 %v4900, %v4900
    %v5093 = vmul.f32 %v4901, %v4901
    %v5094 = vmul.f32 %v4902, %v4902
    %v5095 = vmul.f32 %v4903, %v4903
    %v5096 = vmul.f32 %v4904, %v4904
    %v5097 = vmul.f32 %v4905, %v4905
    %v5098 = vmul.f32 %v4906, %v4906
    %v5099 = vmul.f32 %v4907, %v4907
    %v5100 = vmul.f32 %v4908, %v4908
    %v5101 = vmul.f32 %v4909, %v4909
    %v5102 = vmul.f32 %v4910, %v4910
    %v5103 = vmul.f32 %v4911, %v4911
    %v5104 = vmul.f32 %v4912, %v4912
    %v5105 = vmul.f32 %v4913, %v4913
    %v5106 = vmul.f32 %v4914, %v4914
    %v5107 = vmul.f32 %v4915, %v4915
    %v5108 = vmul.f32 %v4916, %v4916
    %v5109 = vmul.f32 %v4917, %v4917
    %v5110 = vmul.f32 %v4918, %v4918
    %v5111 = vmul.f32 %v4919, %v4919
    %v5112 = vmul.f32 %v4920, %v4920
    %v5113 = vmul.f32 %v4921, %v4921
    %v5114 = vmul.f32 %v4922, %v4922
    %v5115 = vmul.f32 %v4923, %v4923
    %v5116 = vmul.f32 %v4924, %v4924
    %v5117 = vmul.f32 %v4925, %v4925
    %v5118 = vmul.f32 %v4926, %v4926
    %v5119 = vmul.f32 %v4927, %v4927
    %v5120 = vmul.f32 %v4928, %v4928
    %v5121 = vmul.f32 %v4929, %v4929
    %v5122 = vmul.f32 %v4930, %v4930
    %v5123 = vmul.f32 %v4931, %v4931
    %v5124 = vmul.f32 %v4932, %v4932
    %v5125 = vmul.f32 %v4933, %v4933
    %v5126 = vmul.f32 %v4934, %v4934
    %v5127 = vmul.f32 %v4935, %v4935
    %v5128 = vmul.f32 %v4936, %v4936
    %v5129 = vmul.f32 %v4937, %v4937
    %v5130 = vmul.f32 %v4938, %v4938
    %v5131 = vmul.f32 %v4939, %v4939
    %v5132 = vmul.f32 %v4940, %v4940
    %v5133 = vmul.f32 %v4941, %v4941
    %v5134 = vmul.f32 %v4942, %v4942
    %v5135 = vmul.f32 %v4943, %v4943
    %v5136 = vmul.f32 %v4944, %v4944
    %v5137 = vmul.f32 %v4945, %v4945
    %v5138 = vmul.f32 %v4946, %v4946
    %v5139 = vmul.f32 %v4947, %v4947
    %v5140 = vmul.f32 %v4948, %v4948
    %v5141 = vmul.f32 %v4949, %v4949
    %v5142 = vmul.f32 %v4950, %v4950
    %v5143 = vmul.f32 %v4951, %v4951
    %v5144 = vmul.f32 %v4952, %v4952
    %v5145 = vmul.f32 %v4953, %v4953
    %v5146 = vmul.f32 %v4954, %v4954
    %v5147 = vmul.f32 %v4955, %v4955
    %v5148 = vmul.f32 %v4956, %v4956
    %v5149 = vmul.f32 %v4957, %v4957
    %v5150 = vmul.f32 %v4958, %v4958
    %v5151 = vmul.f32 %v4959, %v4959
    %v5152 = vmul.f32 %v4960, %v4960
    %v5153 = vmul.f32 %v4961, %v4961
    %v5154 = vmul.f32 %v4962, %v4962
    %v5155 = vmul.f32 %v4963, %v4963
    %v5156 = vmul.f32 %v4964, %v4964
    %v5157 = vmul.f32 %v4965, %v4965
    %v5158 = vmul.f32 %v4966, %v4966
    %v5159 = vmul.f32 %v4967, %v4967
    %v5160 = vmul.f32 %v4968, %v4968
    %v5161 = vmul.f32 %v4969, %v4969
    %v5162 = vmul.f32 %v4970, %v4970
    %v5163 = vmul.f32 %v4971, %v4971
    %v5164 = vmul.f32 %v4972, %v4972
    %v5165 = vmul.f32 %v4973, %v4973
    %v5166 = vmul.f32 %v4974, %v4974
    %v5167 = vmul.f32 %v4975, %v4975
    %v5168 = vmul.f32 %v4976, %v4976
    %v5169 = vmul.f32 %v4977, %v4977
    %v5170 = vmul.f32 %v4978, %v4978
    %v5171 = vmul.f32 %v4979, %v4979
    %v5172 = vmul.f32 %v4980, %v4980
    %v5173 = vmul.f32 %v4981, %v4981
    %v5174 = vmul.f32 %v4982, %v4982
    %v5175 = vmul.f32 %v4983, %v4983
    %v5176 = vmul.f32 %v4984, %v4984
    %v5177 = vmul.f32 %v4985, %v4985
    %v5178 = vmul.f32 %v4986, %v4986
    %v5179 = vmul.f32 %v4987, %v4987
    %v5180 = vmul.f32 %v4988, %v4988
    %v5181 = vmul.f32 %v4989, %v4989
    %v5182 = vmul.f32 %v4990, %v4990
    %v5183 = vmul.f32 %v4991, %v4991
    %v5184 = vmul.f32 %v4992, %v4992
    %v5185 = vmul.f32 %v4993, %v4993
    %v5186 = vmul.f32 %v4994, %v4994
    %v5187 = vmul.f32 %v4995, %v4995
    %v5188 = vmul.f32 %v4996, %v4996
    %v5189 = vmul.f32 %v4997, %v4997
    %v5190 = vmul.f32 %v4998, %v4998
    %v5191 = vmul.f32 %v4999, %v4999
    %v5192 = vmul.f32 %v5000, %v5000
    %v5193 = vmul.f32 %v5001, %v5001
    %v5194 = vmul.f32 %v5002, %v5002
    %v5195 = vmul.f32 %v5003, %v5003
    %v5196 = vmul.f32 %v5004, %v5004
    %v5197 = vmul.f32 %v5005, %v5005
    %v5198 = vmul.f32 %v5006, %v5006
    %v5199 = vmul.f32 %v5007, %v5007
    %v5200 = vmul.f32 %v5008, %v5008
    %v5201 = vmul.f32 %v5009, %v5009
    %v5202 = vadd.f32 %v5010, %v5011
    %v5203 = vadd.f32 %v5202, %v5012
    %v5204 = vadd.f32 %v5203, %v5013
    %v5205 = vadd.f32 %v5204, %v5014
    %v5206 = vadd.f32 %v5205, %v5015
    %v5207 = vadd.f32 %v5206, %v5016
    %v5208 = vadd.f32 %v5207, %v5017
    %v5209 = vadd.f32 %v5208, %v5018
    %v5210 = vadd.f32 %v5209, %v5019
    %v5211 = vadd.f32 %v5210, %v5020
    %v5212 = vadd.f32 %v5211, %v5021
    %v5213 = vadd.f32 %v5212, %v5022
    %v5214 = vadd.f32 %v5213, %v5023
    %v5215 = vadd.f32 %v5214, %v5024
    %v5216 = vadd.f32 %v5215, %v5025
    %v5217 = vadd.f32 %v5216, %v5026
    %v5218 = vadd.f32 %v5217, %v5027
    %v5219 = vadd.f32 %v5218, %v5028
    %v5220 = vadd.f32 %v5219, %v5029
    %v5221 = vadd.f32 %v5220, %v5030
    %v5222 = vadd.f32 %v5221, %v5031
    %v5223 = vadd.f32 %v5222, %v5032
    %v5224 = vadd.f32 %v5223, %v5033
    %v5225 = vadd.f32 %v5224, %v5034
    %v5226 = vadd.f32 %v5225, %v5035
    %v5227 = vadd.f32 %v5226, %v5036
    %v5228 = vadd.f32 %v5227, %v5037
    %v5229 = vadd.f32 %v5228, %v5038
    %v5230 = vadd.f32 %v5229, %v5039
    %v5231 = vadd.f32 %v5230, %v5040
    %v5232 = vadd.f32 %v5231, %v5041
    %v5233 = vadd.f32 %v5232, %v5042
    %v5234 = vadd.f32 %v5233, %v5043
    %v5235 = vadd.f32 %v5234, %v5044
    %v5236 = vadd.f32 %v5235, %v5045
    %v5237 = vadd.f32 %v5236, %v5046
    %v5238 = vadd.f32 %v5237, %v5047
    %v5239 = vadd.f32 %v5238, %v5048
    %v5240 = vadd.f32 %v5239, %v5049
    %v5241 = vadd.f32 %v5240, %v5050
    %v5242 = vadd.f32 %v5241, %v5051
    %v5243 = vadd.f32 %v5242, %v5052
    %v5244 = vadd.f32 %v5243, %v5053
    %v5245 = vadd.f32 %v5244, %v5054
    %v5246 = vadd.f32 %v5245, %v5055
    %v5247 = vadd.f32 %v5246, %v5056
    %v5248 = vadd.f32 %v5247, %v5057
    %v5249 = vadd.f32 %v5248, %v5058
    %v5250 = vadd.f32 %v5249, %v5059
    %v5251 = vadd.f32 %v5250, %v5060
    %v5252 = vadd.f32 %v5251, %v5061
    %v5253 = vadd.f32 %v5252, %v5062
    %v5254 = vadd.f32 %v5253, %v5063
    %v5255 = vadd.f32 %v5254, %v5064
    %v5256 = vadd.f32 %v5255, %v5065
    %v5257 = vadd.f32 %v5256, %v5066
    %v5258 = vadd.f32 %v5257, %v5067
    %v5259 = vadd.f32 %v5258, %v5068
    %v5260 = vadd.f32 %v5259, %v5069
    %v5261 = vadd.f32 %v5260, %v5070
    %v5262 = vadd.f32 %v5261, %v5071
    %v5263 = vadd.f32 %v5262, %v5072
    %v5264 = vadd.f32 %v5263, %v5073
    %v5265 = vadd.f32 %v5264, %v5074
    %v5266 = vadd.f32 %v5265, %v5075
    %v5267 = vadd.f32 %v5266, %v5076
    %v5268 = vadd.f32 %v5267, %v5077
    %v5269 = vadd.f32 %v5268, %v5078
    %v5270 = vadd.f32 %v5269, %v5079
    %v5271 = vadd.f32 %v5270, %v5080
    %v5272 = vadd.f32 %v5271, %v5081
    %v5273 = vadd.f32 %v5272, %v5082
    %v5274 = vadd.f32 %v5273, %v5083
    %v5275 = vadd.f32 %v5274, %v5084
    %v5276 = vadd.f32 %v5275, %v5085
    %v5277 = vadd.f32 %v5276, %v5086
    %v5278 = vadd.f32 %v5277, %v5087
    %v5279 = vadd.f32 %v5278, %v5088
    %v5280 = vadd.f32 %v5279, %v5089
    %v5281 = vadd.f32 %v5280, %v5090
    %v5282 = vadd.f32 %v5281, %v5091
    %v5283 = vadd.f32 %v5282, %v5092
    %v5284 = vadd.f32 %v5283, %v5093
    %v5285 = vadd.f32 %v5284, %v5094
    %v5286 = vadd.f32 %v5285, %v5095
    %v5287 = vadd.f32 %v5286, %v5096
    %v5288 = vadd.f32 %v5287, %v5097
    %v5289 = vadd.f32 %v5288, %v5098
    %v5290 = vadd.f32 %v5289, %v5099
    %v5291 = vadd.f32 %v5290, %v5100
    %v5292 = vadd.f32 %v5291, %v5101
    %v5293 = vadd.f32 %v5292, %v5102
    %v5294 = vadd.f32 %v5293, %v5103
    %v5295 = vadd.f32 %v5294, %v5104
    %v5296 = vadd.f32 %v5295, %v5105
    %v5297 = vadd.f32 %v5296, %v5106
    %v5298 = vadd.f32 %v5297, %v5107
    %v5299 = vadd.f32 %v5298, %v5108
    %v5300 = vadd.f32 %v5299, %v5109
    %v5301 = vadd.f32 %v5300, %v5110
    %v5302 = vadd.f32 %v5301, %v5111
    %v5303 = vadd.f32 %v5302, %v5112
    %v5304 = vadd.f32 %v5303, %v5113
    %v5305 = vadd.f32 %v5304, %v5114
    %v5306 = vadd.f32 %v5305, %v5115
    %v5307 = vadd.f32 %v5306, %v5116
    %v5308 = vadd.f32 %v5307, %v5117
    %v5309 = vadd.f32 %v5308, %v5118
    %v5310 = vadd.f32 %v5309, %v5119
    %v5311 = vadd.f32 %v5310, %v5120
    %v5312 = vadd.f32 %v5311, %v5121
    %v5313 = vadd.f32 %v5312, %v5122
    %v5314 = vadd.f32 %v5313, %v5123
    %v5315 = vadd.f32 %v5314, %v5124
    %v5316 = vadd.f32 %v5315, %v5125
    %v5317 = vadd.f32 %v5316, %v5126
    %v5318 = vadd.f32 %v5317, %v5127
    %v5319 = vadd.f32 %v5318, %v5128
    %v5320 = vadd.f32 %v5319, %v5129
    %v5321 = vadd.f32 %v5320, %v5130
    %v5322 = vadd.f32 %v5321, %v5131
    %v5323 = vadd.f32 %v5322, %v5132
    %v5324 = vadd.f32 %v5323, %v5133
    %v5325 = vadd.f32 %v5324, %v5134
    %v5326 = vadd.f32 %v5325, %v5135
    %v5327 = vadd.f32 %v5326, %v5136
    %v5328 = vadd.f32 %v5327, %v5137
    %v5329 = vadd.f32 %v5328, %v5138
    %v5330 = vadd.f32 %v5329, %v5139
    %v5331 = vadd.f32 %v5330, %v5140
    %v5332 = vadd.f32 %v5331, %v5141
    %v5333 = vadd.f32 %v5332, %v5142
    %v5334 = vadd.f32 %v5333, %v5143
    %v5335 = vadd.f32 %v5334, %v5144
    %v5336 = vadd.f32 %v5335, %v5145
    %v5337 = vadd.f32 %v5336, %v5146
    %v5338 = vadd.f32 %v5337, %v5147
    %v5339 = vadd.f32 %v5338, %v5148
    %v5340 = vadd.f32 %v5339, %v5149
    %v5341 = vadd.f32 %v5340, %v5150
    %v5342 = vadd.f32 %v5341, %v5151
    %v5343 = vadd.f32 %v5342, %v5152
    %v5344 = vadd.f32 %v5343, %v5153
    %v5345 = vadd.f32 %v5344, %v5154
    %v5346 = vadd.f32 %v5345, %v5155
    %v5347 = vadd.f32 %v5346, %v5156
    %v5348 = vadd.f32 %v5347, %v5157
    %v5349 = vadd.f32 %v5348, %v5158
    %v5350 = vadd.f32 %v5349, %v5159
    %v5351 = vadd.f32 %v5350, %v5160
    %v5352 = vadd.f32 %v5351, %v5161
    %v5353 = vadd.f32 %v5352, %v5162
    %v5354 = vadd.f32 %v5353, %v5163
    %v5355 = vadd.f32 %v5354, %v5164
    %v5356 = vadd.f32 %v5355, %v5165
    %v5357 = vadd.f32 %v5356, %v5166
    %v5358 = vadd.f32 %v5357, %v5167
    %v5359 = vadd.f32 %v5358, %v5168
    %v5360 = vadd.f32 %v5359, %v5169
    %v5361 = vadd.f32 %v5360, %v5170
    %v5362 = vadd.f32 %v5361, %v5171
    %v5363 = vadd.f32 %v5362, %v5172
    %v5364 = vadd.f32 %v5363, %v5173
    %v5365 = vadd.f32 %v5364, %v5174
    %v5366 = vadd.f32 %v5365, %v5175
    %v5367 = vadd.f32 %v5366, %v5176
    %v5368 = vadd.f32 %v5367, %v5177
    %v5369 = vadd.f32 %v5368, %v5178
    %v5370 = vadd.f32 %v5369, %v5179
    %v5371 = vadd.f32 %v5370, %v5180
    %v5372 = vadd.f32 %v5371, %v5181
    %v5373 = vadd.f32 %v5372, %v5182
    %v5374 = vadd.f32 %v5373, %v5183
    %v5375 = vadd.f32 %v5374, %v5184
    %v5376 = vadd.f32 %v5375, %v5185
    %v5377 = vadd.f32 %v5376, %v5186
    %v5378 = vadd.f32 %v5377, %v5187
    %v5379 = vadd.f32 %v5378, %v5188
    %v5380 = vadd.f32 %v5379, %v5189
    %v5381 = vadd.f32 %v5380, %v5190
    %v5382 = vadd.f32 %v5381, %v5191
    %v5383 = vadd.f32 %v5382, %v5192
    %v5384 = vadd.f32 %v5383, %v5193
    %v5385 = vadd.f32 %v5384, %v5194
    %v5386 = vadd.f32 %v5385, %v5195
    %v5387 = vadd.f32 %v5386, %v5196
    %v5388 = vadd.f32 %v5387, %v5197
    %v5389 = vadd.f32 %v5388, %v5198
    %v5390 = vadd.f32 %v5389, %v5199
    %v5391 = vadd.f32 %v5390, %v5200
    %v5392 = vadd.f32 %v5391, %v5201
    %v5393 = vrot.slane %v5392, 4
    %v5394 = vadd.f32 %v5392, %v5393
    %v5395 = vrot.slane %v5394, 2
    %v5396 = vadd.f32 %v5394, %v5395
    %v5397 = vrot.slane %v5396, 1
    %v5398 = vadd.f32 %v5396, %v5397
    %5399 = vst [vmem:[#allocation6] sm:$0x1] %v5398
    %v5400 = vld [vmem:[%s0] sm:$0xff]
    %v5401 = vld [vmem:[%s0 + $0x8] sm:$0xff]
    %v5402 = vld [vmem:[%s0 + $0x10] sm:$0xff]
    %v5403 = vld [vmem:[%s0 + $0x18] sm:$0xff]
    %v5404 = vld [vmem:[%s0 + $0x20] sm:$0xff]
    %v5405 = vld [vmem:[%s0 + $0x28] sm:$0xff]
    %v5406 = vld [vmem:[%s0 + $0x30] sm:$0xff]
    %v5407 = vld [vmem:[%s0 + $0x38] sm:$0xff]
    %v5408 = vld [vmem:[%s0 + $0x40] sm:$0xff]
    %v5409 = vld [vmem:[%s0 + $0x48] sm:$0xff]
    %v5410 = vld [vmem:[%s0 + $0x50] sm:$0xff]
    %v5411 = vld [vmem:[%s0 + $0x58] sm:$0xff]
    %v5412 = vld [vmem:[%s0 + $0x60] sm:$0xff]
    %v5413 = vld [vmem:[%s0 + $0x68] sm:$0xff]
    %v5414 = vld [vmem:[%s0 + $0x70] sm:$0xff]
    %v5415 = vld [vmem:[%s0 + $0x78] sm:$0xff]
    %v5416 = vld [vmem:[%s0 + $0x80] sm:$0xff]
    %v5417 = vld [vmem:[%s0 + $0x88] sm:$0xff]
    %v5418 = vld [vmem:[%s0 + $0x90] sm:$0xff]
    %v5419 = vld [vmem:[%s0 + $0x98] sm:$0xff]
    %v5420 = vld [vmem:[%s0 + $0xa0] sm:$0xff]
    %v5421 = vld [vmem:[%s0 + $0xa8] sm:$0xff]
    %v5422 = vld [vmem:[%s0 + $0xb0] sm:$0xff]
    %v5423 = vld [vmem:[%s0 + $0xb8] sm:$0xff]
    %v5424 = vld [vmem:[%s0 + $0xc0] sm:$0xff]
    %v5425 = vld [vmem:[%s0 + $0xc8] sm:$0xff]
    %v5426 = vld [vmem:[%s0 + $0xd0] sm:$0xff]
    %v5427 = vld [vmem:[%s0 + $0xd8] sm:$0xff]
    %v5428 = vld [vmem:[%s0 + $0xe0] sm:$0xff]
    %v5429 = vld [vmem:[%s0 + $0xe8] sm:$0xff]
    %v5430 = vld [vmem:[%s0 + $0xf0] sm:$0xff]
    %v5431 = vld [vmem:[%s0 + $0xf8] sm:$0xff]
    %v5432 = vld [vmem:[%s0 + $0x100] sm:$0xff]
    %v5433 = vld [vmem:[%s0 + $0x108] sm:$0xff]
    %v5434 = vld [vmem:[%s0 + $0x110] sm:$0xff]
    %v5435 = vld [vmem:[%s0 + $0x118] sm:$0xff]
    %v5436 = vld [vmem:[%s0 + $0x120] sm:$0xff]
    %v5437 = vld [vmem:[%s0 + $0x128] sm:$0xff]
    %v5438 = vld [vmem:[%s0 + $0x130] sm:$0xff]
    %v5439 = vld [vmem:[%s0 + $0x138] sm:$0xff]
    %v5440 = vld [vmem:[%s3] sm:$0xff]
    %v5441 = vld [vmem:[%s3 + $0x8] sm:$0xff]
    %v5442 = vld [vmem:[%s3 + $0x10] sm:$0xff]
    %v5443 = vld [vmem:[%s3 + $0x18] sm:$0xff]
    %v5444 = vld [vmem:[%s3 + $0x20] sm:$0xff]
    %v5445 = vld [vmem:[%s3 + $0x28] sm:$0xff]
    %v5446 = vld [vmem:[%s3 + $0x30] sm:$0xff]
    %v5447 = vld [vmem:[%s3 + $0x38] sm:$0xff]
    %v5448 = vld [vmem:[%s3 + $0x40] sm:$0xff]
    %v5449 = vld [vmem:[%s3 + $0x48] sm:$0xff]
    %v5450 = vld [vmem:[%s3 + $0x50] sm:$0xff]
    %v5451 = vld [vmem:[%s3 + $0x58] sm:$0xff]
    %v5452 = vld [vmem:[%s3 + $0x60] sm:$0xff]
    %v5453 = vld [vmem:[%s3 + $0x68] sm:$0xff]
    %v5454 = vld [vmem:[%s3 + $0x70] sm:$0xff]
    %v5455 = vld [vmem:[%s3 + $0x78] sm:$0xff]
    %v5456 = vld [vmem:[%s3 + $0x80] sm:$0xff]
    %v5457 = vld [vmem:[%s3 + $0x88] sm:$0xff]
    %v5458 = vld [vmem:[%s3 + $0x90] sm:$0xff]
    %v5459 = vld [vmem:[%s3 + $0x98] sm:$0xff]
    %v5460 = vld [vmem:[%s3 + $0xa0] sm:$0xff]
    %v5461 = vld [vmem:[%s3 + $0xa8] sm:$0xff]
    %v5462 = vld [vmem:[%s3 + $0xb0] sm:$0xff]
    %v5463 = vld [vmem:[%s3 + $0xb8] sm:$0xff]
    %v5464 = vld [vmem:[%s3 + $0xc0] sm:$0xff]
    %v5465 = vld [vmem:[%s3 + $0xc8] sm:$0xff]
    %v5466 = vld [vmem:[%s3 + $0xd0] sm:$0xff]
    %v5467 = vld [vmem:[%s3 + $0xd8] sm:$0xff]
    %v5468 = vld [vmem:[%s3 + $0xe0] sm:$0xff]
    %v5469 = vld [vmem:[%s3 + $0xe8] sm:$0xff]
    %v5470 = vld [vmem:[%s3 + $0xf0] sm:$0xff]
    %v5471 = vld [vmem:[%s3 + $0xf8] sm:$0xff]
    %v5472 = vld [vmem:[%s3 + $0x100] sm:$0xff]
    %v5473 = vld [vmem:[%s3 + $0x108] sm:$0xff]
    %v5474 = vld [vmem:[%s3 + $0x110] sm:$0xff]
    %v5475 = vld [vmem:[%s3 + $0x118] sm:$0xff]
    %v5476 = vld [vmem:[%s3 + $0x120] sm:$0xff]
    %v5477 = vld [vmem:[%s3 + $0x128] sm:$0xff]
    %v5478 = vld [vmem:[%s3 + $0x130] sm:$0xff]
    %v5479 = vld [vmem:[%s3 + $0x138] sm:$0xff]
    %5481 = vset.pattern.permute.xlu0 0
    %5482 = vperm.xlu0 %5481, %v5440
    %v5483 = vpop.permute.xlu0 %5482
    %5486 = vset.pattern.permute.xlu0 0
    %5487 = vperm.xlu0 %5486, %v5441
    %v5488 = vpop.permute.xlu0 %5487
    %5491 = vset.pattern.permute.xlu0 0
    %5492 = vperm.xlu0 %5491, %v5442
    %v5493 = vpop.permute.xlu0 %5492
    %5496 = vset.pattern.permute.xlu0 0
    %5497 = vperm.xlu0 %5496, %v5443
    %v5498 = vpop.permute.xlu0 %5497
    %5501 = vset.pattern.permute.xlu0 0
    %5502 = vperm.xlu0 %5501, %v5444
    %v5503 = vpop.permute.xlu0 %5502
    %5506 = vset.pattern.permute.xlu0 0
    %5507 = vperm.xlu0 %5506, %v5445
    %v5508 = vpop.permute.xlu0 %5507
    %5511 = vset.pattern.permute.xlu0 0
    %5512 = vperm.xlu0 %5511, %v5446
    %v5513 = vpop.permute.xlu0 %5512
    %5516 = vset.pattern.permute.xlu0 0
    %5517 = vperm.xlu0 %5516, %v5447
    %v5518 = vpop.permute.xlu0 %5517
    %5521 = vset.pattern.permute.xlu0 0
    %5522 = vperm.xlu0 %5521, %v5448
    %v5523 = vpop.permute.xlu0 %5522
    %5526 = vset.pattern.permute.xlu0 0
    %5527 = vperm.xlu0 %5526, %v5449
    %v5528 = vpop.permute.xlu0 %5527
    %5531 = vset.pattern.permute.xlu0 0
    %5532 = vperm.xlu0 %5531, %v5450
    %v5533 = vpop.permute.xlu0 %5532
    %5536 = vset.pattern.permute.xlu0 0
    %5537 = vperm.xlu0 %5536, %v5451
    %v5538 = vpop.permute.xlu0 %5537
    %5541 = vset.pattern.permute.xlu0 0
    %5542 = vperm.xlu0 %5541, %v5452
    %v5543 = vpop.permute.xlu0 %5542
    %5546 = vset.pattern.permute.xlu0 0
    %5547 = vperm.xlu0 %5546, %v5453
    %v5548 = vpop.permute.xlu0 %5547
    %5551 = vset.pattern.permute.xlu0 0
    %5552 = vperm.xlu0 %5551, %v5454
    %v5553 = vpop.permute.xlu0 %5552
    %5556 = vset.pattern.permute.xlu0 0
    %5557 = vperm.xlu0 %5556, %v5455
    %v5558 = vpop.permute.xlu0 %5557
    %5561 = vset.pattern.permute.xlu0 0
    %5562 = vperm.xlu0 %5561, %v5456
    %v5563 = vpop.permute.xlu0 %5562
    %5566 = vset.pattern.permute.xlu0 0
    %5567 = vperm.xlu0 %5566, %v5457
    %v5568 = vpop.permute.xlu0 %5567
    %5571 = vset.pattern.permute.xlu0 0
    %5572 = vperm.xlu0 %5571, %v5458
    %v5573 = vpop.permute.xlu0 %5572
    %5576 = vset.pattern.permute.xlu0 0
    %5577 = vperm.xlu0 %5576, %v5459
    %v5578 = vpop.permute.xlu0 %5577
    %5581 = vset.pattern.permute.xlu0 0
    %5582 = vperm.xlu0 %5581, %v5460
    %v5583 = vpop.permute.xlu0 %5582
    %5586 = vset.pattern.permute.xlu0 0
    %5587 = vperm.xlu0 %5586, %v5461
    %v5588 = vpop.permute.xlu0 %5587
    %5591 = vset.pattern.permute.xlu0 0
    %5592 = vperm.xlu0 %5591, %v5462
    %v5593 = vpop.permute.xlu0 %5592
    %5596 = vset.pattern.permute.xlu0 0
    %5597 = vperm.xlu0 %5596, %v5463
    %v5598 = vpop.permute.xlu0 %5597
    %5601 = vset.pattern.permute.xlu0 0
    %5602 = vperm.xlu0 %5601, %v5464
    %v5603 = vpop.permute.xlu0 %5602
    %5606 = vset.pattern.permute.xlu0 0
    %5607 = vperm.xlu0 %5606, %v5465
    %v5608 = vpop.permute.xlu0 %5607
    %5611 = vset.pattern.permute.xlu0 0
    %5612 = vperm.xlu0 %5611, %v5466
    %v5613 = vpop.permute.xlu0 %5612
    %5616 = vset.pattern.permute.xlu0 0
    %5617 = vperm.xlu0 %5616, %v5467
    %v5618 = vpop.permute.xlu0 %5617
    %5621 = vset.pattern.permute.xlu0 0
    %5622 = vperm.xlu0 %5621, %v5468
    %v5623 = vpop.permute.xlu0 %5622
    %5626 = vset.pattern.permute.xlu0 0
    %5627 = vperm.xlu0 %5626, %v5469
    %v5628 = vpop.permute.xlu0 %5627
    %5631 = vset.pattern.permute.xlu0 0
    %5632 = vperm.xlu0 %5631, %v5470
    %v5633 = vpop.permute.xlu0 %5632
    %5636 = vset.pattern.permute.xlu0 0
    %5637 = vperm.xlu0 %5636, %v5471
    %v5638 = vpop.permute.xlu0 %5637
    %5641 = vset.pattern.permute.xlu0 0
    %5642 = vperm.xlu0 %5641, %v5472
    %v5643 = vpop.permute.xlu0 %5642
    %5646 = vset.pattern.permute.xlu0 0
    %5647 = vperm.xlu0 %5646, %v5473
    %v5648 = vpop.permute.xlu0 %5647
    %5651 = vset.pattern.permute.xlu0 0
    %5652 = vperm.xlu0 %5651, %v5474
    %v5653 = vpop.permute.xlu0 %5652
    %5656 = vset.pattern.permute.xlu0 0
    %5657 = vperm.xlu0 %5656, %v5475
    %v5658 = vpop.permute.xlu0 %5657
    %5661 = vset.pattern.permute.xlu0 0
    %5662 = vperm.xlu0 %5661, %v5476
    %v5663 = vpop.permute.xlu0 %5662
    %5666 = vset.pattern.permute.xlu0 0
    %5667 = vperm.xlu0 %5666, %v5477
    %v5668 = vpop.permute.xlu0 %5667
    %5671 = vset.pattern.permute.xlu0 0
    %5672 = vperm.xlu0 %5671, %v5478
    %v5673 = vpop.permute.xlu0 %5672
    %5676 = vset.pattern.permute.xlu0 0
    %5677 = vperm.xlu0 %5676, %v5479
    %v5678 = vpop.permute.xlu0 %5677
    %v5680 = vmul.f32 %v5400, %v5483
    %v5681 = vmul.f32 %v5401, %v5488
    %v5682 = vmul.f32 %v5402, %v5493
    %v5683 = vmul.f32 %v5403, %v5498
    %v5684 = vmul.f32 %v5404, %v5503
    %v5685 = vmul.f32 %v5405, %v5508
    %v5686 = vmul.f32 %v5406, %v5513
    %v5687 = vmul.f32 %v5407, %v5518
    %v5688 = vmul.f32 %v5408, %v5523
    %v5689 = vmul.f32 %v5409, %v5528
    %v5690 = vmul.f32 %v5410, %v5533
    %v5691 = vmul.f32 %v5411, %v5538
    %v5692 = vmul.f32 %v5412, %v5543
    %v5693 = vmul.f32 %v5413, %v5548
    %v5694 = vmul.f32 %v5414, %v5553
    %v5695 = vmul.f32 %v5415, %v5558
    %v5696 = vmul.f32 %v5416, %v5563
    %v5697 = vmul.f32 %v5417, %v5568
    %v5698 = vmul.f32 %v5418, %v5573
    %v5699 = vmul.f32 %v5419, %v5578
    %v5700 = vmul.f32 %v5420, %v5583
    %v5701 = vmul.f32 %v5421, %v5588
    %v5702 = vmul.f32 %v5422, %v5593
    %v5703 = vmul.f32 %v5423, %v5598
    %v5704 = vmul.f32 %v5424, %v5603
    %v5705 = vmul.f32 %v5425, %v5608
    %v5706 = vmul.f32 %v5426, %v5613
    %v5707 = vmul.f32 %v5427, %v5618
    %v5708 = vmul.f32 %v5428, %v5623
    %v5709 = vmul.f32 %v5429, %v5628
    %v5710 = vmul.f32 %v5430, %v5633
    %v5711 = vmul.f32 %v5431, %v5638
    %v5712 = vmul.f32 %v5432, %v5643
    %v5713 = vmul.f32 %v5433, %v5648
    %v5714 = vmul.f32 %v5434, %v5653
    %v5715 = vmul.f32 %v5435, %v5658
    %v5716 = vmul.f32 %v5436, %v5663
    %v5717 = vmul.f32 %v5437, %v5668
    %v5718 = vmul.f32 %v5438, %v5673
    %v5719 = vmul.f32 %v5439, %v5678
    %5720 = vst [vmem:[#allocation4] sm:$0xff] %v5680
    %5721 = vst [vmem:[#allocation4 + $0x8] sm:$0xff] %v5681
    %5722 = vst [vmem:[#allocation4 + $0x10] sm:$0xff] %v5682
    %5723 = vst [vmem:[#allocation4 + $0x18] sm:$0xff] %v5683
    %5724 = vst [vmem:[#allocation4 + $0x20] sm:$0xff] %v5684
    %5725 = vst [vmem:[#allocation4 + $0x28] sm:$0xff] %v5685
    %5726 = vst [vmem:[#allocation4 + $0x30] sm:$0xff] %v5686
    %5727 = vst [vmem:[#allocation4 + $0x38] sm:$0xff] %v5687
    %5728 = vst [vmem:[#allocation4 + $0x40] sm:$0xff] %v5688
    %5729 = vst [vmem:[#allocation4 + $0x48] sm:$0xff] %v5689
    %5730 = vst [vmem:[#allocation4 + $0x50] sm:$0xff] %v5690
    %5731 = vst [vmem:[#allocation4 + $0x58] sm:$0xff] %v5691
    %5732 = vst [vmem:[#allocation4 + $0x60] sm:$0xff] %v5692
    %5733 = vst [vmem:[#allocation4 + $0x68] sm:$0xff] %v5693
    %5734 = vst [vmem:[#allocation4 + $0x70] sm:$0xff] %v5694
    %5735 = vst [vmem:[#allocation4 + $0x78] sm:$0xff] %v5695
    %5736 = vst [vmem:[#allocation4 + $0x80] sm:$0xff] %v5696
    %5737 = vst [vmem:[#allocation4 + $0x88] sm:$0xff] %v5697
    %5738 = vst [vmem:[#allocation4 + $0x90] sm:$0xff] %v5698
    %5739 = vst [vmem:[#allocation4 + $0x98] sm:$0xff] %v5699
    %5740 = vst [vmem:[#allocation4 + $0xa0] sm:$0xff] %v5700
    %5741 = vst [vmem:[#allocation4 + $0xa8] sm:$0xff] %v5701
    %5742 = vst [vmem:[#allocation4 + $0xb0] sm:$0xff] %v5702
    %5743 = vst [vmem:[#allocation4 + $0xb8] sm:$0xff] %v5703
    %5744 = vst [vmem:[#allocation4 + $0xc0] sm:$0xff] %v5704
    %5745 = vst [vmem:[#allocation4 + $0xc8] sm:$0xff] %v5705
    %5746 = vst [vmem:[#allocation4 + $0xd0] sm:$0xff] %v5706
    %5747 = vst [vmem:[#allocation4 + $0xd8] sm:$0xff] %v5707
    %5748 = vst [vmem:[#allocation4 + $0xe0] sm:$0xff] %v5708
    %5749 = vst [vmem:[#allocation4 + $0xe8] sm:$0xff] %v5709
    %5750 = vst [vmem:[#allocation4 + $0xf0] sm:$0xff] %v5710
    %5751 = vst [vmem:[#allocation4 + $0xf8] sm:$0xff] %v5711
    %5752 = vst [vmem:[#allocation4 + $0x100] sm:$0xff] %v5712
    %5753 = vst [vmem:[#allocation4 + $0x108] sm:$0xff] %v5713
    %5754 = vst [vmem:[#allocation4 + $0x110] sm:$0xff] %v5714
    %5755 = vst [vmem:[#allocation4 + $0x118] sm:$0xff] %v5715
    %5756 = vst [vmem:[#allocation4 + $0x120] sm:$0xff] %v5716
    %5757 = vst [vmem:[#allocation4 + $0x128] sm:$0xff] %v5717
    %5758 = vst [vmem:[#allocation4 + $0x130] sm:$0xff] %v5718
    %5759 = vst [vmem:[#allocation4 + $0x138] sm:$0xff] %v5719
    // Predicated region
    $region22: #{tpu_custom_call.1} parent=1 // pred_check
      _
    $region23: #{tpu_custom_call.1} parent=1 // pred_check_branch
      %5761 = sbr.rel (0) target = $region25
    $region24: #{tpu_custom_call.1} parent=1 // pred_region
      %5763 = vsyncadd [#allocation3], 0
      %s5764 = sshll.u32 [#allocation2], 4
      %s5765 = int_to_ptr.vmem [resolvable:$true] %s5764
      %s5766 = sshll.u32 %s5, 4
      %s5767 = int_to_ptr.hbm [resolvable:$true] %s5766
      %5772 = dma.vmem_to_hbm [thread:$0]  %s5765, 12288, %s5767, [#allocation3], 64, 64, 4
    $region25: #{tpu_custom_call.1} parent=1 // pred_fallthru
      _
    // Predicated region
    $region26: #{tpu_custom_call.1} parent=1 // pred_check
      _
    $region27: #{tpu_custom_call.1} parent=1 // pred_check_branch
      %5774 = sbr.rel (0) target = $region29
    $region28: #{tpu_custom_call.1} parent=1 // pred_region
      %5776 = vsyncadd [#allocation5], 0
      %s5777 = sshll.u32 [#allocation4], 4
      %s5778 = int_to_ptr.vmem [resolvable:$true] %s5777
      %s5779 = sshll.u32 %s6, 4
      %s5780 = int_to_ptr.hbm [resolvable:$true] %s5779
      %5785 = dma.vmem_to_hbm [thread:$0]  %s5778, 5120, %s5780, [#allocation5], 128, 128, 8
    $region29: #{tpu_custom_call.1} parent=1 // pred_fallthru
      _
    // Predicated region
    $region30: #{tpu_custom_call.1} parent=1 // pred_check
      _
    $region31: #{tpu_custom_call.1} parent=1 // pred_check_branch
      %5787 = sbr.rel (0) target = $region33
    $region32: #{tpu_custom_call.1} parent=1 // pred_region
      %5789 = vsyncadd [#allocation5], 0
      %s5791 = sshll.u32 [#allocation6], 4
      %s5792 = int_to_ptr.vmem [resolvable:$true] %s5791
      %s5793 = sshll.u32 %s7, 4
      %s5794 = int_to_ptr.hbm [resolvable:$true] %s5793
      %5796 = dma.vmem_to_hbm [thread:$0]  %s5792, 16, %s5794, [#allocation5]
    $region33: #{tpu_custom_call.1} parent=1 // pred_fallthru
      _
    // Predicated region
    $region34: #{tpu_custom_call.1} parent=1 // pred_check
      _
    $region35: #{tpu_custom_call.1} parent=1 // pred_check_branch
      %5798 = sbr.rel (0) target = $region37
    $region36: #{tpu_custom_call.1} parent=1 // pred_region
      %5800 = dma.done [#allocation3], 12288
    $region37: #{tpu_custom_call.1} parent=1 // pred_fallthru
      _
    // Predicated region
    $region38: #{tpu_custom_call.1} parent=1 // pred_check
      _
    $region39: #{tpu_custom_call.1} parent=1 // pred_check_branch
      %5802 = sbr.rel (0) target = $region41
    $region40: #{tpu_custom_call.1} parent=1 // pred_region
      %5804 = dma.done [#allocation5], 5120
    $region41: #{tpu_custom_call.1} parent=1 // pred_fallthru
      _
    // Predicated region
    $region42: #{tpu_custom_call.1} parent=1 // pred_check
      _
    $region43: #{tpu_custom_call.1} parent=1 // pred_check_branch
      %5806 = sbr.rel (0) target = $region45
    $region44: #{tpu_custom_call.1} parent=1 // pred_region
      %5808 = dma.done [#allocation5], 16
    $region45: #{tpu_custom_call.1} parent=1 // pred_fallthru
      _
    %5809 = vsyncpa [#allocation3], 1
    %5810 = vsyncpa [#allocation5], 1

</llo_original>
